<compile_context>
chip_gen: v7x
topology: tpu7x:2x2x1
jax: 0.10.0
libtpu: 0.0.40
codegen_flags: <defaults>
</compile_context>

<pallas_src>
import jax
import jax.numpy as jnp
from jax import lax
from jax.experimental import pallas as pl
from jax.experimental.pallas import tpu as pltpu

EPS = 1e-5


# ----------------------------------------------------------------------------- helpers
def _layernorm(h, g, b):
    mu = jnp.mean(h, axis=-1, keepdims=True)
    var = jnp.mean((h - mu) ** 2, axis=-1, keepdims=True)
    return (h - mu) * lax.rsqrt(var + EPS) * g + b


def _mlp_block(x, w1, b1, g1, be1, w2, b2, g2, be2):
    h = jnp.dot(x, w1, preferred_element_type=jnp.float32) + b1
    h = jnp.maximum(_layernorm(h, g1, be1), 0.0)
    h = jnp.dot(h, w2, preferred_element_type=jnp.float32) + b2
    h = jnp.maximum(_layernorm(h, g2, be2), 0.0)
    return h


# ----------------------------------------------------------------- kernels: MLP blocks
def mlp2_res_kernel(x_ref, res_ref, w1_ref, b1_ref, g1_ref, be1_ref,
                    w2_ref, b2_ref, g2_ref, be2_ref, o_ref):
    h = _mlp_block(x_ref[...], w1_ref[...], b1_ref[...], g1_ref[...], be1_ref[...],
                   w2_ref[...], b2_ref[...], g2_ref[...], be2_ref[...])
    o_ref[...] = h + res_ref[...]


def mlp2_nores_kernel(x_ref, w1_ref, b1_ref, g1_ref, be1_ref,
                      w2_ref, b2_ref, g2_ref, be2_ref, o_ref):
    o_ref[...] = _mlp_block(x_ref[...], w1_ref[...], b1_ref[...], g1_ref[...], be1_ref[...],
                            w2_ref[...], b2_ref[...], g2_ref[...], be2_ref[...])


def mlp2(x2d, res2d, p, tile_rows=256):
    """Linear -> LN -> ReLU -> Linear -> LN -> ReLU (+ optional residual). Row tiled."""
    n, cin = x2d.shape
    cout = p["w2"].shape[1]
    tm = min(tile_rows, n)

    def row_spec(c):
        return pl.BlockSpec((tm, c), lambda i: (i, 0))

    def full_spec(a):
        return pl.BlockSpec(a.shape, lambda i: (0, 0))

    weights = (p["w1"], p["b1"], p["g1"], p["be1"], p["w2"], p["b2"], p["g2"], p["be2"])
    if res2d is None:
        kernel = mlp2_nores_kernel
        args = (x2d,) + weights
        in_specs = [row_spec(cin)] + [full_spec(a) for a in weights]
    else:
        kernel = mlp2_res_kernel
        args = (x2d, res2d) + weights
        in_specs = [row_spec(cin), row_spec(cout)] + [full_spec(a) for a in weights]

    return pl.pallas_call(
        kernel,
        out_shape=jax.ShapeDtypeStruct((n, cout), jnp.float32),
        grid=(pl.cdiv(n, tm),),
        in_specs=in_specs,
        out_specs=pl.BlockSpec((tm, cout), lambda i: (i, 0)),
        compiler_params=pltpu.CompilerParams(dimension_semantics=("parallel",)),
    )(*args)


# -------------------------------------------------------------------- kernel: linear
def linear_kernel(x_ref, w_ref, b_ref, o_ref):
    o_ref[...] = jnp.dot(x_ref[...], w_ref[...],
                         preferred_element_type=jnp.float32) + b_ref[...]


def linear(x2d, w, b, tile_rows=256):
    n, cin = x2d.shape
    cout = w.shape[1]
    tm = min(tile_rows, n)
    return pl.pallas_call(
        linear_kernel,
        out_shape=jax.ShapeDtypeStruct((n, cout), jnp.float32),
        grid=(pl.cdiv(n, tm),),
        in_specs=[pl.BlockSpec((tm, cin), lambda i: (i, 0)),
                  pl.BlockSpec((cin, cout), lambda i: (0, 0)),
                  pl.BlockSpec((1, cout), lambda i: (0, 0))],
        out_specs=pl.BlockSpec((tm, cout), lambda i: (i, 0)),
        compiler_params=pltpu.CompilerParams(dimension_semantics=("parallel",)),
    )(x2d, w, b)


# --------------------------------------------- kernel: fused multi-kernel-size conv1d
def conv_multi_kernel(x_ref, w3_ref, b3_ref, w7_ref, b7_ref, w11_ref, b11_ref, o_ref):
    # x_ref: (1, T+10, H) padded with halo 5.  o_ref: (1, T, 4H) = [ks3 | ks7 | ks11 | id]
    T = o_ref.shape[1]
    H = x_ref.shape[2]

    def branch(w_ref, b_ref):
        K = w_ref.shape[0]
        off = 5 - K // 2                     # align each kernel inside the halo-5 pad
        acc = jnp.dot(x_ref[0, off:off + T, :], w_ref[0],
                      preferred_element_type=jnp.float32)
        for k in range(1, K):                # static unroll over taps
            acc = acc + jnp.dot(x_ref[0, off + k:off + k + T, :], w_ref[k],
                                preferred_element_type=jnp.float32)
        return jnp.maximum(acc + b_ref[...], 0.0)

    o_ref[0, :, 0 * H:1 * H] = branch(w3_ref, b3_ref)
    o_ref[0, :, 1 * H:2 * H] = branch(w7_ref, b7_ref)
    o_ref[0, :, 2 * H:3 * H] = branch(w11_ref, b11_ref)
    o_ref[0, :, 3 * H:4 * H] = x_ref[0, 5:5 + T, :]        # identity branch


def conv_multi(xb, p3, p7, p11):
    B, T, H = xb.shape
    xpad = jnp.pad(xb, ((0, 0), (5, 5), (0, 0)))
    w3, b3 = p3
    w7, b7 = p7
    w11, b11 = p11
    return pl.pallas_call(
        conv_multi_kernel,
        out_shape=jax.ShapeDtypeStruct((B, T, 4 * H), jnp.float32),
        grid=(B,),
        in_specs=[
            pl.BlockSpec((1, T + 10, H), lambda i: (i, 0, 0)),
            pl.BlockSpec((3, H, H), lambda i: (0, 0, 0)),
            pl.BlockSpec((1, H), lambda i: (0, 0)),
            pl.BlockSpec((7, H, H), lambda i: (0, 0, 0)),
            pl.BlockSpec((1, H), lambda i: (0, 0)),
            pl.BlockSpec((11, H, H), lambda i: (0, 0, 0)),
            pl.BlockSpec((1, H), lambda i: (0, 0)),
        ],
        out_specs=pl.BlockSpec((1, T, 4 * H), lambda i: (i, 0, 0)),
        compiler_params=pltpu.CompilerParams(dimension_semantics=("parallel",)),
    )(xpad, w3, b3, w7, b7, w11, b11)


# ---------------------------------------------------- kernel: bidirectional GRU recurrence
def bigru_rec_kernel(gi_ref, wh_ref, bh_ref, y_ref, hf_ref):
    # gi_ref: (T, B, 3D) precomputed x @ [Wir|Wiz|Win] + bi for THIS direction.
    # wh_ref: (1, D, 3D) fused recurrent weights, bh_ref: (1, 1, 3D).
    # y_ref : (T, B, D) this direction's half of the (T, B, 2D) output.
    # hf_ref: (1, B, D) final hidden state.
    T, B, threeD = gi_ref.shape
    D = threeD // 3
    dir_idx = pl.program_id(0)               # 0 = forward, 1 = backward (time-reversed)

    def step(t, h):
        tt = jnp.where(dir_idx == 0, t, T - 1 - t)
        gi = gi_ref[tt]                                                   # (B, 3D)
        gh = jnp.dot(h, wh_ref[0], preferred_element_type=jnp.float32) + bh_ref[0]
        r = jax.nn.sigmoid(gi[:, 0:D] + gh[:, 0:D])
        z = jax.nn.sigmoid(gi[:, D:2 * D] + gh[:, D:2 * D])
        n = jnp.tanh(gi[:, 2 * D:3 * D] + r * gh[:, 2 * D:3 * D])
        h_new = (1.0 - z) * n + z * h
        y_ref[tt] = h_new
        return h_new

    h_last = lax.fori_loop(0, T, step, jnp.zeros((B, D), jnp.float32))
    hf_ref[0] = h_last


def bigru_layer(x_tm, gp, batch):
    """x_tm: (N, D) time-major (row = t*B + b). Returns (N, 2D) outputs, (2, B, D) final h."""
    n, d = x_tm.shape
    t = n // batch
    # hoisted input projection for ALL timesteps and BOTH directions: one big matmul
    gi = linear(x_tm, gp["wi"], gp["bi"])                 # (N, 6D) = [fwd r,z,n | bwd r,z,n]
    gi = gi.reshape(t, batch, 6 * d)                      # free reshape (contiguous)

    y, hf = pl.pallas_call(
        bigru_rec_kernel,
        out_shape=(jax.ShapeDtypeStruct((t, batch, 2 * d), jnp.float32),
                   jax.ShapeDtypeStruct((2, batch, d), jnp.float32)),
        grid=(2,),                                        # direction axis -> 2 TCs on v7x
        in_specs=[
            pl.BlockSpec((t, batch, 3 * d), lambda k: (0, 0, k)),
            pl.BlockSpec((1, d, 3 * d), lambda k: (k, 0, 0)),
            pl.BlockSpec((1, 1, 3 * d), lambda k: (k, 0, 0)),
        ],
        out_specs=(pl.BlockSpec((t, batch, d), lambda k: (0, 0, k)),
                   pl.BlockSpec((1, batch, d), lambda k: (k, 0, 0))),
        compiler_params=pltpu.CompilerParams(dimension_semantics=("parallel",)),
    )(gi, gp["wh"], gp["bh"])
    return y.reshape(n, 2 * d), hf


# -------------------------------------------------------------------------- parameters
def init_params(key, input_size, hidden, out_size, n_layers):
    D = 4 * hidden
    keys = iter(jax.random.split(key, 8 + 4 * n_layers))
    nk = lambda: next(keys)

    def dense(k, fin, fout):
        kw, kb = jax.random.split(k)
        s = 1.0 / float(fin) ** 0.5
        return (jax.random.uniform(kw, (fin, fout), jnp.float32, -s, s),
                jax.random.uniform(kb, (1, fout), jnp.float32, -s, s))

    def ln(n):
        return jnp.ones((1, n), jnp.float32), jnp.zeros((1, n), jnp.float32)

    def conv(k, cin, cout, K):
        kw, kb = jax.random.split(k)
        s = 1.0 / float(cin * K) ** 0.5
        return (jax.random.uniform(kw, (K, cin, cout), jnp.float32, -s, s),
                jax.random.uniform(kb, (1, cout), jnp.float32, -s, s))

    w1, b1 = dense(nk(), input_size, 2 * hidden)
    g1, be1 = ln(2 * hidden)
    w2, b2 = dense(nk(), 2 * hidden, hidden)
    g2, be2 = ln(hidden)
    mlp_in = dict(w1=w1, b1=b1, g1=g1, be1=be1, w2=w2, b2=b2, g2=g2, be2=be2)

    conv3 = conv(nk(), hidden, hidden, 3)
    conv7 = conv(nk(), hidden, hidden, 7)
    conv11 = conv(nk(), hidden, hidden, 11)   # conv1d_ks12 in the module uses kernel_size=11

    grus = []
    for _ in range(n_layers):
        s = 1.0 / float(D) ** 0.5
        kk = jax.random.split(nk(), 8)
        U = lambda k, shape: jax.random.uniform(k, shape, jnp.float32, -s, s)
        gru = dict(
            wi=jnp.concatenate([U(kk[0], (D, 3 * D)), U(kk[1], (D, 3 * D))], axis=1),  # (D, 6D)
            bi=jnp.concatenate([U(kk[2], (1, 3 * D)), U(kk[3], (1, 3 * D))], axis=1),  # (1, 6D)
            wh=jnp.stack([U(kk[4], (D, 3 * D)), U(kk[5], (D, 3 * D))]),                # (2, D, 3D)
            bh=jnp.stack([U(kk[6], (1, 3 * D)), U(kk[7], (1, 3 * D))]),                # (2, 1, 3D)
        )
        fw1, fb1 = dense(nk(), 2 * D, 4 * D)
        fg1, fbe1 = ln(4 * D)
        fw2, fb2 = dense(nk(), 4 * D, D)
        fg2, fbe2 = ln(D)
        mlp = dict(w1=fw1, b1=fb1, g1=fg1, be1=fbe1, w2=fw2, b2=fb2, g2=fg2, be2=fbe2)
        grus.append(dict(gru=gru, mlp=mlp))

    fc_out = dense(nk(), D, out_size)
    return dict(mlp_in=mlp_in, conv3=conv3, conv7=conv7, conv11=conv11,
                grus=grus, fc_out=fc_out)


# ----------------------------------------------------------------------------- forward
def forward(params, x):
    # TODO(synk): an externally supplied initial hidden state h is not supported (zeros assumed).
    B, T, In = x.shape
    H = params["mlp_in"]["w2"].shape[1]
    D = 4 * H
    N = B * T

    # mlp_in : Linear -> LN -> ReLU -> Linear -> LN -> ReLU  (no residual, row tiled)
    h0 = mlp2(x.reshape(N, In), None, params["mlp_in"])           # (N, H) batch-major
    xb = h0.reshape(B, T, H)

    # fused multi-kernel-size conv1d + identity, concatenated in-kernel -> (B, T, 4H)
    xc = conv_multi(xb, params["conv3"], params["conv7"], params["conv11"])

    # single switch to time-major flat layout for the whole GRU stack
    x_tm = jnp.transpose(xc, (1, 0, 2)).reshape(N, D)             # row = t*B + b

    new_h = []
    for lp in params["grus"]:
        y2d, hf = bigru_layer(x_tm, lp["gru"], B)                 # (N, 2D), (2, B, D)
        x_tm = mlp2(y2d, x_tm, lp["mlp"])                         # residual add fused in-kernel
        new_h.append(hf)

    # final linear, padded to a lane-dense 128-wide output and sliced back
    w_out, b_out = params["fc_out"]
    n_out = w_out.shape[1]
    pad_out = ((n_out + 127) // 128) * 128
    w_p = jnp.pad(w_out, ((0, 0), (0, pad_out - n_out)))
    b_p = jnp.pad(b_out, ((0, 0), (0, pad_out - n_out)))
    logits_pad = linear(x_tm, w_p, b_p)                           # (N, pad_out)
    logits = logits_pad[:, :n_out].reshape(T, B, n_out)
    logits = jnp.transpose(logits, (1, 0, 2))                     # (B, T, out)
    return logits, new_h


# -------------------------------------------------------------------------------- main
if __name__ == "__main__":
    B, T = 2, 16
    input_size, hidden_size, out_size = 8, 32, 4   # hidden=32 -> D=4H=128 (lane aligned)
    n_layers = 2

    key = jax.random.PRNGKey(0)
    kx, kp = jax.random.split(key)
    x = jax.random.normal(kx, (B, T, input_size), jnp.float32)
    params = init_params(kp, input_size, hidden_size, out_size, n_layers)

    fwd = jax.jit(forward)
    logits, new_h = fwd(params, x)
    jax.block_until_ready(logits)
    for hi in new_h:
        jax.block_until_ready(hi)

    assert logits.shape == (B, T, out_size)
    assert len(new_h) == n_layers and new_h[0].shape == (2, B, 4 * hidden_size)
    print("KERNEL_OK")
</pallas_src>

<mosaic_0001>
module attributes {stable_mosaic.version = 11 : i64} {
  func.func @mlp2_nores_kernel(%arg0: i32, %arg1: memref<32x8xf32, #tpu.memory_space<vmem>>, %arg2: memref<8x64xf32, #tpu.memory_space<vmem>>, %arg3: memref<1x64xf32, #tpu.memory_space<vmem>>, %arg4: memref<1x64xf32, #tpu.memory_space<vmem>>, %arg5: memref<1x64xf32, #tpu.memory_space<vmem>>, %arg6: memref<64x32xf32, #tpu.memory_space<vmem>>, %arg7: memref<1x32xf32, #tpu.memory_space<vmem>>, %arg8: memref<1x32xf32, #tpu.memory_space<vmem>>, %arg9: memref<1x32xf32, #tpu.memory_space<vmem>>, %arg10: memref<32x32xf32, #tpu.memory_space<vmem>>) attributes {dimension_semantics = [#tpu.dimension_semantics<parallel>], iteration_bounds = array<i64: 1>, scalar_prefetch = 0 : i64, scratch_operands = 0 : i64, tpu.core_type = #tpu.core_type<tc>, window_params = [{transform_indices = @transform_0, window_bounds = array<i64: 32, 8>}, {pipeline_mode = #tpu.pipeline_mode<synchronous>, transform_indices = @transform_1, window_bounds = array<i64: 8, 64>}, {pipeline_mode = #tpu.pipeline_mode<synchronous>, transform_indices = @transform_2, window_bounds = array<i64: 1, 64>}, {pipeline_mode = #tpu.pipeline_mode<synchronous>, transform_indices = @transform_3, window_bounds = array<i64: 1, 64>}, {pipeline_mode = #tpu.pipeline_mode<synchronous>, transform_indices = @transform_4, window_bounds = array<i64: 1, 64>}, {pipeline_mode = #tpu.pipeline_mode<synchronous>, transform_indices = @transform_5, window_bounds = array<i64: 64, 32>}, {pipeline_mode = #tpu.pipeline_mode<synchronous>, transform_indices = @transform_6, window_bounds = array<i64: 1, 32>}, {pipeline_mode = #tpu.pipeline_mode<synchronous>, transform_indices = @transform_7, window_bounds = array<i64: 1, 32>}, {pipeline_mode = #tpu.pipeline_mode<synchronous>, transform_indices = @transform_8, window_bounds = array<i64: 1, 32>}, {transform_indices = @transform_9, window_bounds = array<i64: 32, 32>}]} {
    %c0 = arith.constant 0 : index
    %c0_0 = arith.constant 0 : index
    %0 = vector.load %arg1[%c0, %c0_0] : memref<32x8xf32, #tpu.memory_space<vmem>>, vector<32x8xf32>
    %c0_1 = arith.constant 0 : index
    %c0_2 = arith.constant 0 : index
    %1 = vector.load %arg2[%c0_1, %c0_2] : memref<8x64xf32, #tpu.memory_space<vmem>>, vector<8x64xf32>
    %c0_3 = arith.constant 0 : index
    %c0_4 = arith.constant 0 : index
    %2 = vector.load %arg3[%c0_3, %c0_4] : memref<1x64xf32, #tpu.memory_space<vmem>>, vector<1x64xf32>
    %c0_5 = arith.constant 0 : index
    %c0_6 = arith.constant 0 : index
    %3 = vector.load %arg4[%c0_5, %c0_6] : memref<1x64xf32, #tpu.memory_space<vmem>>, vector<1x64xf32>
    %c0_7 = arith.constant 0 : index
    %c0_8 = arith.constant 0 : index
    %4 = vector.load %arg5[%c0_7, %c0_8] : memref<1x64xf32, #tpu.memory_space<vmem>>, vector<1x64xf32>
    %c0_9 = arith.constant 0 : index
    %c0_10 = arith.constant 0 : index
    %5 = vector.load %arg6[%c0_9, %c0_10] : memref<64x32xf32, #tpu.memory_space<vmem>>, vector<64x32xf32>
    %c0_11 = arith.constant 0 : index
    %c0_12 = arith.constant 0 : index
    %6 = vector.load %arg7[%c0_11, %c0_12] : memref<1x32xf32, #tpu.memory_space<vmem>>, vector<1x32xf32>
    %c0_13 = arith.constant 0 : index
    %c0_14 = arith.constant 0 : index
    %7 = vector.load %arg8[%c0_13, %c0_14] : memref<1x32xf32, #tpu.memory_space<vmem>>, vector<1x32xf32>
    %c0_15 = arith.constant 0 : index
    %c0_16 = arith.constant 0 : index
    %8 = vector.load %arg9[%c0_15, %c0_16] : memref<1x32xf32, #tpu.memory_space<vmem>>, vector<1x32xf32>
    %cst = arith.constant dense<0.000000e+00> : vector<32x64xf32>
    %9 = tpu.matmul %0, %1, %cst {dimension_numbers = #tpu.dot_dimension_numbers<[1], [0], [0], [1], [0, 0, 1, 1], [], []>} : vector<32x8xf32>, vector<8x64xf32>, vector<32x64xf32> -> vector<32x64xf32>
    %10 = vector.broadcast %2 : vector<1x64xf32> to vector<32x64xf32>
    %11 = arith.addf %9, %10 : vector<32x64xf32>
    %cst_17 = arith.constant dense<0.000000e+00> : vector<32xf32>
    %12 = vector.multi_reduction <add>, %11, %cst_17 [1] : vector<32x64xf32> to vector<32xf32>
    %13 = vector.shape_cast %12 : vector<32xf32> to vector<32x1xf32>
    %cst_18 = arith.constant 6.400000e+01 : f32
    %14 = vector.broadcast %cst_18 : f32 to vector<32x1xf32>
    %15 = arith.divf %13, %14 : vector<32x1xf32>
    %16 = vector.broadcast %15 : vector<32x1xf32> to vector<32x64xf32>
    %17 = arith.subf %11, %16 : vector<32x64xf32>
    %18 = arith.mulf %17, %17 : vector<32x64xf32>
    %cst_19 = arith.constant dense<0.000000e+00> : vector<32xf32>
    %19 = vector.multi_reduction <add>, %18, %cst_19 [1] : vector<32x64xf32> to vector<32xf32>
    %20 = vector.shape_cast %19 : vector<32xf32> to vector<32x1xf32>
    %cst_20 = arith.constant 6.400000e+01 : f32
    %21 = vector.broadcast %cst_20 : f32 to vector<32x1xf32>
    %22 = arith.divf %20, %21 : vector<32x1xf32>
    %23 = vector.broadcast %15 : vector<32x1xf32> to vector<32x64xf32>
    %24 = arith.subf %11, %23 : vector<32x64xf32>
    %cst_21 = arith.constant 9.99999974E-6 : f32
    %25 = vector.broadcast %cst_21 : f32 to vector<32x1xf32>
    %26 = arith.addf %22, %25 : vector<32x1xf32>
    %27 = math.rsqrt %26 : vector<32x1xf32>
    %28 = vector.broadcast %27 : vector<32x1xf32> to vector<32x64xf32>
    %29 = arith.mulf %24, %28 : vector<32x64xf32>
    %30 = vector.broadcast %3 : vector<1x64xf32> to vector<32x64xf32>
    %31 = arith.mulf %29, %30 : vector<32x64xf32>
    %32 = vector.broadcast %4 : vector<1x64xf32> to vector<32x64xf32>
    %33 = arith.addf %31, %32 : vector<32x64xf32>
    %cst_22 = arith.constant 0.000000e+00 : f32
    %34 = vector.broadcast %cst_22 : f32 to vector<32x64xf32>
    %35 = arith.maximumf %33, %34 : vector<32x64xf32>
    %cst_23 = arith.constant dense<0.000000e+00> : vector<32x32xf32>
    %36 = tpu.matmul %35, %5, %cst_23 {dimension_numbers = #tpu.dot_dimension_numbers<[1], [0], [0], [1], [0, 0, 1, 1], [], []>} : vector<32x64xf32>, vector<64x32xf32>, vector<32x32xf32> -> vector<32x32xf32>
    %37 = vector.broadcast %6 : vector<1x32xf32> to vector<32x32xf32>
    %38 = arith.addf %36, %37 : vector<32x32xf32>
    %cst_24 = arith.constant dense<0.000000e+00> : vector<32xf32>
    %39 = vector.multi_reduction <add>, %38, %cst_24 [1] : vector<32x32xf32> to vector<32xf32>
    %40 = vector.shape_cast %39 : vector<32xf32> to vector<32x1xf32>
    %cst_25 = arith.constant 3.200000e+01 : f32
    %41 = vector.broadcast %cst_25 : f32 to vector<32x1xf32>
    %42 = arith.divf %40, %41 : vector<32x1xf32>
    %43 = vector.broadcast %42 : vector<32x1xf32> to vector<32x32xf32>
    %44 = arith.subf %38, %43 : vector<32x32xf32>
    %45 = arith.mulf %44, %44 : vector<32x32xf32>
    %cst_26 = arith.constant dense<0.000000e+00> : vector<32xf32>
    %46 = vector.multi_reduction <add>, %45, %cst_26 [1] : vector<32x32xf32> to vector<32xf32>
    %47 = vector.shape_cast %46 : vector<32xf32> to vector<32x1xf32>
    %cst_27 = arith.constant 3.200000e+01 : f32
    %48 = vector.broadcast %cst_27 : f32 to vector<32x1xf32>
    %49 = arith.divf %47, %48 : vector<32x1xf32>
    %50 = vector.broadcast %42 : vector<32x1xf32> to vector<32x32xf32>
    %51 = arith.subf %38, %50 : vector<32x32xf32>
    %cst_28 = arith.constant 9.99999974E-6 : f32
    %52 = vector.broadcast %cst_28 : f32 to vector<32x1xf32>
    %53 = arith.addf %49, %52 : vector<32x1xf32>
    %54 = math.rsqrt %53 : vector<32x1xf32>
    %55 = vector.broadcast %54 : vector<32x1xf32> to vector<32x32xf32>
    %56 = arith.mulf %51, %55 : vector<32x32xf32>
    %57 = vector.broadcast %7 : vector<1x32xf32> to vector<32x32xf32>
    %58 = arith.mulf %56, %57 : vector<32x32xf32>
    %59 = vector.broadcast %8 : vector<1x32xf32> to vector<32x32xf32>
    %60 = arith.addf %58, %59 : vector<32x32xf32>
    %cst_29 = arith.constant 0.000000e+00 : f32
    %61 = vector.broadcast %cst_29 : f32 to vector<32x32xf32>
    %62 = arith.maximumf %60, %61 : vector<32x32xf32>
    %c0_30 = arith.constant 0 : index
    %c0_31 = arith.constant 0 : index
    %63 = vector.load %arg10[%c0_30, %c0_31] : memref<32x32xf32, #tpu.memory_space<vmem>>, vector<32x32xf32>
    tpu.vector_store %arg10[%c0_30, %c0_31], %62 {strides = array<i32>} : memref<32x32xf32, #tpu.memory_space<vmem>>, vector<32x32xf32>,
    return
  }
  func.func @transform_0(%arg0: i32) -> (i32, i32) {
    %c0_i32 = arith.constant 0 : i32
    %c0_i32_0 = arith.constant 0 : i32
    return %arg0, %c0_i32 : i32, i32
  }
  func.func @transform_1(%arg0: i32) -> (i32, i32) {
    %c0_i32 = arith.constant 0 : i32
    %c0_i32_0 = arith.constant 0 : i32
    %c0_i32_1 = arith.constant 0 : i32
    return %c0_i32, %c0_i32_0 : i32, i32
  }
  func.func @transform_2(%arg0: i32) -> (i32, i32) {
    %c0_i32 = arith.constant 0 : i32
    %c0_i32_0 = arith.constant 0 : i32
    %c0_i32_1 = arith.constant 0 : i32
    return %c0_i32, %c0_i32_0 : i32, i32
  }
  func.func @transform_3(%arg0: i32) -> (i32, i32) {
    %c0_i32 = arith.constant 0 : i32
    %c0_i32_0 = arith.constant 0 : i32
    %c0_i32_1 = arith.constant 0 : i32
    return %c0_i32, %c0_i32_0 : i32, i32
  }
  func.func @transform_4(%arg0: i32) -> (i32, i32) {
    %c0_i32 = arith.constant 0 : i32
    %c0_i32_0 = arith.constant 0 : i32
    %c0_i32_1 = arith.constant 0 : i32
    return %c0_i32, %c0_i32_0 : i32, i32
  }
  func.func @transform_5(%arg0: i32) -> (i32, i32) {
    %c0_i32 = arith.constant 0 : i32
    %c0_i32_0 = arith.constant 0 : i32
    %c0_i32_1 = arith.constant 0 : i32
    return %c0_i32, %c0_i32_0 : i32, i32
  }
  func.func @transform_6(%arg0: i32) -> (i32, i32) {
    %c0_i32 = arith.constant 0 : i32
    %c0_i32_0 = arith.constant 0 : i32
    %c0_i32_1 = arith.constant 0 : i32
    return %c0_i32, %c0_i32_0 : i32, i32
  }
  func.func @transform_7(%arg0: i32) -> (i32, i32) {
    %c0_i32 = arith.constant 0 : i32
    %c0_i32_0 = arith.constant 0 : i32
    %c0_i32_1 = arith.constant 0 : i32
    return %c0_i32, %c0_i32_0 : i32, i32
  }
  func.func @transform_8(%arg0: i32) -> (i32, i32) {
    %c0_i32 = arith.constant 0 : i32
    %c0_i32_0 = arith.constant 0 : i32
    %c0_i32_1 = arith.constant 0 : i32
    return %c0_i32, %c0_i32_0 : i32, i32
  }
  func.func @transform_9(%arg0: i32) -> (i32, i32) {
    %c0_i32 = arith.constant 0 : i32
    %c0_i32_0 = arith.constant 0 : i32
    return %arg0, %c0_i32 : i32, i32
  }
}

module attributes {stable_mosaic.version = 11 : i64} {
  func.func @linear_kernel(%arg0: i32, %arg1: memref<32x128xf32, #tpu.memory_space<vmem>>, %arg2: memref<128x768xf32, #tpu.memory_space<vmem>>, %arg3: memref<1x768xf32, #tpu.memory_space<vmem>>, %arg4: memref<32x768xf32, #tpu.memory_space<vmem>>) attributes {dimension_semantics = [#tpu.dimension_semantics<parallel>], iteration_bounds = array<i64: 1>, scalar_prefetch = 0 : i64, scratch_operands = 0 : i64, tpu.core_type = #tpu.core_type<tc>, window_params = [{transform_indices = @transform_0, window_bounds = array<i64: 32, 128>}, {pipeline_mode = #tpu.pipeline_mode<synchronous>, transform_indices = @transform_1, window_bounds = array<i64: 128, 768>}, {pipeline_mode = #tpu.pipeline_mode<synchronous>, transform_indices = @transform_2, window_bounds = array<i64: 1, 768>}, {transform_indices = @transform_3, window_bounds = array<i64: 32, 768>}]} {
    %c0 = arith.constant 0 : index
    %c0_0 = arith.constant 0 : index
    %0 = vector.load %arg1[%c0, %c0_0] : memref<32x128xf32, #tpu.memory_space<vmem>>, vector<32x128xf32>
    %c0_1 = arith.constant 0 : index
    %c0_2 = arith.constant 0 : index
    %1 = vector.load %arg2[%c0_1, %c0_2] : memref<128x768xf32, #tpu.memory_space<vmem>>, vector<128x768xf32>
    %cst = arith.constant dense<0.000000e+00> : vector<32x768xf32>
    %2 = tpu.matmul %0, %1, %cst {dimension_numbers = #tpu.dot_dimension_numbers<[1], [0], [0], [1], [0, 0, 1, 1], [], []>} : vector<32x128xf32>, vector<128x768xf32>, vector<32x768xf32> -> vector<32x768xf32>
    %c0_3 = arith.constant 0 : index
    %c0_4 = arith.constant 0 : index
    %3 = vector.load %arg3[%c0_3, %c0_4] : memref<1x768xf32, #tpu.memory_space<vmem>>, vector<1x768xf32>
    %4 = vector.broadcast %3 : vector<1x768xf32> to vector<32x768xf32>
    %5 = arith.addf %2, %4 : vector<32x768xf32>
    %c0_5 = arith.constant 0 : index
    %c0_6 = arith.constant 0 : index
    %6 = vector.load %arg4[%c0_5, %c0_6] : memref<32x768xf32, #tpu.memory_space<vmem>>, vector<32x768xf32>
    tpu.vector_store %arg4[%c0_5, %c0_6], %5 {strides = array<i32>} : memref<32x768xf32, #tpu.memory_space<vmem>>, vector<32x768xf32>,
    return
  }
  func.func @transform_0(%arg0: i32) -> (i32, i32) {
    %c0_i32 = arith.constant 0 : i32
    %c0_i32_0 = arith.constant 0 : i32
    return %arg0, %c0_i32 : i32, i32
  }
  func.func @transform_1(%arg0: i32) -> (i32, i32) {
    %c0_i32 = arith.constant 0 : i32
    %c0_i32_0 = arith.constant 0 : i32
    %c0_i32_1 = arith.constant 0 : i32
    return %c0_i32, %c0_i32_0 : i32, i32
  }
  func.func @transform_2(%arg0: i32) -> (i32, i32) {
    %c0_i32 = arith.constant 0 : i32
    %c0_i32_0 = arith.constant 0 : i32
    %c0_i32_1 = arith.constant 0 : i32
    return %c0_i32, %c0_i32_0 : i32, i32
  }
  func.func @transform_3(%arg0: i32) -> (i32, i32) {
    %c0_i32 = arith.constant 0 : i32
    %c0_i32_0 = arith.constant 0 : i32
    return %arg0, %c0_i32 : i32, i32
  }
}

module attributes {stable_mosaic.version = 11 : i64} {
  func.func @conv_multi_kernel(%arg0: i32, %arg1: memref<1x26x32xf32, #tpu.memory_space<vmem>>, %arg2: memref<3x32x32xf32, #tpu.memory_space<vmem>>, %arg3: memref<1x32xf32, #tpu.memory_space<vmem>>, %arg4: memref<7x32x32xf32, #tpu.memory_space<vmem>>, %arg5: memref<1x32xf32, #tpu.memory_space<vmem>>, %arg6: memref<11x32x32xf32, #tpu.memory_space<vmem>>, %arg7: memref<1x32xf32, #tpu.memory_space<vmem>>, %arg8: memref<1x16x128xf32, #tpu.memory_space<vmem>>) attributes {dimension_semantics = [#tpu.dimension_semantics<parallel>], iteration_bounds = array<i64: 2>, scalar_prefetch = 0 : i64, scratch_operands = 0 : i64, tpu.core_type = #tpu.core_type<tc>, window_params = [{transform_indices = @transform_0, window_bounds = array<i64: 1, 26, 32>}, {pipeline_mode = #tpu.pipeline_mode<synchronous>, transform_indices = @transform_1, window_bounds = array<i64: 3, 32, 32>}, {pipeline_mode = #tpu.pipeline_mode<synchronous>, transform_indices = @transform_2, window_bounds = array<i64: 1, 32>}, {pipeline_mode = #tpu.pipeline_mode<synchronous>, transform_indices = @transform_3, window_bounds = array<i64: 7, 32, 32>}, {pipeline_mode = #tpu.pipeline_mode<synchronous>, transform_indices = @transform_4, window_bounds = array<i64: 1, 32>}, {pipeline_mode = #tpu.pipeline_mode<synchronous>, transform_indices = @transform_5, window_bounds = array<i64: 11, 32, 32>}, {pipeline_mode = #tpu.pipeline_mode<synchronous>, transform_indices = @transform_6, window_bounds = array<i64: 1, 32>}, {transform_indices = @transform_7, window_bounds = array<i64: 1, 16, 128>}]} {
    %c0 = arith.constant 0 : index
    %c4 = arith.constant 4 : index
    %c0_0 = arith.constant 0 : index
    %0 = vector.load %arg1[%c0, %c4, %c0_0] : memref<1x26x32xf32, #tpu.memory_space<vmem>>, vector<1x16x32xf32>
    %1 = vector.shape_cast %0 : vector<1x16x32xf32> to vector<16x32xf32>
    %c0_1 = arith.constant 0 : index
    %c0_2 = arith.constant 0 : index
    %c0_3 = arith.constant 0 : index
    %2 = vector.load %arg2[%c0_1, %c0_2, %c0_3] : memref<3x32x32xf32, #tpu.memory_space<vmem>>, vector<1x32x32xf32>
    %3 = vector.shape_cast %2 : vector<1x32x32xf32> to vector<32x32xf32>
    %cst = arith.constant dense<0.000000e+00> : vector<16x32xf32>
    %4 = tpu.matmul %1, %3, %cst {dimension_numbers = #tpu.dot_dimension_numbers<[1], [0], [0], [1], [0, 0, 1, 1], [], []>} : vector<16x32xf32>, vector<32x32xf32>, vector<16x32xf32> -> vector<16x32xf32>
    %c0_4 = arith.constant 0 : index
    %c5 = arith.constant 5 : index
    %c0_5 = arith.constant 0 : index
    %5 = vector.load %arg1[%c0_4, %c5, %c0_5] : memref<1x26x32xf32, #tpu.memory_space<vmem>>, vector<1x16x32xf32>
    %6 = vector.shape_cast %5 : vector<1x16x32xf32> to vector<16x32xf32>
    %c1 = arith.constant 1 : index
    %c0_6 = arith.constant 0 : index
    %c0_7 = arith.constant 0 : index
    %7 = vector.load %arg2[%c1, %c0_6, %c0_7] : memref<3x32x32xf32, #tpu.memory_space<vmem>>, vector<1x32x32xf32>
    %8 = vector.shape_cast %7 : vector<1x32x32xf32> to vector<32x32xf32>
    %cst_8 = arith.constant dense<0.000000e+00> : vector<16x32xf32>
    %9 = tpu.matmul %6, %8, %cst_8 {dimension_numbers = #tpu.dot_dimension_numbers<[1], [0], [0], [1], [0, 0, 1, 1], [], []>} : vector<16x32xf32>, vector<32x32xf32>, vector<16x32xf32> -> vector<16x32xf32>
    %10 = arith.addf %4, %9 : vector<16x32xf32>
    %c0_9 = arith.constant 0 : index
    %c6 = arith.constant 6 : index
    %c0_10 = arith.constant 0 : index
    %11 = vector.load %arg1[%c0_9, %c6, %c0_10] : memref<1x26x32xf32, #tpu.memory_space<vmem>>, vector<1x16x32xf32>
    %12 = vector.shape_cast %11 : vector<1x16x32xf32> to vector<16x32xf32>
    %c2 = arith.constant 2 : index
    %c0_11 = arith.constant 0 : index
    %c0_12 = arith.constant 0 : index
    %13 = vector.load %arg2[%c2, %c0_11, %c0_12] : memref<3x32x32xf32, #tpu.memory_space<vmem>>, vector<1x32x32xf32>
    %14 = vector.shape_cast %13 : vector<1x32x32xf32> to vector<32x32xf32>
    %cst_13 = arith.constant dense<0.000000e+00> : vector<16x32xf32>
    %15 = tpu.matmul %12, %14, %cst_13 {dimension_numbers = #tpu.dot_dimension_numbers<[1], [0], [0], [1], [0, 0, 1, 1], [], []>} : vector<16x32xf32>, vector<32x32xf32>, vector<16x32xf32> -> vector<16x32xf32>
    %16 = arith.addf %10, %15 : vector<16x32xf32>
    %c0_14 = arith.constant 0 : index
    %c0_15 = arith.constant 0 : index
    %17 = vector.load %arg3[%c0_14, %c0_15] : memref<1x32xf32, #tpu.memory_space<vmem>>, vector<1x32xf32>
    %18 = vector.broadcast %17 : vector<1x32xf32> to vector<16x32xf32>
    %19 = arith.addf %16, %18 : vector<16x32xf32>
    %cst_16 = arith.constant 0.000000e+00 : f32
    %20 = vector.broadcast %cst_16 : f32 to vector<16x32xf32>
    %21 = arith.maximumf %19, %20 : vector<16x32xf32>
    %c0_17 = arith.constant 0 : index
    %c0_18 = arith.constant 0 : index
    %c0_19 = arith.constant 0 : index
    %22 = vector.load %arg8[%c0_17, %c0_18, %c0_19] : memref<1x16x128xf32, #tpu.memory_space<vmem>>, vector<1x16x32xf32>
    %23 = vector.shape_cast %22 : vector<1x16x32xf32> to vector<16x32xf32>
    %24 = vector.shape_cast %21 : vector<16x32xf32> to vector<1x16x32xf32>
    tpu.vector_store %arg8[%c0_17, %c0_18, %c0_19], %24 {strides = array<i32>} : memref<1x16x128xf32, #tpu.memory_space<vmem>>, vector<1x16x32xf32>,
    %c0_20 = arith.constant 0 : index
    %c2_21 = arith.constant 2 : index
    %c0_22 = arith.constant 0 : index
    %25 = vector.load %arg1[%c0_20, %c2_21, %c0_22] : memref<1x26x32xf32, #tpu.memory_space<vmem>>, vector<1x16x32xf32>
    %26 = vector.shape_cast %25 : vector<1x16x32xf32> to vector<16x32xf32>
    %c0_23 = arith.constant 0 : index
    %c0_24 = arith.constant 0 : index
    %c0_25 = arith.constant 0 : index
    %27 = vector.load %arg4[%c0_23, %c0_24, %c0_25] : memref<7x32x32xf32, #tpu.memory_space<vmem>>, vector<1x32x32xf32>
    %28 = vector.shape_cast %27 : vector<1x32x32xf32> to vector<32x32xf32>
    %cst_26 = arith.constant dense<0.000000e+00> : vector<16x32xf32>
    %29 = tpu.matmul %26, %28, %cst_26 {dimension_numbers = #tpu.dot_dimension_numbers<[1], [0], [0], [1], [0, 0, 1, 1], [], []>} : vector<16x32xf32>, vector<32x32xf32>, vector<16x32xf32> -> vector<16x32xf32>
    %c0_27 = arith.constant 0 : index
    %c3 = arith.constant 3 : index
    %c0_28 = arith.constant 0 : index
    %30 = vector.load %arg1[%c0_27, %c3, %c0_28] : memref<1x26x32xf32, #tpu.memory_space<vmem>>, vector<1x16x32xf32>
    %31 = vector.shape_cast %30 : vector<1x16x32xf32> to vector<16x32xf32>
    %c1_29 = arith.constant 1 : index
    %c0_30 = arith.constant 0 : index
    %c0_31 = arith.constant 0 : index
    %32 = vector.load %arg4[%c1_29, %c0_30, %c0_31] : memref<7x32x32xf32, #tpu.memory_space<vmem>>, vector<1x32x32xf32>
    %33 = vector.shape_cast %32 : vector<1x32x32xf32> to vector<32x32xf32>
    %cst_32 = arith.constant dense<0.000000e+00> : vector<16x32xf32>
    %34 = tpu.matmul %31, %33, %cst_32 {dimension_numbers = #tpu.dot_dimension_numbers<[1], [0], [0], [1], [0, 0, 1, 1], [], []>} : vector<16x32xf32>, vector<32x32xf32>, vector<16x32xf32> -> vector<16x32xf32>
    %35 = arith.addf %29, %34 : vector<16x32xf32>
    %c0_33 = arith.constant 0 : index
    %c4_34 = arith.constant 4 : index
    %c0_35 = arith.constant 0 : index
    %36 = vector.load %arg1[%c0_33, %c4_34, %c0_35] : memref<1x26x32xf32, #tpu.memory_space<vmem>>, vector<1x16x32xf32>
    %37 = vector.shape_cast %36 : vector<1x16x32xf32> to vector<16x32xf32>
    %c2_36 = arith.constant 2 : index
    %c0_37 = arith.constant 0 : index
    %c0_38 = arith.constant 0 : index
    %38 = vector.load %arg4[%c2_36, %c0_37, %c0_38] : memref<7x32x32xf32, #tpu.memory_space<vmem>>, vector<1x32x32xf32>
    %39 = vector.shape_cast %38 : vector<1x32x32xf32> to vector<32x32xf32>
    %cst_39 = arith.constant dense<0.000000e+00> : vector<16x32xf32>
    %40 = tpu.matmul %37, %39, %cst_39 {dimension_numbers = #tpu.dot_dimension_numbers<[1], [0], [0], [1], [0, 0, 1, 1], [], []>} : vector<16x32xf32>, vector<32x32xf32>, vector<16x32xf32> -> vector<16x32xf32>
    %41 = arith.addf %35, %40 : vector<16x32xf32>
    %c0_40 = arith.constant 0 : index
    %c5_41 = arith.constant 5 : index
    %c0_42 = arith.constant 0 : index
    %42 = vector.load %arg1[%c0_40, %c5_41, %c0_42] : memref<1x26x32xf32, #tpu.memory_space<vmem>>, vector<1x16x32xf32>
    %43 = vector.shape_cast %42 : vector<1x16x32xf32> to vector<16x32xf32>
    %c3_43 = arith.constant 3 : index
    %c0_44 = arith.constant 0 : index
    %c0_45 = arith.constant 0 : index
    %44 = vector.load %arg4[%c3_43, %c0_44, %c0_45] : memref<7x32x32xf32, #tpu.memory_space<vmem>>, vector<1x32x32xf32>
    %45 = vector.shape_cast %44 : vector<1x32x32xf32> to vector<32x32xf32>
    %cst_46 = arith.constant dense<0.000000e+00> : vector<16x32xf32>
    %46 = tpu.matmul %43, %45, %cst_46 {dimension_numbers = #tpu.dot_dimension_numbers<[1], [0], [0], [1], [0, 0, 1, 1], [], []>} : vector<16x32xf32>, vector<32x32xf32>, vector<16x32xf32> -> vector<16x32xf32>
    %47 = arith.addf %41, %46 : vector<16x32xf32>
    %c0_47 = arith.constant 0 : index
    %c6_48 = arith.constant 6 : index
    %c0_49 = arith.constant 0 : index
    %48 = vector.load %arg1[%c0_47, %c6_48, %c0_49] : memref<1x26x32xf32, #tpu.memory_space<vmem>>, vector<1x16x32xf32>
    %49 = vector.shape_cast %48 : vector<1x16x32xf32> to vector<16x32xf32>
    %c4_50 = arith.constant 4 : index
    %c0_51 = arith.constant 0 : index
    %c0_52 = arith.constant 0 : index
    %50 = vector.load %arg4[%c4_50, %c0_51, %c0_52] : memref<7x32x32xf32, #tpu.memory_space<vmem>>, vector<1x32x32xf32>
    %51 = vector.shape_cast %50 : vector<1x32x32xf32> to vector<32x32xf32>
    %cst_53 = arith.constant dense<0.000000e+00> : vector<16x32xf32>
    %52 = tpu.matmul %49, %51, %cst_53 {dimension_numbers = #tpu.dot_dimension_numbers<[1], [0], [0], [1], [0, 0, 1, 1], [], []>} : vector<16x32xf32>, vector<32x32xf32>, vector<16x32xf32> -> vector<16x32xf32>
    %53 = arith.addf %47, %52 : vector<16x32xf32>
    %c0_54 = arith.constant 0 : index
    %c7 = arith.constant 7 : index
    %c0_55 = arith.constant 0 : index
    %54 = vector.load %arg1[%c0_54, %c7, %c0_55] : memref<1x26x32xf32, #tpu.memory_space<vmem>>, vector<1x16x32xf32>
    %55 = vector.shape_cast %54 : vector<1x16x32xf32> to vector<16x32xf32>
    %c5_56 = arith.constant 5 : index
    %c0_57 = arith.constant 0 : index
    %c0_58 = arith.constant 0 : index
    %56 = vector.load %arg4[%c5_56, %c0_57, %c0_58] : memref<7x32x32xf32, #tpu.memory_space<vmem>>, vector<1x32x32xf32>
    %57 = vector.shape_cast %56 : vector<1x32x32xf32> to vector<32x32xf32>
    %cst_59 = arith.constant dense<0.000000e+00> : vector<16x32xf32>
    %58 = tpu.matmul %55, %57, %cst_59 {dimension_numbers = #tpu.dot_dimension_numbers<[1], [0], [0], [1], [0, 0, 1, 1], [], []>} : vector<16x32xf32>, vector<32x32xf32>, vector<16x32xf32> -> vector<16x32xf32>
    %59 = arith.addf %53, %58 : vector<16x32xf32>
    %c0_60 = arith.constant 0 : index
    %c8 = arith.constant 8 : index
    %c0_61 = arith.constant 0 : index
    %60 = vector.load %arg1[%c0_60, %c8, %c0_61] : memref<1x26x32xf32, #tpu.memory_space<vmem>>, vector<1x16x32xf32>
    %61 = vector.shape_cast %60 : vector<1x16x32xf32> to vector<16x32xf32>
    %c6_62 = arith.constant 6 : index
    %c0_63 = arith.constant 0 : index
    %c0_64 = arith.constant 0 : index
    %62 = vector.load %arg4[%c6_62, %c0_63, %c0_64] : memref<7x32x32xf32, #tpu.memory_space<vmem>>, vector<1x32x32xf32>
    %63 = vector.shape_cast %62 : vector<1x32x32xf32> to vector<32x32xf32>
    %cst_65 = arith.constant dense<0.000000e+00> : vector<16x32xf32>
    %64 = tpu.matmul %61, %63, %cst_65 {dimension_numbers = #tpu.dot_dimension_numbers<[1], [0], [0], [1], [0, 0, 1, 1], [], []>} : vector<16x32xf32>, vector<32x32xf32>, vector<16x32xf32> -> vector<16x32xf32>
    %65 = arith.addf %59, %64 : vector<16x32xf32>
    %c0_66 = arith.constant 0 : index
    %c0_67 = arith.constant 0 : index
    %66 = vector.load %arg5[%c0_66, %c0_67] : memref<1x32xf32, #tpu.memory_space<vmem>>, vector<1x32xf32>
    %67 = vector.broadcast %66 : vector<1x32xf32> to vector<16x32xf32>
    %68 = arith.addf %65, %67 : vector<16x32xf32>
    %cst_68 = arith.constant 0.000000e+00 : f32
    %69 = vector.broadcast %cst_68 : f32 to vector<16x32xf32>
    %70 = arith.maximumf %68, %69 : vector<16x32xf32>
    %c0_69 = arith.constant 0 : index
    %c0_70 = arith.constant 0 : index
    %c32 = arith.constant 32 : index
    %71 = vector.load %arg8[%c0_69, %c0_70, %c32] : memref<1x16x128xf32, #tpu.memory_space<vmem>>, vector<1x16x32xf32>
    %72 = vector.shape_cast %71 : vector<1x16x32xf32> to vector<16x32xf32>
    %73 = vector.shape_cast %70 : vector<16x32xf32> to vector<1x16x32xf32>
    tpu.vector_store %arg8[%c0_69, %c0_70, %c32], %73 {strides = array<i32>} : memref<1x16x128xf32, #tpu.memory_space<vmem>>, vector<1x16x32xf32>,
    %c0_71 = arith.constant 0 : index
    %c0_72 = arith.constant 0 : index
    %c0_73 = arith.constant 0 : index
    %74 = vector.load %arg1[%c0_71, %c0_72, %c0_73] : memref<1x26x32xf32, #tpu.memory_space<vmem>>, vector<1x16x32xf32>
    %75 = vector.shape_cast %74 : vector<1x16x32xf32> to vector<16x32xf32>
    %c0_74 = arith.constant 0 : index
    %c0_75 = arith.constant 0 : index
    %c0_76 = arith.constant 0 : index
    %76 = vector.load %arg6[%c0_74, %c0_75, %c0_76] : memref<11x32x32xf32, #tpu.memory_space<vmem>>, vector<1x32x32xf32>
    %77 = vector.shape_cast %76 : vector<1x32x32xf32> to vector<32x32xf32>
    %cst_77 = arith.constant dense<0.000000e+00> : vector<16x32xf32>
    %78 = tpu.matmul %75, %77, %cst_77 {dimension_numbers = #tpu.dot_dimension_numbers<[1], [0], [0], [1], [0, 0, 1, 1], [], []>} : vector<16x32xf32>, vector<32x32xf32>, vector<16x32xf32> -> vector<16x32xf32>
    %c0_78 = arith.constant 0 : index
    %c1_79 = arith.constant 1 : index
    %c0_80 = arith.constant 0 : index
    %79 = vector.load %arg1[%c0_78, %c1_79, %c0_80] : memref<1x26x32xf32, #tpu.memory_space<vmem>>, vector<1x16x32xf32>
    %80 = vector.shape_cast %79 : vector<1x16x32xf32> to vector<16x32xf32>
    %c1_81 = arith.constant 1 : index
    %c0_82 = arith.constant 0 : index
    %c0_83 = arith.constant 0 : index
    %81 = vector.load %arg6[%c1_81, %c0_82, %c0_83] : memref<11x32x32xf32, #tpu.memory_space<vmem>>, vector<1x32x32xf32>
    %82 = vector.shape_cast %81 : vector<1x32x32xf32> to vector<32x32xf32>
    %cst_84 = arith.constant dense<0.000000e+00> : vector<16x32xf32>
    %83 = tpu.matmul %80, %82, %cst_84 {dimension_numbers = #tpu.dot_dimension_numbers<[1], [0], [0], [1], [0, 0, 1, 1], [], []>} : vector<16x32xf32>, vector<32x32xf32>, vector<16x32xf32> -> vector<16x32xf32>
    %84 = arith.addf %78, %83 : vector<16x32xf32>
    %c0_85 = arith.constant 0 : index
    %c2_86 = arith.constant 2 : index
    %c0_87 = arith.constant 0 : index
    %85 = vector.load %arg1[%c0_85, %c2_86, %c0_87] : memref<1x26x32xf32, #tpu.memory_space<vmem>>, vector<1x16x32xf32>
    %86 = vector.shape_cast %85 : vector<1x16x32xf32> to vector<16x32xf32>
    %c2_88 = arith.constant 2 : index
    %c0_89 = arith.constant 0 : index
    %c0_90 = arith.constant 0 : index
    %87 = vector.load %arg6[%c2_88, %c0_89, %c0_90] : memref<11x32x32xf32, #tpu.memory_space<vmem>>, vector<1x32x32xf32>
    %88 = vector.shape_cast %87 : vector<1x32x32xf32> to vector<32x32xf32>
    %cst_91 = arith.constant dense<0.000000e+00> : vector<16x32xf32>
    %89 = tpu.matmul %86, %88, %cst_91 {dimension_numbers = #tpu.dot_dimension_numbers<[1], [0], [0], [1], [0, 0, 1, 1], [], []>} : vector<16x32xf32>, vector<32x32xf32>, vector<16x32xf32> -> vector<16x32xf32>
    %90 = arith.addf %84, %89 : vector<16x32xf32>
    %c0_92 = arith.constant 0 : index
    %c3_93 = arith.constant 3 : index
    %c0_94 = arith.constant 0 : index
    %91 = vector.load %arg1[%c0_92, %c3_93, %c0_94] : memref<1x26x32xf32, #tpu.memory_space<vmem>>, vector<1x16x32xf32>
    %92 = vector.shape_cast %91 : vector<1x16x32xf32> to vector<16x32xf32>
    %c3_95 = arith.constant 3 : index
    %c0_96 = arith.constant 0 : index
    %c0_97 = arith.constant 0 : index
    %93 = vector.load %arg6[%c3_95, %c0_96, %c0_97] : memref<11x32x32xf32, #tpu.memory_space<vmem>>, vector<1x32x32xf32>
    %94 = vector.shape_cast %93 : vector<1x32x32xf32> to vector<32x32xf32>
    %cst_98 = arith.constant dense<0.000000e+00> : vector<16x32xf32>
    %95 = tpu.matmul %92, %94, %cst_98 {dimension_numbers = #tpu.dot_dimension_numbers<[1], [0], [0], [1], [0, 0, 1, 1], [], []>} : vector<16x32xf32>, vector<32x32xf32>, vector<16x32xf32> -> vector<16x32xf32>
    %96 = arith.addf %90, %95 : vector<16x32xf32>
    %c0_99 = arith.constant 0 : index
    %c4_100 = arith.constant 4 : index
    %c0_101 = arith.constant 0 : index
    %97 = vector.load %arg1[%c0_99, %c4_100, %c0_101] : memref<1x26x32xf32, #tpu.memory_space<vmem>>, vector<1x16x32xf32>
    %98 = vector.shape_cast %97 : vector<1x16x32xf32> to vector<16x32xf32>
    %c4_102 = arith.constant 4 : index
    %c0_103 = arith.constant 0 : index
    %c0_104 = arith.constant 0 : index
    %99 = vector.load %arg6[%c4_102, %c0_103, %c0_104] : memref<11x32x32xf32, #tpu.memory_space<vmem>>, vector<1x32x32xf32>
    %100 = vector.shape_cast %99 : vector<1x32x32xf32> to vector<32x32xf32>
    %cst_105 = arith.constant dense<0.000000e+00> : vector<16x32xf32>
    %101 = tpu.matmul %98, %100, %cst_105 {dimension_numbers = #tpu.dot_dimension_numbers<[1], [0], [0], [1], [0, 0, 1, 1], [], []>} : vector<16x32xf32>, vector<32x32xf32>, vector<16x32xf32> -> vector<16x32xf32>
    %102 = arith.addf %96, %101 : vector<16x32xf32>
    %c0_106 = arith.constant 0 : index
    %c5_107 = arith.constant 5 : index
    %c0_108 = arith.constant 0 : index
    %103 = vector.load %arg1[%c0_106, %c5_107, %c0_108] : memref<1x26x32xf32, #tpu.memory_space<vmem>>, vector<1x16x32xf32>
    %104 = vector.shape_cast %103 : vector<1x16x32xf32> to vector<16x32xf32>
    %c5_109 = arith.constant 5 : index
    %c0_110 = arith.constant 0 : index
    %c0_111 = arith.constant 0 : index
    %105 = vector.load %arg6[%c5_109, %c0_110, %c0_111] : memref<11x32x32xf32, #tpu.memory_space<vmem>>, vector<1x32x32xf32>
    %106 = vector.shape_cast %105 : vector<1x32x32xf32> to vector<32x32xf32>
    %cst_112 = arith.constant dense<0.000000e+00> : vector<16x32xf32>
    %107 = tpu.matmul %104, %106, %cst_112 {dimension_numbers = #tpu.dot_dimension_numbers<[1], [0], [0], [1], [0, 0, 1, 1], [], []>} : vector<16x32xf32>, vector<32x32xf32>, vector<16x32xf32> -> vector<16x32xf32>
    %108 = arith.addf %102, %107 : vector<16x32xf32>
    %c0_113 = arith.constant 0 : index
    %c6_114 = arith.constant 6 : index
    %c0_115 = arith.constant 0 : index
    %109 = vector.load %arg1[%c0_113, %c6_114, %c0_115] : memref<1x26x32xf32, #tpu.memory_space<vmem>>, vector<1x16x32xf32>
    %110 = vector.shape_cast %109 : vector<1x16x32xf32> to vector<16x32xf32>
    %c6_116 = arith.constant 6 : index
    %c0_117 = arith.constant 0 : index
    %c0_118 = arith.constant 0 : index
    %111 = vector.load %arg6[%c6_116, %c0_117, %c0_118] : memref<11x32x32xf32, #tpu.memory_space<vmem>>, vector<1x32x32xf32>
    %112 = vector.shape_cast %111 : vector<1x32x32xf32> to vector<32x32xf32>
    %cst_119 = arith.constant dense<0.000000e+00> : vector<16x32xf32>
    %113 = tpu.matmul %110, %112, %cst_119 {dimension_numbers = #tpu.dot_dimension_numbers<[1], [0], [0], [1], [0, 0, 1, 1], [], []>} : vector<16x32xf32>, vector<32x32xf32>, vector<16x32xf32> -> vector<16x32xf32>
    %114 = arith.addf %108, %113 : vector<16x32xf32>
    %c0_120 = arith.constant 0 : index
    %c7_121 = arith.constant 7 : index
    %c0_122 = arith.constant 0 : index
    %115 = vector.load %arg1[%c0_120, %c7_121, %c0_122] : memref<1x26x32xf32, #tpu.memory_space<vmem>>, vector<1x16x32xf32>
    %116 = vector.shape_cast %115 : vector<1x16x32xf32> to vector<16x32xf32>
    %c7_123 = arith.constant 7 : index
    %c0_124 = arith.constant 0 : index
    %c0_125 = arith.constant 0 : index
    %117 = vector.load %arg6[%c7_123, %c0_124, %c0_125] : memref<11x32x32xf32, #tpu.memory_space<vmem>>, vector<1x32x32xf32>
    %118 = vector.shape_cast %117 : vector<1x32x32xf32> to vector<32x32xf32>
    %cst_126 = arith.constant dense<0.000000e+00> : vector<16x32xf32>
    %119 = tpu.matmul %116, %118, %cst_126 {dimension_numbers = #tpu.dot_dimension_numbers<[1], [0], [0], [1], [0, 0, 1, 1], [], []>} : vector<16x32xf32>, vector<32x32xf32>, vector<16x32xf32> -> vector<16x32xf32>
    %120 = arith.addf %114, %119 : vector<16x32xf32>
    %c0_127 = arith.constant 0 : index
    %c8_128 = arith.constant 8 : index
    %c0_129 = arith.constant 0 : index
    %121 = vector.load %arg1[%c0_127, %c8_128, %c0_129] : memref<1x26x32xf32, #tpu.memory_space<vmem>>, vector<1x16x32xf32>
    %122 = vector.shape_cast %121 : vector<1x16x32xf32> to vector<16x32xf32>
    %c8_130 = arith.constant 8 : index
    %c0_131 = arith.constant 0 : index
    %c0_132 = arith.constant 0 : index
    %123 = vector.load %arg6[%c8_130, %c0_131, %c0_132] : memref<11x32x32xf32, #tpu.memory_space<vmem>>, vector<1x32x32xf32>
    %124 = vector.shape_cast %123 : vector<1x32x32xf32> to vector<32x32xf32>
    %cst_133 = arith.constant dense<0.000000e+00> : vector<16x32xf32>
    %125 = tpu.matmul %122, %124, %cst_133 {dimension_numbers = #tpu.dot_dimension_numbers<[1], [0], [0], [1], [0, 0, 1, 1], [], []>} : vector<16x32xf32>, vector<32x32xf32>, vector<16x32xf32> -> vector<16x32xf32>
    %126 = arith.addf %120, %125 : vector<16x32xf32>
    %c0_134 = arith.constant 0 : index
    %c9 = arith.constant 9 : index
    %c0_135 = arith.constant 0 : index
    %127 = vector.load %arg1[%c0_134, %c9, %c0_135] : memref<1x26x32xf32, #tpu.memory_space<vmem>>, vector<1x16x32xf32>
    %128 = vector.shape_cast %127 : vector<1x16x32xf32> to vector<16x32xf32>
    %c9_136 = arith.constant 9 : index
    %c0_137 = arith.constant 0 : index
    %c0_138 = arith.constant 0 : index
    %129 = vector.load %arg6[%c9_136, %c0_137, %c0_138] : memref<11x32x32xf32, #tpu.memory_space<vmem>>, vector<1x32x32xf32>
    %130 = vector.shape_cast %129 : vector<1x32x32xf32> to vector<32x32xf32>
    %cst_139 = arith.constant dense<0.000000e+00> : vector<16x32xf32>
    %131 = tpu.matmul %128, %130, %cst_139 {dimension_numbers = #tpu.dot_dimension_numbers<[1], [0], [0], [1], [0, 0, 1, 1], [], []>} : vector<16x32xf32>, vector<32x32xf32>, vector<16x32xf32> -> vector<16x32xf32>
    %132 = arith.addf %126, %131 : vector<16x32xf32>
    %c0_140 = arith.constant 0 : index
    %c10 = arith.constant 10 : index
    %c0_141 = arith.constant 0 : index
    %133 = vector.load %arg1[%c0_140, %c10, %c0_141] : memref<1x26x32xf32, #tpu.memory_space<vmem>>, vector<1x16x32xf32>
    %134 = vector.shape_cast %133 : vector<1x16x32xf32> to vector<16x32xf32>
    %c10_142 = arith.constant 10 : index
    %c0_143 = arith.constant 0 : index
    %c0_144 = arith.constant 0 : index
    %135 = vector.load %arg6[%c10_142, %c0_143, %c0_144] : memref<11x32x32xf32, #tpu.memory_space<vmem>>, vector<1x32x32xf32>
    %136 = vector.shape_cast %135 : vector<1x32x32xf32> to vector<32x32xf32>
    %cst_145 = arith.constant dense<0.000000e+00> : vector<16x32xf32>
    %137 = tpu.matmul %134, %136, %cst_145 {dimension_numbers = #tpu.dot_dimension_numbers<[1], [0], [0], [1], [0, 0, 1, 1], [], []>} : vector<16x32xf32>, vector<32x32xf32>, vector<16x32xf32> -> vector<16x32xf32>
    %138 = arith.addf %132, %137 : vector<16x32xf32>
    %c0_146 = arith.constant 0 : index
    %c0_147 = arith.constant 0 : index
    %139 = vector.load %arg7[%c0_146, %c0_147] : memref<1x32xf32, #tpu.memory_space<vmem>>, vector<1x32xf32>
    %140 = vector.broadcast %139 : vector<1x32xf32> to vector<16x32xf32>
    %141 = arith.addf %138, %140 : vector<16x32xf32>
    %cst_148 = arith.constant 0.000000e+00 : f32
    %142 = vector.broadcast %cst_148 : f32 to vector<16x32xf32>
    %143 = arith.maximumf %141, %142 : vector<16x32xf32>
    %c0_149 = arith.constant 0 : index
    %c0_150 = arith.constant 0 : index
    %c64 = arith.constant 64 : index
    %144 = vector.load %arg8[%c0_149, %c0_150, %c64] : memref<1x16x128xf32, #tpu.memory_space<vmem>>, vector<1x16x32xf32>
    %145 = vector.shape_cast %144 : vector<1x16x32xf32> to vector<16x32xf32>
    %146 = vector.shape_cast %143 : vector<16x32xf32> to vector<1x16x32xf32>
    tpu.vector_store %arg8[%c0_149, %c0_150, %c64], %146 {strides = array<i32>} : memref<1x16x128xf32, #tpu.memory_space<vmem>>, vector<1x16x32xf32>,
    %c0_151 = arith.constant 0 : index
    %c5_152 = arith.constant 5 : index
    %c0_153 = arith.constant 0 : index
    %147 = vector.load %arg1[%c0_151, %c5_152, %c0_153] : memref<1x26x32xf32, #tpu.memory_space<vmem>>, vector<1x16x32xf32>
    %148 = vector.shape_cast %147 : vector<1x16x32xf32> to vector<16x32xf32>
    %c0_154 = arith.constant 0 : index
    %c0_155 = arith.constant 0 : index
    %c96 = arith.constant 96 : index
    %149 = vector.load %arg8[%c0_154, %c0_155, %c96] : memref<1x16x128xf32, #tpu.memory_space<vmem>>, vector<1x16x32xf32>
    %150 = vector.shape_cast %149 : vector<1x16x32xf32> to vector<16x32xf32>
    %151 = vector.shape_cast %148 : vector<16x32xf32> to vector<1x16x32xf32>
    tpu.vector_store %arg8[%c0_154, %c0_155, %c96], %151 {strides = array<i32>} : memref<1x16x128xf32, #tpu.memory_space<vmem>>, vector<1x16x32xf32>,
    return
  }
  func.func @transform_0(%arg0: i32) -> (i32, i32, i32) {
    %c0_i32 = arith.constant 0 : i32
    %c0_i32_0 = arith.constant 0 : i32
    %c0_i32_1 = arith.constant 0 : i32
    return %arg0, %c0_i32, %c0_i32_0 : i32, i32, i32
  }
  func.func @transform_1(%arg0: i32) -> (i32, i32, i32) {
    %c0_i32 = arith.constant 0 : i32
    %c0_i32_0 = arith.constant 0 : i32
    %c0_i32_1 = arith.constant 0 : i32
    %c0_i32_2 = arith.constant 0 : i32
    return %c0_i32, %c0_i32_0, %c0_i32_1 : i32, i32, i32
  }
  func.func @transform_2(%arg0: i32) -> (i32, i32) {
    %c0_i32 = arith.constant 0 : i32
    %c0_i32_0 = arith.constant 0 : i32
    %c0_i32_1 = arith.constant 0 : i32
    return %c0_i32, %c0_i32_0 : i32, i32
  }
  func.func @transform_3(%arg0: i32) -> (i32, i32, i32) {
    %c0_i32 = arith.constant 0 : i32
    %c0_i32_0 = arith.constant 0 : i32
    %c0_i32_1 = arith.constant 0 : i32
    %c0_i32_2 = arith.constant 0 : i32
    return %c0_i32, %c0_i32_0, %c0_i32_1 : i32, i32, i32
  }
  func.func @transform_4(%arg0: i32) -> (i32, i32) {
    %c0_i32 = arith.constant 0 : i32
    %c0_i32_0 = arith.constant 0 : i32
    %c0_i32_1 = arith.constant 0 : i32
    return %c0_i32, %c0_i32_0 : i32, i32
  }
  func.func @transform_5(%arg0: i32) -> (i32, i32, i32) {
    %c0_i32 = arith.constant 0 : i32
    %c0_i32_0 = arith.constant 0 : i32
    %c0_i32_1 = arith.constant 0 : i32
    %c0_i32_2 = arith.constant 0 : i32
    return %c0_i32, %c0_i32_0, %c0_i32_1 : i32, i32, i32
  }
  func.func @transform_6(%arg0: i32) -> (i32, i32) {
    %c0_i32 = arith.constant 0 : i32
    %c0_i32_0 = arith.constant 0 : i32
    %c0_i32_1 = arith.constant 0 : i32
    return %c0_i32, %c0_i32_0 : i32, i32
  }
  func.func @transform_7(%arg0: i32) -> (i32, i32, i32) {
    %c0_i32 = arith.constant 0 : i32
    %c0_i32_0 = arith.constant 0 : i32
    %c0_i32_1 = arith.constant 0 : i32
    return %arg0, %c0_i32, %c0_i32_0 : i32, i32, i32
  }
}

module attributes {stable_mosaic.version = 11 : i64} {
  func.func @bigru_rec_kernel(%arg0: i32, %arg1: memref<16x2x384xf32, #tpu.memory_space<vmem>>, %arg2: memref<1x128x384xf32, #tpu.memory_space<vmem>>, %arg3: memref<1x1x384xf32, #tpu.memory_space<vmem>>, %arg4: memref<16x2x128xf32, #tpu.memory_space<vmem>>, %arg5: memref<1x2x128xf32, #tpu.memory_space<vmem>>) attributes {dimension_semantics = [#tpu.dimension_semantics<parallel>], iteration_bounds = array<i64: 2>, scalar_prefetch = 0 : i64, scratch_operands = 0 : i64, tpu.core_type = #tpu.core_type<tc>, window_params = [{transform_indices = @transform_0, window_bounds = array<i64: 16, 2, 384>}, {transform_indices = @transform_1, window_bounds = array<i64: 1, 128, 384>}, {transform_indices = @transform_2, window_bounds = array<i64: 1, 1, 384>}, {transform_indices = @transform_3, window_bounds = array<i64: 16, 2, 128>}, {transform_indices = @transform_4, window_bounds = array<i64: 1, 2, 128>}]} {
    %cst = arith.constant 0.000000e+00 : f32
    %0 = vector.broadcast %cst : f32 to vector<2x128xf32>
    %c0_i32 = arith.constant 0 : i32
    %c16_i32 = arith.constant 16 : i32
    %1 = arith.addi %c0_i32, %c16_i32 : i32
    %c1_i32 = arith.constant 1 : i32
    %2 = scf.for %arg6 = %c0_i32 to %1 step %c1_i32 iter_args(%arg7 = %0) -> (vector<2x128xf32>)  : i32 {
      %c0_i32_3 = arith.constant 0 : i32
      %6 = arith.cmpi eq, %arg0, %c0_i32_3 : i32
      %c15_i32 = arith.constant 15 : i32
      %7 = arith.subi %c15_i32, %arg6 : i32
      %8 = arith.select %6, %arg6, %7 : i32
      %9 = arith.index_cast %8 : i32 to index
      %c0_4 = arith.constant 0 : index
      %c0_5 = arith.constant 0 : index
      %10 = vector.load %arg1[%9, %c0_4, %c0_5] : memref<16x2x384xf32, #tpu.memory_space<vmem>>, vector<1x2x384xf32>
      %11 = vector.shape_cast %10 : vector<1x2x384xf32> to vector<2x384xf32>
      %c0_6 = arith.constant 0 : index
      %c0_7 = arith.constant 0 : index
      %c0_8 = arith.constant 0 : index
      %12 = vector.load %arg2[%c0_6, %c0_7, %c0_8] : memref<1x128x384xf32, #tpu.memory_space<vmem>>, vector<1x128x384xf32>
      %13 = vector.shape_cast %12 : vector<1x128x384xf32> to vector<128x384xf32>
      %cst_9 = arith.constant dense<0.000000e+00> : vector<2x384xf32>
      %14 = tpu.matmul %arg7, %13, %cst_9 {dimension_numbers = #tpu.dot_dimension_numbers<[1], [0], [0], [1], [0, 0, 1, 1], [], []>} : vector<2x128xf32>, vector<128x384xf32>, vector<2x384xf32> -> vector<2x384xf32>
      %c0_10 = arith.constant 0 : index
      %c0_11 = arith.constant 0 : index
      %c0_12 = arith.constant 0 : index
      %15 = vector.load %arg3[%c0_10, %c0_11, %c0_12] : memref<1x1x384xf32, #tpu.memory_space<vmem>>, vector<1x1x384xf32>
      %16 = vector.shape_cast %15 : vector<1x1x384xf32> to vector<1x384xf32>
      %17 = vector.broadcast %16 : vector<1x384xf32> to vector<2x384xf32>
      %18 = arith.addf %14, %17 : vector<2x384xf32>
      %19 = vector.extract_strided_slice %11 {offsets = [0, 0], sizes = [2, 128], strides = [1, 1]} : vector<2x384xf32> to vector<2x128xf32>
      %20 = vector.extract_strided_slice %18 {offsets = [0, 0], sizes = [2, 128], strides = [1, 1]} : vector<2x384xf32> to vector<2x128xf32>
      %21 = arith.addf %19, %20 : vector<2x128xf32>
      %22 = arith.negf %21 : vector<2x128xf32>
      %23 = math.exp %22 : vector<2x128xf32>
      %cst_13 = arith.constant 1.000000e+00 : f32
      %24 = vector.broadcast %cst_13 : f32 to vector<2x128xf32>
      %25 = arith.addf %24, %23 : vector<2x128xf32>
      %26 = arith.divf %24, %25 : vector<2x128xf32>
      %27 = vector.extract_strided_slice %11 {offsets = [0, 128], sizes = [2, 128], strides = [1, 1]} : vector<2x384xf32> to vector<2x128xf32>
      %28 = vector.extract_strided_slice %18 {offsets = [0, 128], sizes = [2, 128], strides = [1, 1]} : vector<2x384xf32> to vector<2x128xf32>
      %29 = arith.addf %27, %28 : vector<2x128xf32>
      %30 = arith.negf %29 : vector<2x128xf32>
      %31 = math.exp %30 : vector<2x128xf32>
      %cst_14 = arith.constant 1.000000e+00 : f32
      %32 = vector.broadcast %cst_14 : f32 to vector<2x128xf32>
      %33 = arith.addf %32, %31 : vector<2x128xf32>
      %34 = arith.divf %32, %33 : vector<2x128xf32>
      %35 = vector.extract_strided_slice %11 {offsets = [0, 256], sizes = [2, 128], strides = [1, 1]} : vector<2x384xf32> to vector<2x128xf32>
      %36 = vector.extract_strided_slice %18 {offsets = [0, 256], sizes = [2, 128], strides = [1, 1]} : vector<2x384xf32> to vector<2x128xf32>
      %37 = arith.mulf %26, %36 : vector<2x128xf32>
      %38 = arith.addf %35, %37 : vector<2x128xf32>
      %39 = math.tanh %38 : vector<2x128xf32>
      %cst_15 = arith.constant 1.000000e+00 : f32
      %40 = vector.broadcast %cst_15 : f32 to vector<2x128xf32>
      %41 = arith.subf %40, %34 : vector<2x128xf32>
      %42 = arith.mulf %41, %39 : vector<2x128xf32>
      %43 = arith.mulf %34, %arg7 : vector<2x128xf32>
      %44 = arith.addf %42, %43 : vector<2x128xf32>
      %45 = arith.index_cast %8 : i32 to index
      %c0_16 = arith.constant 0 : index
      %c0_17 = arith.constant 0 : index
      %46 = vector.load %arg4[%45, %c0_16, %c0_17] : memref<16x2x128xf32, #tpu.memory_space<vmem>>, vector<1x2x128xf32>
      %47 = vector.shape_cast %46 : vector<1x2x128xf32> to vector<2x128xf32>
      %48 = vector.shape_cast %44 : vector<2x128xf32> to vector<1x2x128xf32>
      tpu.vector_store %arg4[%45, %c0_16, %c0_17], %48 {strides = array<i32>} : memref<16x2x128xf32, #tpu.memory_space<vmem>>, vector<1x2x128xf32>,
      scf.yield %44 : vector<2x128xf32>
    }
    %c16_i32_0 = arith.constant 16 : i32
    %c0 = arith.constant 0 : index
    %c0_1 = arith.constant 0 : index
    %c0_2 = arith.constant 0 : index
    %3 = vector.load %arg5[%c0, %c0_1, %c0_2] : memref<1x2x128xf32, #tpu.memory_space<vmem>>, vector<1x2x128xf32>
    %4 = vector.shape_cast %3 : vector<1x2x128xf32> to vector<2x128xf32>
    %5 = vector.shape_cast %2 : vector<2x128xf32> to vector<1x2x128xf32>
    tpu.vector_store %arg5[%c0, %c0_1, %c0_2], %5 {strides = array<i32>} : memref<1x2x128xf32, #tpu.memory_space<vmem>>, vector<1x2x128xf32>,
    return
  }
  func.func @transform_0(%arg0: i32) -> (i32, i32, i32) {
    %c0_i32 = arith.constant 0 : i32
    %c0_i32_0 = arith.constant 0 : i32
    %c0_i32_1 = arith.constant 0 : i32
    return %c0_i32, %c0_i32_0, %arg0 : i32, i32, i32
  }
  func.func @transform_1(%arg0: i32) -> (i32, i32, i32) {
    %c0_i32 = arith.constant 0 : i32
    %c0_i32_0 = arith.constant 0 : i32
    %c0_i32_1 = arith.constant 0 : i32
    return %arg0, %c0_i32, %c0_i32_0 : i32, i32, i32
  }
  func.func @transform_2(%arg0: i32) -> (i32, i32, i32) {
    %c0_i32 = arith.constant 0 : i32
    %c0_i32_0 = arith.constant 0 : i32
    %c0_i32_1 = arith.constant 0 : i32
    return %arg0, %c0_i32, %c0_i32_0 : i32, i32, i32
  }
  func.func @transform_3(%arg0: i32) -> (i32, i32, i32) {
    %c0_i32 = arith.constant 0 : i32
    %c0_i32_0 = arith.constant 0 : i32
    %c0_i32_1 = arith.constant 0 : i32
    return %c0_i32, %c0_i32_0, %arg0 : i32, i32, i32
  }
  func.func @transform_4(%arg0: i32) -> (i32, i32, i32) {
    %c0_i32 = arith.constant 0 : i32
    %c0_i32_0 = arith.constant 0 : i32
    %c0_i32_1 = arith.constant 0 : i32
    return %arg0, %c0_i32, %c0_i32_0 : i32, i32, i32
  }
}

module attributes {stable_mosaic.version = 11 : i64} {
  func.func @mlp2_res_kernel(%arg0: i32, %arg1: memref<32x256xf32, #tpu.memory_space<vmem>>, %arg2: memref<32x128xf32, #tpu.memory_space<vmem>>, %arg3: memref<256x512xf32, #tpu.memory_space<vmem>>, %arg4: memref<1x512xf32, #tpu.memory_space<vmem>>, %arg5: memref<1x512xf32, #tpu.memory_space<vmem>>, %arg6: memref<1x512xf32, #tpu.memory_space<vmem>>, %arg7: memref<512x128xf32, #tpu.memory_space<vmem>>, %arg8: memref<1x128xf32, #tpu.memory_space<vmem>>, %arg9: memref<1x128xf32, #tpu.memory_space<vmem>>, %arg10: memref<1x128xf32, #tpu.memory_space<vmem>>, %arg11: memref<32x128xf32, #tpu.memory_space<vmem>>) attributes {dimension_semantics = [#tpu.dimension_semantics<parallel>], iteration_bounds = array<i64: 1>, scalar_prefetch = 0 : i64, scratch_operands = 0 : i64, tpu.core_type = #tpu.core_type<tc>, window_params = [{transform_indices = @transform_0, window_bounds = array<i64: 32, 256>}, {transform_indices = @transform_1, window_bounds = array<i64: 32, 128>}, {pipeline_mode = #tpu.pipeline_mode<synchronous>, transform_indices = @transform_2, window_bounds = array<i64: 256, 512>}, {pipeline_mode = #tpu.pipeline_mode<synchronous>, transform_indices = @transform_3, window_bounds = array<i64: 1, 512>}, {pipeline_mode = #tpu.pipeline_mode<synchronous>, transform_indices = @transform_4, window_bounds = array<i64: 1, 512>}, {pipeline_mode = #tpu.pipeline_mode<synchronous>, transform_indices = @transform_5, window_bounds = array<i64: 1, 512>}, {pipeline_mode = #tpu.pipeline_mode<synchronous>, transform_indices = @transform_6, window_bounds = array<i64: 512, 128>}, {pipeline_mode = #tpu.pipeline_mode<synchronous>, transform_indices = @transform_7, window_bounds = array<i64: 1, 128>}, {pipeline_mode = #tpu.pipeline_mode<synchronous>, transform_indices = @transform_8, window_bounds = array<i64: 1, 128>}, {pipeline_mode = #tpu.pipeline_mode<synchronous>, transform_indices = @transform_9, window_bounds = array<i64: 1, 128>}, {transform_indices = @transform_10, window_bounds = array<i64: 32, 128>}]} {
    %c0 = arith.constant 0 : index
    %c0_0 = arith.constant 0 : index
    %0 = vector.load %arg1[%c0, %c0_0] : memref<32x256xf32, #tpu.memory_space<vmem>>, vector<32x256xf32>
    %c0_1 = arith.constant 0 : index
    %c0_2 = arith.constant 0 : index
    %1 = vector.load %arg3[%c0_1, %c0_2] : memref<256x512xf32, #tpu.memory_space<vmem>>, vector<256x512xf32>
    %c0_3 = arith.constant 0 : index
    %c0_4 = arith.constant 0 : index
    %2 = vector.load %arg4[%c0_3, %c0_4] : memref<1x512xf32, #tpu.memory_space<vmem>>, vector<1x512xf32>
    %c0_5 = arith.constant 0 : index
    %c0_6 = arith.constant 0 : index
    %3 = vector.load %arg5[%c0_5, %c0_6] : memref<1x512xf32, #tpu.memory_space<vmem>>, vector<1x512xf32>
    %c0_7 = arith.constant 0 : index
    %c0_8 = arith.constant 0 : index
    %4 = vector.load %arg6[%c0_7, %c0_8] : memref<1x512xf32, #tpu.memory_space<vmem>>, vector<1x512xf32>
    %c0_9 = arith.constant 0 : index
    %c0_10 = arith.constant 0 : index
    %5 = vector.load %arg7[%c0_9, %c0_10] : memref<512x128xf32, #tpu.memory_space<vmem>>, vector<512x128xf32>
    %c0_11 = arith.constant 0 : index
    %c0_12 = arith.constant 0 : index
    %6 = vector.load %arg8[%c0_11, %c0_12] : memref<1x128xf32, #tpu.memory_space<vmem>>, vector<1x128xf32>
    %c0_13 = arith.constant 0 : index
    %c0_14 = arith.constant 0 : index
    %7 = vector.load %arg9[%c0_13, %c0_14] : memref<1x128xf32, #tpu.memory_space<vmem>>, vector<1x128xf32>
    %c0_15 = arith.constant 0 : index
    %c0_16 = arith.constant 0 : index
    %8 = vector.load %arg10[%c0_15, %c0_16] : memref<1x128xf32, #tpu.memory_space<vmem>>, vector<1x128xf32>
    %cst = arith.constant dense<0.000000e+00> : vector<32x512xf32>
    %9 = tpu.matmul %0, %1, %cst {dimension_numbers = #tpu.dot_dimension_numbers<[1], [0], [0], [1], [0, 0, 1, 1], [], []>} : vector<32x256xf32>, vector<256x512xf32>, vector<32x512xf32> -> vector<32x512xf32>
    %10 = vector.broadcast %2 : vector<1x512xf32> to vector<32x512xf32>
    %11 = arith.addf %9, %10 : vector<32x512xf32>
    %cst_17 = arith.constant dense<0.000000e+00> : vector<32xf32>
    %12 = vector.multi_reduction <add>, %11, %cst_17 [1] : vector<32x512xf32> to vector<32xf32>
    %13 = vector.shape_cast %12 : vector<32xf32> to vector<32x1xf32>
    %cst_18 = arith.constant 5.120000e+02 : f32
    %14 = vector.broadcast %cst_18 : f32 to vector<32x1xf32>
    %15 = arith.divf %13, %14 : vector<32x1xf32>
    %16 = vector.broadcast %15 : vector<32x1xf32> to vector<32x512xf32>
    %17 = arith.subf %11, %16 : vector<32x512xf32>
    %18 = arith.mulf %17, %17 : vector<32x512xf32>
    %cst_19 = arith.constant dense<0.000000e+00> : vector<32xf32>
    %19 = vector.multi_reduction <add>, %18, %cst_19 [1] : vector<32x512xf32> to vector<32xf32>
    %20 = vector.shape_cast %19 : vector<32xf32> to vector<32x1xf32>
    %cst_20 = arith.constant 5.120000e+02 : f32
    %21 = vector.broadcast %cst_20 : f32 to vector<32x1xf32>
    %22 = arith.divf %20, %21 : vector<32x1xf32>
    %23 = vector.broadcast %15 : vector<32x1xf32> to vector<32x512xf32>
    %24 = arith.subf %11, %23 : vector<32x512xf32>
    %cst_21 = arith.constant 9.99999974E-6 : f32
    %25 = vector.broadcast %cst_21 : f32 to vector<32x1xf32>
    %26 = arith.addf %22, %25 : vector<32x1xf32>
    %27 = math.rsqrt %26 : vector<32x1xf32>
    %28 = vector.broadcast %27 : vector<32x1xf32> to vector<32x512xf32>
    %29 = arith.mulf %24, %28 : vector<32x512xf32>
    %30 = vector.broadcast %3 : vector<1x512xf32> to vector<32x512xf32>
    %31 = arith.mulf %29, %30 : vector<32x512xf32>
    %32 = vector.broadcast %4 : vector<1x512xf32> to vector<32x512xf32>
    %33 = arith.addf %31, %32 : vector<32x512xf32>
    %cst_22 = arith.constant 0.000000e+00 : f32
    %34 = vector.broadcast %cst_22 : f32 to vector<32x512xf32>
    %35 = arith.maximumf %33, %34 : vector<32x512xf32>
    %cst_23 = arith.constant dense<0.000000e+00> : vector<32x128xf32>
    %36 = tpu.matmul %35, %5, %cst_23 {dimension_numbers = #tpu.dot_dimension_numbers<[1], [0], [0], [1], [0, 0, 1, 1], [], []>} : vector<32x512xf32>, vector<512x128xf32>, vector<32x128xf32> -> vector<32x128xf32>
    %37 = vector.broadcast %6 : vector<1x128xf32> to vector<32x128xf32>
    %38 = arith.addf %36, %37 : vector<32x128xf32>
    %cst_24 = arith.constant dense<0.000000e+00> : vector<32xf32>
    %39 = vector.multi_reduction <add>, %38, %cst_24 [1] : vector<32x128xf32> to vector<32xf32>
    %40 = vector.shape_cast %39 : vector<32xf32> to vector<32x1xf32>
    %cst_25 = arith.constant 1.280000e+02 : f32
    %41 = vector.broadcast %cst_25 : f32 to vector<32x1xf32>
    %42 = arith.divf %40, %41 : vector<32x1xf32>
    %43 = vector.broadcast %42 : vector<32x1xf32> to vector<32x128xf32>
    %44 = arith.subf %38, %43 : vector<32x128xf32>
    %45 = arith.mulf %44, %44 : vector<32x128xf32>
    %cst_26 = arith.constant dense<0.000000e+00> : vector<32xf32>
    %46 = vector.multi_reduction <add>, %45, %cst_26 [1] : vector<32x128xf32> to vector<32xf32>
    %47 = vector.shape_cast %46 : vector<32xf32> to vector<32x1xf32>
    %cst_27 = arith.constant 1.280000e+02 : f32
    %48 = vector.broadcast %cst_27 : f32 to vector<32x1xf32>
    %49 = arith.divf %47, %48 : vector<32x1xf32>
    %50 = vector.broadcast %42 : vector<32x1xf32> to vector<32x128xf32>
    %51 = arith.subf %38, %50 : vector<32x128xf32>
    %cst_28 = arith.constant 9.99999974E-6 : f32
    %52 = vector.broadcast %cst_28 : f32 to vector<32x1xf32>
    %53 = arith.addf %49, %52 : vector<32x1xf32>
    %54 = math.rsqrt %53 : vector<32x1xf32>
    %55 = vector.broadcast %54 : vector<32x1xf32> to vector<32x128xf32>
    %56 = arith.mulf %51, %55 : vector<32x128xf32>
    %57 = vector.broadcast %7 : vector<1x128xf32> to vector<32x128xf32>
    %58 = arith.mulf %56, %57 : vector<32x128xf32>
    %59 = vector.broadcast %8 : vector<1x128xf32> to vector<32x128xf32>
    %60 = arith.addf %58, %59 : vector<32x128xf32>
    %cst_29 = arith.constant 0.000000e+00 : f32
    %61 = vector.broadcast %cst_29 : f32 to vector<32x128xf32>
    %62 = arith.maximumf %60, %61 : vector<32x128xf32>
    %c0_30 = arith.constant 0 : index
    %c0_31 = arith.constant 0 : index
    %63 = vector.load %arg2[%c0_30, %c0_31] : memref<32x128xf32, #tpu.memory_space<vmem>>, vector<32x128xf32>
    %64 = arith.addf %62, %63 : vector<32x128xf32>
    %c0_32 = arith.constant 0 : index
    %c0_33 = arith.constant 0 : index
    %65 = vector.load %arg11[%c0_32, %c0_33] : memref<32x128xf32, #tpu.memory_space<vmem>>, vector<32x128xf32>
    tpu.vector_store %arg11[%c0_32, %c0_33], %64 {strides = array<i32>} : memref<32x128xf32, #tpu.memory_space<vmem>>, vector<32x128xf32>,
    return
  }
  func.func @transform_0(%arg0: i32) -> (i32, i32) {
    %c0_i32 = arith.constant 0 : i32
    %c0_i32_0 = arith.constant 0 : i32
    return %arg0, %c0_i32 : i32, i32
  }
  func.func @transform_1(%arg0: i32) -> (i32, i32) {
    %c0_i32 = arith.constant 0 : i32
    %c0_i32_0 = arith.constant 0 : i32
    return %arg0, %c0_i32 : i32, i32
  }
  func.func @transform_2(%arg0: i32) -> (i32, i32) {
    %c0_i32 = arith.constant 0 : i32
    %c0_i32_0 = arith.constant 0 : i32
    %c0_i32_1 = arith.constant 0 : i32
    return %c0_i32, %c0_i32_0 : i32, i32
  }
  func.func @transform_3(%arg0: i32) -> (i32, i32) {
    %c0_i32 = arith.constant 0 : i32
    %c0_i32_0 = arith.constant 0 : i32
    %c0_i32_1 = arith.constant 0 : i32
    return %c0_i32, %c0_i32_0 : i32, i32
  }
  func.func @transform_4(%arg0: i32) -> (i32, i32) {
    %c0_i32 = arith.constant 0 : i32
    %c0_i32_0 = arith.constant 0 : i32
    %c0_i32_1 = arith.constant 0 : i32
    return %c0_i32, %c0_i32_0 : i32, i32
  }
  func.func @transform_5(%arg0: i32) -> (i32, i32) {
    %c0_i32 = arith.constant 0 : i32
    %c0_i32_0 = arith.constant 0 : i32
    %c0_i32_1 = arith.constant 0 : i32
    return %c0_i32, %c0_i32_0 : i32, i32
  }
  func.func @transform_6(%arg0: i32) -> (i32, i32) {
    %c0_i32 = arith.constant 0 : i32
    %c0_i32_0 = arith.constant 0 : i32
    %c0_i32_1 = arith.constant 0 : i32
    return %c0_i32, %c0_i32_0 : i32, i32
  }
  func.func @transform_7(%arg0: i32) -> (i32, i32) {
    %c0_i32 = arith.constant 0 : i32
    %c0_i32_0 = arith.constant 0 : i32
    %c0_i32_1 = arith.constant 0 : i32
    return %c0_i32, %c0_i32_0 : i32, i32
  }
  func.func @transform_8(%arg0: i32) -> (i32, i32) {
    %c0_i32 = arith.constant 0 : i32
    %c0_i32_0 = arith.constant 0 : i32
    %c0_i32_1 = arith.constant 0 : i32
    return %c0_i32, %c0_i32_0 : i32, i32
  }
  func.func @transform_9(%arg0: i32) -> (i32, i32) {
    %c0_i32 = arith.constant 0 : i32
    %c0_i32_0 = arith.constant 0 : i32
    %c0_i32_1 = arith.constant 0 : i32
    return %c0_i32, %c0_i32_0 : i32, i32
  }
  func.func @transform_10(%arg0: i32) -> (i32, i32) {
    %c0_i32 = arith.constant 0 : i32
    %c0_i32_0 = arith.constant 0 : i32
    return %arg0, %c0_i32 : i32, i32
  }
}

module attributes {stable_mosaic.version = 11 : i64} {
  func.func @linear_kernel(%arg0: i32, %arg1: memref<32x128xf32, #tpu.memory_space<vmem>>, %arg2: memref<128x128xf32, #tpu.memory_space<vmem>>, %arg3: memref<1x128xf32, #tpu.memory_space<vmem>>, %arg4: memref<32x128xf32, #tpu.memory_space<vmem>>) attributes {dimension_semantics = [#tpu.dimension_semantics<parallel>], iteration_bounds = array<i64: 1>, scalar_prefetch = 0 : i64, scratch_operands = 0 : i64, tpu.core_type = #tpu.core_type<tc>, window_params = [{transform_indices = @transform_0, window_bounds = array<i64: 32, 128>}, {pipeline_mode = #tpu.pipeline_mode<synchronous>, transform_indices = @transform_1, window_bounds = array<i64: 128, 128>}, {pipeline_mode = #tpu.pipeline_mode<synchronous>, transform_indices = @transform_2, window_bounds = array<i64: 1, 128>}, {transform_indices = @transform_3, window_bounds = array<i64: 32, 128>}]} {
    %c0 = arith.constant 0 : index
    %c0_0 = arith.constant 0 : index
    %0 = vector.load %arg1[%c0, %c0_0] : memref<32x128xf32, #tpu.memory_space<vmem>>, vector<32x128xf32>
    %c0_1 = arith.constant 0 : index
    %c0_2 = arith.constant 0 : index
    %1 = vector.load %arg2[%c0_1, %c0_2] : memref<128x128xf32, #tpu.memory_space<vmem>>, vector<128x128xf32>
    %cst = arith.constant dense<0.000000e+00> : vector<32x128xf32>
    %2 = tpu.matmul %0, %1, %cst {dimension_numbers = #tpu.dot_dimension_numbers<[1], [0], [0], [1], [0, 0, 1, 1], [], []>} : vector<32x128xf32>, vector<128x128xf32>, vector<32x128xf32> -> vector<32x128xf32>
    %c0_3 = arith.constant 0 : index
    %c0_4 = arith.constant 0 : index
    %3 = vector.load %arg3[%c0_3, %c0_4] : memref<1x128xf32, #tpu.memory_space<vmem>>, vector<1x128xf32>
    %4 = vector.broadcast %3 : vector<1x128xf32> to vector<32x128xf32>
    %5 = arith.addf %2, %4 : vector<32x128xf32>
    %c0_5 = arith.constant 0 : index
    %c0_6 = arith.constant 0 : index
    %6 = vector.load %arg4[%c0_5, %c0_6] : memref<32x128xf32, #tpu.memory_space<vmem>>, vector<32x128xf32>
    tpu.vector_store %arg4[%c0_5, %c0_6], %5 {strides = array<i32>} : memref<32x128xf32, #tpu.memory_space<vmem>>, vector<32x128xf32>,
    return
  }
  func.func @transform_0(%arg0: i32) -> (i32, i32) {
    %c0_i32 = arith.constant 0 : i32
    %c0_i32_0 = arith.constant 0 : i32
    return %arg0, %c0_i32 : i32, i32
  }
  func.func @transform_1(%arg0: i32) -> (i32, i32) {
    %c0_i32 = arith.constant 0 : i32
    %c0_i32_0 = arith.constant 0 : i32
    %c0_i32_1 = arith.constant 0 : i32
    return %c0_i32, %c0_i32_0 : i32, i32
  }
  func.func @transform_2(%arg0: i32) -> (i32, i32) {
    %c0_i32 = arith.constant 0 : i32
    %c0_i32_0 = arith.constant 0 : i32
    %c0_i32_1 = arith.constant 0 : i32
    return %c0_i32, %c0_i32_0 : i32, i32
  }
  func.func @transform_3(%arg0: i32) -> (i32, i32) {
    %c0_i32 = arith.constant 0 : i32
    %c0_i32_0 = arith.constant 0 : i32
    return %arg0, %c0_i32 : i32, i32
  }
}

</mosaic_0001>

<llo_original>
// kernel: forward.9
$region0: #{forward.9}
  #allocation0 [shape = 'u32[]', space=smem, size = 0x4, offset = 0x4, fixed_abs, tag = 'smem constant byte address 0x4 - core index']
  #allocation1 [shape = 'u32[144,128]{1,0:T(1,128)}', space=vmem, size = 0x12000, scoped, tag = 'internal scratch']
  %s0 = inlined_call_operand.vmem [shape: f32[32,8], index: 0, kind: input, shape index: {}]
  %s1 = inlined_call_operand.vmem [shape: f32[8,64], index: 1, kind: input, shape index: {}]
  %s2 = inlined_call_operand.vmem [shape: f32[1,64], index: 2, kind: input, shape index: {}]
  %s3 = inlined_call_operand.vmem [shape: f32[1,64], index: 3, kind: input, shape index: {}]
  %s4 = inlined_call_operand.vmem [shape: f32[1,64], index: 4, kind: input, shape index: {}]
  %s5 = inlined_call_operand.vmem [shape: f32[64,32], index: 5, kind: input, shape index: {}]
  %s6 = inlined_call_operand.vmem [shape: f32[1,32], index: 6, kind: input, shape index: {}]
  %s7 = inlined_call_operand.vmem [shape: f32[1,32], index: 7, kind: input, shape index: {}]
  %s8 = inlined_call_operand.vmem [shape: f32[1,32], index: 8, kind: input, shape index: {}]
  %s9 = inlined_call_operand.vmem [shape: f32[32,32], index: 9, kind: output, shape index: {}]
  %s10 = sld [smem:[#allocation0]]
  $region46: #{forward.9} parent=0
    _
  %s12 = ssub.s32 1, %s10
  %s13 = scalar_select 0, %s12, %s10
  // Predicated region
  $region2: #{forward.9} parent=0 // pred_check
    _
  $region3: #{forward.9} parent=0 // pred_check_branch
    %15 = sbr.rel (0) target = $region5
  $region4: #{forward.9} parent=0 // pred_region
    _
  $region5: #{forward.9} parent=0 // pred_fallthru
    _
  // Predicated region
  $region6: #{forward.9} parent=0 // pred_check
    _
  $region7: #{forward.9} parent=0 // pred_check_branch
    %17 = sbr.rel (0) target = $region9
  $region8: #{forward.9} parent=0 // pred_region
    _
  $region9: #{forward.9} parent=0 // pred_fallthru
    _
  // Predicated region
  $region10: #{forward.9} parent=0 // pred_check
    _
  $region11: #{forward.9} parent=0 // pred_check_branch
    %19 = sbr.rel (0) target = $region13
  $region12: #{forward.9} parent=0 // pred_region
    _
  $region13: #{forward.9} parent=0 // pred_fallthru
    _
  // Predicated region
  $region14: #{forward.9} parent=0 // pred_check
    _
  $region15: #{forward.9} parent=0 // pred_check_branch
    %21 = sbr.rel (0) target = $region17
  $region16: #{forward.9} parent=0 // pred_region
    _
  $region17: #{forward.9} parent=0 // pred_fallthru
    _
  // Predicated region
  $region18: #{forward.9} parent=0 // pred_check
    _
  $region19: #{forward.9} parent=0 // pred_check_branch
    %23 = sbr.rel (0) target = $region21
  $region20: #{forward.9} parent=0 // pred_region
    _
  $region21: #{forward.9} parent=0 // pred_fallthru
    _
  // Predicated region
  $region22: #{forward.9} parent=0 // pred_check
    _
  $region23: #{forward.9} parent=0 // pred_check_branch
    %25 = sbr.rel (0) target = $region25
  $region24: #{forward.9} parent=0 // pred_region
    _
  $region25: #{forward.9} parent=0 // pred_fallthru
    _
  // Predicated region
  $region26: #{forward.9} parent=0 // pred_check
    _
  $region27: #{forward.9} parent=0 // pred_check_branch
    %27 = sbr.rel (0) target = $region29
  $region28: #{forward.9} parent=0 // pred_region
    _
  $region29: #{forward.9} parent=0 // pred_fallthru
    _
  // Predicated region
  $region30: #{forward.9} parent=0 // pred_check
    _
  $region31: #{forward.9} parent=0 // pred_check_branch
    %29 = sbr.rel (0) target = $region33
  $region32: #{forward.9} parent=0 // pred_region
    _
  $region33: #{forward.9} parent=0 // pred_fallthru
    _
  // Predicated region
  $region34: #{forward.9} parent=0 // pred_check
    _
  $region35: #{forward.9} parent=0 // pred_check_branch
    %31 = sbr.rel (0) target = $region37
  $region36: #{forward.9} parent=0 // pred_region
    _
  $region37: #{forward.9} parent=0 // pred_fallthru
    _
  %v32 = vld [vmem:[%s0] sm:$0xff]
  %v33 = vld [vmem:[%s0 + $0x8] sm:$0xff]
  %v34 = vld [vmem:[%s0 + $0x10] sm:$0xff]
  %v35 = vld [vmem:[%s0 + $0x18] sm:$0xff]
  %v36 = vld [vmem:[%s1] sm:$0xff]
  %v37 = vld [vmem:[%s2] sm:$0x1]
  %v38 = vld [vmem:[%s3] sm:$0x1]
  %v39 = vld [vmem:[%s4] sm:$0x1]
  %v40 = vld [vmem:[%s5] sm:$0xff]
  %v41 = vld [vmem:[%s5 + $0x8] sm:$0xff]
  %v42 = vld [vmem:[%s5 + $0x10] sm:$0xff]
  %v43 = vld [vmem:[%s5 + $0x18] sm:$0xff]
  %v44 = vld [vmem:[%s5 + $0x20] sm:$0xff]
  %v45 = vld [vmem:[%s5 + $0x28] sm:$0xff]
  %v46 = vld [vmem:[%s5 + $0x30] sm:$0xff]
  %v47 = vld [vmem:[%s5 + $0x38] sm:$0xff]
  %v48 = vld [vmem:[%s6] sm:$0x1]
  %v49 = vld [vmem:[%s7] sm:$0x1]
  %v50 = vld [vmem:[%s8] sm:$0x1]
  %v52 = vlaneseq
  %v53 = vshrl.u32 %v52, 7
  %v54 = vsub.s32 0, %v53
  %v55 = vrot.slane %v37, %v54
  %vm57 = vcmask 64512
  %v59 = vsel %vm57, %v32, 0
  %v62 = vsel %vm57, %v33, 0
  %v65 = vsel %vm57, %v34, 0
  %v68 = vsel %vm57, %v35, 0
  %70 = vmatprep.subr.mxu0 0.0
  %71 = vmatpush1.msra.mxu0 %v36
  %72 = vmatprep.subr.mxu0 0.0
  %73 = vmatpush1.msra.mxu0 0.0
  %74 = vmatprep.subr.mxu0 0.0
  %75 = vmatpush1.msra.mxu0 0.0
  %76 = vmatprep.subr.mxu0 0.0
  %77 = vmatpush1.msra.mxu0 0.0
  %78 = vmatprep.subr.mxu0 0.0
  %79 = vmatpush1.msra.mxu0 0.0
  %80 = vmatprep.subr.mxu0 0.0
  %81 = vmatpush1.msra.mxu0 0.0
  %82 = vmatprep.subr.mxu0 0.0
  %83 = vmatpush1.msra.mxu0 0.0
  %84 = vmatprep.subr.mxu0 0.0
  %85 = vmatpush1.msra.mxu0 0.0
  %86 = vmatprep.subr.mxu0 0.0
  %87 = vmatpush1.msra.mxu0 0.0
  %88 = vmatprep.subr.mxu0 0.0
  %89 = vmatpush1.msra.mxu0 0.0
  %90 = vmatprep.subr.mxu0 0.0
  %91 = vmatpush1.msra.mxu0 0.0
  %92 = vmatprep.subr.mxu0 0.0
  %93 = vmatpush1.msra.mxu0 0.0
  %94 = vmatprep.subr.mxu0 0.0
  %95 = vmatpush1.msra.mxu0 0.0
  %96 = vmatprep.subr.mxu0 0.0
  %97 = vmatpush1.msra.mxu0 0.0
  %98 = vmatprep.subr.mxu0 0.0
  %99 = vmatpush1.msra.mxu0 0.0
  %100 = vmatprep.subr.mxu0 0.0
  %101 = vmatpush1.msra.mxu0 0.0
  %102 = vmatprep.subr.mxu0 0.0
  %103 = vmatpush1.msra.mxu0 0.0
  %104 = vmatprep.subr.mxu0 0.0
  %105 = vmatpush1.msra.mxu0 0.0
  %106 = vmatprep.subr.mxu0 0.0
  %107 = vmatpush1.msra.mxu0 0.0
  %108 = vmatprep.subr.mxu0 0.0
  %109 = vmatpush1.msra.mxu0 0.0
  %110 = vmatprep.subr.mxu0 0.0
  %111 = vmatpush1.msra.mxu0 0.0
  %112 = vmatprep.subr.mxu0 0.0
  %113 = vmatpush1.msra.mxu0 0.0
  %114 = vmatprep.subr.mxu0 0.0
  %115 = vmatpush1.msra.mxu0 0.0
  %116 = vmatprep.subr.mxu0 0.0
  %117 = vmatpush1.msra.mxu0 0.0
  %118 = vmatprep.subr.mxu0 0.0
  %119 = vmatpush1.msra.mxu0 0.0
  %120 = vmatprep.subr.mxu0 0.0
  %121 = vmatpush1.msra.mxu0 0.0
  %122 = vmatprep.subr.mxu0 0.0
  %123 = vmatpush1.msra.mxu0 0.0
  %124 = vmatprep.subr.mxu0 0.0
  %125 = vmatpush1.msra.mxu0 0.0
  %126 = vmatprep.subr.mxu0 0.0
  %127 = vmatpush1.msra.mxu0 0.0
  %128 = vmatprep.subr.mxu0 0.0
  %129 = vmatpush1.msra.mxu0 0.0
  %130 = vmatprep.subr.mxu0 0.0
  %131 = vmatpush1.msra.mxu0 0.0
  %132 = vmatprep.subr.mxu0 0.0
  %133 = vmatpush1.msra.mxu0 0.0
  %134 = vmatprep.mubr.f32.mxu0 0.0
  %135 = vmatmul.mubr.f32.gmra.mrb[0].mxu0 %v59
  %v136 = vpop.f32.mrb[0].mxu0
  %v137 = vadd.f32 %v55, %v136
  %v138 = vpop.f32.mrb[0].mxu0
  %139 = vmatprep.mubr.f32.mxu0 0.0
  %140 = vmatmul.mubr.f32.gmra.mrb[0].mxu0 %v62
  %v141 = vpop.f32.mrb[0].mxu0
  %v142 = vadd.f32 %v55, %v141
  %v143 = vpop.f32.mrb[0].mxu0
  %144 = vmatprep.mubr.f32.mxu0 0.0
  %145 = vmatmul.mubr.f32.gmra.mrb[0].mxu0 %v65
  %v146 = vpop.f32.mrb[0].mxu0
  %v147 = vadd.f32 %v55, %v146
  %v148 = vpop.f32.mrb[0].mxu0
  %149 = vmatprep.mubr.f32.mxu0 0.0
  %150 = vmatmul.mubr.f32.gmra.mrb[0].mxu0 %v68
  %v151 = vpop.f32.mrb[0].mxu0
  %v152 = vadd.f32 %v55, %v151
  %v153 = vpop.f32.mrb[0].mxu0
  %154 = vdwg.mxu0
  %vm155 = vcmask 523264
  %v156 = vsel %vm155, %v137, 0.0
  %157 = vadd.xlane.f32.xlu0 %v156
  %v158 = vpop.xlane.xlu0 %157
  %v159 = vsel %vm155, %v142, 0.0
  %160 = vadd.xlane.f32.xlu0 %v159
  %v161 = vpop.xlane.xlu0 %160
  %v162 = vsel %vm155, %v147, 0.0
  %163 = vadd.xlane.f32.xlu0 %v162
  %v164 = vpop.xlane.xlu0 %163
  %v165 = vsel %vm155, %v152, 0.0
  %166 = vadd.xlane.f32.xlu0 %v165
  %v167 = vpop.xlane.xlu0 %166
  %v168 = vrcp.pop 64.0
  %v169 = vmul.f32 %v158, %v168
  %v170 = vmul.f32 %v161, %v168
  %v171 = vmul.f32 %v164, %v168
  %v172 = vmul.f32 %v167, %v168
  %v173 = vsub.f32 %v137, %v169
  %v174 = vsub.f32 %v142, %v170
  %v175 = vsub.f32 %v147, %v171
  %v176 = vsub.f32 %v152, %v172
  %v177 = vmul.f32 %v173, %v173
  %v178 = vmul.f32 %v174, %v174
  %v179 = vmul.f32 %v175, %v175
  %v180 = vmul.f32 %v176, %v176
  %v181 = vsel %vm155, %v177, 0.0
  %182 = vadd.xlane.f32.xlu0 %v181
  %v183 = vpop.xlane.xlu0 %182
  %v184 = vsel %vm155, %v178, 0.0
  %185 = vadd.xlane.f32.xlu0 %v184
  %v186 = vpop.xlane.xlu0 %185
  %v187 = vsel %vm155, %v179, 0.0
  %188 = vadd.xlane.f32.xlu0 %v187
  %v189 = vpop.xlane.xlu0 %188
  %v190 = vsel %vm155, %v180, 0.0
  %191 = vadd.xlane.f32.xlu0 %v190
  %v192 = vpop.xlane.xlu0 %191
  %v193 = vmul.f32 %v183, %v168
  %v194 = vmul.f32 %v186, %v168
  %v195 = vmul.f32 %v189, %v168
  %v196 = vmul.f32 %v192, %v168
  %v197 = vadd.f32 %v193, 1e-05
  %v198 = vadd.f32 %v194, 1e-05
  %v199 = vadd.f32 %v195, 1e-05
  %v200 = vadd.f32 %v196, 1e-05
  %v201 = vrsqrt.pop %v197
  %v202 = vrsqrt.pop %v198
  %v203 = vrsqrt.pop %v199
  %v204 = vrsqrt.pop %v200
  %v205 = vmul.f32 %v173, %v201
  %v206 = vmul.f32 %v174, %v202
  %v207 = vmul.f32 %v175, %v203
  %v208 = vmul.f32 %v176, %v204
  %v210 = vlaneseq
  %v211 = vshrl.u32 %v210, 7
  %v212 = vsub.s32 0, %v211
  %v213 = vrot.slane %v38, %v212
  %v215 = vmul.f32 %v205, %v213
  %v216 = vmul.f32 %v206, %v213
  %v217 = vmul.f32 %v207, %v213
  %v218 = vmul.f32 %v208, %v213
  %v220 = vlaneseq
  %v221 = vshrl.u32 %v220, 7
  %v222 = vsub.s32 0, %v221
  %v223 = vrot.slane %v39, %v222
  %v225 = vadd.f32 %v215, %v223
  %v226 = vadd.f32 %v216, %v223
  %v227 = vadd.f32 %v217, %v223
  %v228 = vadd.f32 %v218, %v223
  %v229 = vmax.f32 %v225, 0.0
  %v230 = vmax.f32 %v226, 0.0
  %v231 = vmax.f32 %v227, 0.0
  %v232 = vmax.f32 %v228, 0.0
  %v234 = vlaneseq
  %v235 = vshrl.u32 %v234, 7
  %v236 = vsub.s32 0, %v235
  %v237 = vrot.slane %v48, %v236
  %v240 = vsel %vm155, %v229, 0
  %v243 = vsel %vm155, %v230, 0
  %v246 = vsel %vm155, %v231, 0
  %v249 = vsel %vm155, %v232, 0
  %251 = vmatprep.subr.mxu0 0.0
  %252 = vmatpush1.msra.mxu0 %v40
  %253 = vmatprep.subr.mxu0 0.0
  %254 = vmatpush1.msra.mxu0 %v41
  %255 = vmatprep.subr.mxu0 0.0
  %256 = vmatpush1.msra.mxu0 %v42
  %257 = vmatprep.subr.mxu0 0.0
  %258 = vmatpush1.msra.mxu0 %v43
  %259 = vmatprep.subr.mxu0 0.0
  %260 = vmatpush1.msra.mxu0 %v44
  %261 = vmatprep.subr.mxu0 0.0
  %262 = vmatpush1.msra.mxu0 %v45
  %263 = vmatprep.subr.mxu0 0.0
  %264 = vmatpush1.msra.mxu0 %v46
  %265 = vmatprep.subr.mxu0 0.0
  %266 = vmatpush1.msra.mxu0 %v47
  %267 = vmatprep.subr.mxu0 0.0
  %268 = vmatpush1.msra.mxu0 0.0
  %269 = vmatprep.subr.mxu0 0.0
  %270 = vmatpush1.msra.mxu0 0.0
  %271 = vmatprep.subr.mxu0 0.0
  %272 = vmatpush1.msra.mxu0 0.0
  %273 = vmatprep.subr.mxu0 0.0
  %274 = vmatpush1.msra.mxu0 0.0
  %275 = vmatprep.subr.mxu0 0.0
  %276 = vmatpush1.msra.mxu0 0.0
  %277 = vmatprep.subr.mxu0 0.0
  %278 = vmatpush1.msra.mxu0 0.0
  %279 = vmatprep.subr.mxu0 0.0
  %280 = vmatpush1.msra.mxu0 0.0
  %281 = vmatprep.subr.mxu0 0.0
  %282 = vmatpush1.msra.mxu0 0.0
  %283 = vmatprep.subr.mxu0 0.0
  %284 = vmatpush1.msra.mxu0 0.0
  %285 = vmatprep.subr.mxu0 0.0
  %286 = vmatpush1.msra.mxu0 0.0
  %287 = vmatprep.subr.mxu0 0.0
  %288 = vmatpush1.msra.mxu0 0.0
  %289 = vmatprep.subr.mxu0 0.0
  %290 = vmatpush1.msra.mxu0 0.0
  %291 = vmatprep.subr.mxu0 0.0
  %292 = vmatpush1.msra.mxu0 0.0
  %293 = vmatprep.subr.mxu0 0.0
  %294 = vmatpush1.msra.mxu0 0.0
  %295 = vmatprep.subr.mxu0 0.0
  %296 = vmatpush1.msra.mxu0 0.0
  %297 = vmatprep.subr.mxu0 0.0
  %298 = vmatpush1.msra.mxu0 0.0
  %299 = vmatprep.subr.mxu0 0.0
  %300 = vmatpush1.msra.mxu0 0.0
  %301 = vmatprep.subr.mxu0 0.0
  %302 = vmatpush1.msra.mxu0 0.0
  %303 = vmatprep.subr.mxu0 0.0
  %304 = vmatpush1.msra.mxu0 0.0
  %305 = vmatprep.subr.mxu0 0.0
  %306 = vmatpush1.msra.mxu0 0.0
  %307 = vmatprep.subr.mxu0 0.0
  %308 = vmatpush1.msra.mxu0 0.0
  %309 = vmatprep.subr.mxu0 0.0
  %310 = vmatpush1.msra.mxu0 0.0
  %311 = vmatprep.subr.mxu0 0.0
  %312 = vmatpush1.msra.mxu0 0.0
  %313 = vmatprep.subr.mxu0 0.0
  %314 = vmatpush1.msra.mxu0 0.0
  %315 = vmatprep.mubr.f32.mxu0 0.0
  %316 = vmatmul.mubr.f32.gmra.mrb[0].mxu0 %v240
  %v317 = vpop.f32.mrb[0].mxu0
  %v318 = vadd.f32 %v237, %v317
  %v319 = vpop.f32.mrb[0].mxu0
  %320 = vmatprep.mubr.f32.mxu0 0.0
  %321 = vmatmul.mubr.f32.gmra.mrb[0].mxu0 %v243
  %v322 = vpop.f32.mrb[0].mxu0
  %v323 = vadd.f32 %v237, %v322
  %v324 = vpop.f32.mrb[0].mxu0
  %325 = vmatprep.mubr.f32.mxu0 0.0
  %326 = vmatmul.mubr.f32.gmra.mrb[0].mxu0 %v246
  %v327 = vpop.f32.mrb[0].mxu0
  %v328 = vadd.f32 %v237, %v327
  %v329 = vpop.f32.mrb[0].mxu0
  %330 = vmatprep.mubr.f32.mxu0 0.0
  %331 = vmatmul.mubr.f32.gmra.mrb[0].mxu0 %v249
  %v332 = vpop.f32.mrb[0].mxu0
  %v333 = vadd.f32 %v237, %v332
  %v334 = vpop.f32.mrb[0].mxu0
  %335 = vdwg.mxu0
  %vm336 = vcmask 261120
  %v337 = vsel %vm336, %v318, 0.0
  %338 = vadd.xlane.f32.xlu0 %v337
  %v339 = vpop.xlane.xlu0 %338
  %v340 = vsel %vm336, %v323, 0.0
  %341 = vadd.xlane.f32.xlu0 %v340
  %v342 = vpop.xlane.xlu0 %341
  %v343 = vsel %vm336, %v328, 0.0
  %344 = vadd.xlane.f32.xlu0 %v343
  %v345 = vpop.xlane.xlu0 %344
  %v346 = vsel %vm336, %v333, 0.0
  %347 = vadd.xlane.f32.xlu0 %v346
  %v348 = vpop.xlane.xlu0 %347
  %v349 = vrcp.pop 32.0
  %v350 = vmul.f32 %v339, %v349
  %v351 = vmul.f32 %v342, %v349
  %v352 = vmul.f32 %v345, %v349
  %v353 = vmul.f32 %v348, %v349
  %v354 = vsub.f32 %v318, %v350
  %v355 = vsub.f32 %v323, %v351
  %v356 = vsub.f32 %v328, %v352
  %v357 = vsub.f32 %v333, %v353
  %v358 = vmul.f32 %v354, %v354
  %v359 = vmul.f32 %v355, %v355
  %v360 = vmul.f32 %v356, %v356
  %v361 = vmul.f32 %v357, %v357
  %v362 = vsel %vm336, %v358, 0.0
  %363 = vadd.xlane.f32.xlu0 %v362
  %v364 = vpop.xlane.xlu0 %363
  %v365 = vsel %vm336, %v359, 0.0
  %366 = vadd.xlane.f32.xlu0 %v365
  %v367 = vpop.xlane.xlu0 %366
  %v368 = vsel %vm336, %v360, 0.0
  %369 = vadd.xlane.f32.xlu0 %v368
  %v370 = vpop.xlane.xlu0 %369
  %v371 = vsel %vm336, %v361, 0.0
  %372 = vadd.xlane.f32.xlu0 %v371
  %v373 = vpop.xlane.xlu0 %372
  %v374 = vmul.f32 %v364, %v349
  %v375 = vmul.f32 %v367, %v349
  %v376 = vmul.f32 %v370, %v349
  %v377 = vmul.f32 %v373, %v349
  %v378 = vadd.f32 %v374, 1e-05
  %v379 = vadd.f32 %v375, 1e-05
  %v380 = vadd.f32 %v376, 1e-05
  %v381 = vadd.f32 %v377, 1e-05
  %v382 = vrsqrt.pop %v378
  %v383 = vrsqrt.pop %v379
  %v384 = vrsqrt.pop %v380
  %v385 = vrsqrt.pop %v381
  %v386 = vmul.f32 %v354, %v382
  %v387 = vmul.f32 %v355, %v383
  %v388 = vmul.f32 %v356, %v384
  %v389 = vmul.f32 %v357, %v385
  %v391 = vlaneseq
  %v392 = vshrl.u32 %v391, 7
  %v393 = vsub.s32 0, %v392
  %v394 = vrot.slane %v49, %v393
  %v396 = vmul.f32 %v386, %v394
  %v397 = vmul.f32 %v387, %v394
  %v398 = vmul.f32 %v388, %v394
  %v399 = vmul.f32 %v389, %v394
  %v401 = vlaneseq
  %v402 = vshrl.u32 %v401, 7
  %v403 = vsub.s32 0, %v402
  %v404 = vrot.slane %v50, %v403
  %v406 = vadd.f32 %v396, %v404
  %v407 = vadd.f32 %v397, %v404
  %v408 = vadd.f32 %v398, %v404
  %v409 = vadd.f32 %v399, %v404
  %v410 = vmax.f32 %v406, 0.0
  %v411 = vmax.f32 %v407, 0.0
  %v412 = vmax.f32 %v408, 0.0
  %v413 = vmax.f32 %v409, 0.0
  %414 = vst.msk [vmem:[%s9] sm:$0xff] %vm336, %v410
  %415 = vst.msk [vmem:[%s9 + $0x8] sm:$0xff] %vm336, %v411
  %416 = vst.msk [vmem:[%s9 + $0x10] sm:$0xff] %vm336, %v412
  %417 = vst.msk [vmem:[%s9 + $0x18] sm:$0xff] %vm336, %v413
  // Predicated region
  $region38: #{forward.9} parent=0 // pred_check
    _
  $region39: #{forward.9} parent=0 // pred_check_branch
    %419 = sbr.rel (0) target = $region41
  $region40: #{forward.9} parent=0 // pred_region
    _
  $region41: #{forward.9} parent=0 // pred_fallthru
    _
  // Predicated region
  $region42: #{forward.9} parent=0 // pred_check
    _
  $region43: #{forward.9} parent=0 // pred_check_branch
    %421 = sbr.rel (0) target = $region45
  $region44: #{forward.9} parent=0 // pred_region
    _
  $region45: #{forward.9} parent=0 // pred_fallthru
    _

// kernel: forward.11
$region0: #{forward.11}
  #allocation0 [shape = 'u32[]', space=smem, size = 0x4, offset = 0x4, fixed_abs, tag = 'smem constant byte address 0x4 - core index']
  #allocation1 [shape = 'u32[144,128]{1,0:T(1,128)}', space=vmem, size = 0x12000, scoped, tag = 'internal scratch']
  %s0 = inlined_call_operand.vmem [shape: f32[32,128], index: 0, kind: input, shape index: {}]
  %s1 = inlined_call_operand.vmem [shape: f32[128,768], index: 1, kind: input, shape index: {}]
  %s2 = inlined_call_operand.vmem [shape: f32[1,768], index: 2, kind: input, shape index: {}]
  %s3 = inlined_call_operand.vmem [shape: f32[32,768], index: 3, kind: output, shape index: {}]
  %s4 = sld [smem:[#allocation0]]
  $region22: #{forward.11} parent=0
    _
  %s6 = ssub.s32 1, %s4
  %s7 = scalar_select 0, %s6, %s4
  // Predicated region
  $region2: #{forward.11} parent=0 // pred_check
    _
  $region3: #{forward.11} parent=0 // pred_check_branch
    %9 = sbr.rel (0) target = $region5
  $region4: #{forward.11} parent=0 // pred_region
    _
  $region5: #{forward.11} parent=0 // pred_fallthru
    _
  // Predicated region
  $region6: #{forward.11} parent=0 // pred_check
    _
  $region7: #{forward.11} parent=0 // pred_check_branch
    %11 = sbr.rel (0) target = $region9
  $region8: #{forward.11} parent=0 // pred_region
    _
  $region9: #{forward.11} parent=0 // pred_fallthru
    _
  // Predicated region
  $region10: #{forward.11} parent=0 // pred_check
    _
  $region11: #{forward.11} parent=0 // pred_check_branch
    %13 = sbr.rel (0) target = $region13
  $region12: #{forward.11} parent=0 // pred_region
    _
  $region13: #{forward.11} parent=0 // pred_fallthru
    _
  %v14 = vld [vmem:[%s0] sm:$0xff]
  %v15 = vld [vmem:[%s0 + $0x8] sm:$0xff]
  %v16 = vld [vmem:[%s0 + $0x10] sm:$0xff]
  %v17 = vld [vmem:[%s0 + $0x18] sm:$0xff]
  %v18 = vld [vmem:[%s1] sm:$0xff]
  %v19 = vld [vmem:[%s1 + $0x8] sm:$0xff]
  %v20 = vld [vmem:[%s1 + $0x10] sm:$0xff]
  %v21 = vld [vmem:[%s1 + $0x18] sm:$0xff]
  %v22 = vld [vmem:[%s1 + $0x20] sm:$0xff]
  %v23 = vld [vmem:[%s1 + $0x28] sm:$0xff]
  %v24 = vld [vmem:[%s1 + $0x30] sm:$0xff]
  %v25 = vld [vmem:[%s1 + $0x38] sm:$0xff]
  %v26 = vld [vmem:[%s1 + $0x40] sm:$0xff]
  %v27 = vld [vmem:[%s1 + $0x48] sm:$0xff]
  %v28 = vld [vmem:[%s1 + $0x50] sm:$0xff]
  %v29 = vld [vmem:[%s1 + $0x58] sm:$0xff]
  %v30 = vld [vmem:[%s1 + $0x60] sm:$0xff]
  %v31 = vld [vmem:[%s1 + $0x68] sm:$0xff]
  %v32 = vld [vmem:[%s1 + $0x70] sm:$0xff]
  %v33 = vld [vmem:[%s1 + $0x78] sm:$0xff]
  %v34 = vld [vmem:[%s1 + $0x80] sm:$0xff]
  %v35 = vld [vmem:[%s1 + $0x88] sm:$0xff]
  %v36 = vld [vmem:[%s1 + $0x90] sm:$0xff]
  %v37 = vld [vmem:[%s1 + $0x98] sm:$0xff]
  %v38 = vld [vmem:[%s1 + $0xa0] sm:$0xff]
  %v39 = vld [vmem:[%s1 + $0xa8] sm:$0xff]
  %v40 = vld [vmem:[%s1 + $0xb0] sm:$0xff]
  %v41 = vld [vmem:[%s1 + $0xb8] sm:$0xff]
  %v42 = vld [vmem:[%s1 + $0xc0] sm:$0xff]
  %v43 = vld [vmem:[%s1 + $0xc8] sm:$0xff]
  %v44 = vld [vmem:[%s1 + $0xd0] sm:$0xff]
  %v45 = vld [vmem:[%s1 + $0xd8] sm:$0xff]
  %v46 = vld [vmem:[%s1 + $0xe0] sm:$0xff]
  %v47 = vld [vmem:[%s1 + $0xe8] sm:$0xff]
  %v48 = vld [vmem:[%s1 + $0xf0] sm:$0xff]
  %v49 = vld [vmem:[%s1 + $0xf8] sm:$0xff]
  %v50 = vld [vmem:[%s1 + $0x100] sm:$0xff]
  %v51 = vld [vmem:[%s1 + $0x108] sm:$0xff]
  %v52 = vld [vmem:[%s1 + $0x110] sm:$0xff]
  %v53 = vld [vmem:[%s1 + $0x118] sm:$0xff]
  %v54 = vld [vmem:[%s1 + $0x120] sm:$0xff]
  %v55 = vld [vmem:[%s1 + $0x128] sm:$0xff]
  %v56 = vld [vmem:[%s1 + $0x130] sm:$0xff]
  %v57 = vld [vmem:[%s1 + $0x138] sm:$0xff]
  %v58 = vld [vmem:[%s1 + $0x140] sm:$0xff]
  %v59 = vld [vmem:[%s1 + $0x148] sm:$0xff]
  %v60 = vld [vmem:[%s1 + $0x150] sm:$0xff]
  %v61 = vld [vmem:[%s1 + $0x158] sm:$0xff]
  %v62 = vld [vmem:[%s1 + $0x160] sm:$0xff]
  %v63 = vld [vmem:[%s1 + $0x168] sm:$0xff]
  %v64 = vld [vmem:[%s1 + $0x170] sm:$0xff]
  %v65 = vld [vmem:[%s1 + $0x178] sm:$0xff]
  %v66 = vld [vmem:[%s1 + $0x180] sm:$0xff]
  %v67 = vld [vmem:[%s1 + $0x188] sm:$0xff]
  %v68 = vld [vmem:[%s1 + $0x190] sm:$0xff]
  %v69 = vld [vmem:[%s1 + $0x198] sm:$0xff]
  %v70 = vld [vmem:[%s1 + $0x1a0] sm:$0xff]
  %v71 = vld [vmem:[%s1 + $0x1a8] sm:$0xff]
  %v72 = vld [vmem:[%s1 + $0x1b0] sm:$0xff]
  %v73 = vld [vmem:[%s1 + $0x1b8] sm:$0xff]
  %v74 = vld [vmem:[%s1 + $0x1c0] sm:$0xff]
  %v75 = vld [vmem:[%s1 + $0x1c8] sm:$0xff]
  %v76 = vld [vmem:[%s1 + $0x1d0] sm:$0xff]
  %v77 = vld [vmem:[%s1 + $0x1d8] sm:$0xff]
  %v78 = vld [vmem:[%s1 + $0x1e0] sm:$0xff]
  %v79 = vld [vmem:[%s1 + $0x1e8] sm:$0xff]
  %v80 = vld [vmem:[%s1 + $0x1f0] sm:$0xff]
  %v81 = vld [vmem:[%s1 + $0x1f8] sm:$0xff]
  %v82 = vld [vmem:[%s1 + $0x200] sm:$0xff]
  %v83 = vld [vmem:[%s1 + $0x208] sm:$0xff]
  %v84 = vld [vmem:[%s1 + $0x210] sm:$0xff]
  %v85 = vld [vmem:[%s1 + $0x218] sm:$0xff]
  %v86 = vld [vmem:[%s1 + $0x220] sm:$0xff]
  %v87 = vld [vmem:[%s1 + $0x228] sm:$0xff]
  %v88 = vld [vmem:[%s1 + $0x230] sm:$0xff]
  %v89 = vld [vmem:[%s1 + $0x238] sm:$0xff]
  %v90 = vld [vmem:[%s1 + $0x240] sm:$0xff]
  %v91 = vld [vmem:[%s1 + $0x248] sm:$0xff]
  %v92 = vld [vmem:[%s1 + $0x250] sm:$0xff]
  %v93 = vld [vmem:[%s1 + $0x258] sm:$0xff]
  %v94 = vld [vmem:[%s1 + $0x260] sm:$0xff]
  %v95 = vld [vmem:[%s1 + $0x268] sm:$0xff]
  %v96 = vld [vmem:[%s1 + $0x270] sm:$0xff]
  %v97 = vld [vmem:[%s1 + $0x278] sm:$0xff]
  %v98 = vld [vmem:[%s1 + $0x280] sm:$0xff]
  %v99 = vld [vmem:[%s1 + $0x288] sm:$0xff]
  %v100 = vld [vmem:[%s1 + $0x290] sm:$0xff]
  %v101 = vld [vmem:[%s1 + $0x298] sm:$0xff]
  %v102 = vld [vmem:[%s1 + $0x2a0] sm:$0xff]
  %v103 = vld [vmem:[%s1 + $0x2a8] sm:$0xff]
  %v104 = vld [vmem:[%s1 + $0x2b0] sm:$0xff]
  %v105 = vld [vmem:[%s1 + $0x2b8] sm:$0xff]
  %v106 = vld [vmem:[%s1 + $0x2c0] sm:$0xff]
  %v107 = vld [vmem:[%s1 + $0x2c8] sm:$0xff]
  %v108 = vld [vmem:[%s1 + $0x2d0] sm:$0xff]
  %v109 = vld [vmem:[%s1 + $0x2d8] sm:$0xff]
  %v110 = vld [vmem:[%s1 + $0x2e0] sm:$0xff]
  %v111 = vld [vmem:[%s1 + $0x2e8] sm:$0xff]
  %v112 = vld [vmem:[%s1 + $0x2f0] sm:$0xff]
  %v113 = vld [vmem:[%s1 + $0x2f8] sm:$0xff]
  %v114 = vld [vmem:[%s2] sm:$0x3f]
  %v116 = vlaneseq
  %v117 = vshrl.u32 %v116, 7
  %v118 = vsub.s32 0, %v117
  %v119 = vrot.slane %v114, %v118
  %v120 = vlaneseq
  %v121 = vshrl.u32 %v120, 7
  %v122 = vsub.s32 1, %v121
  %v123 = vrot.slane %v114, %v122
  %v124 = vlaneseq
  %v125 = vshrl.u32 %v124, 7
  %v126 = vsub.s32 2, %v125
  %v127 = vrot.slane %v114, %v126
  %v128 = vlaneseq
  %v129 = vshrl.u32 %v128, 7
  %v130 = vsub.s32 3, %v129
  %v131 = vrot.slane %v114, %v130
  %v132 = vlaneseq
  %v133 = vshrl.u32 %v132, 7
  %v134 = vsub.s32 4, %v133
  %v135 = vrot.slane %v114, %v134
  %v136 = vlaneseq
  %v137 = vshrl.u32 %v136, 7
  %v138 = vsub.s32 5, %v137
  %v139 = vrot.slane %v114, %v138
  %146 = vmatprep.subr.mxu0 %v19
  %147 = vmatpush1.msra.mxu0 %v18
  %148 = vmatprep.subr.mxu0 %v25
  %149 = vmatpush1.msra.mxu0 %v24
  %150 = vmatprep.subr.mxu0 %v31
  %151 = vmatpush1.msra.mxu0 %v30
  %152 = vmatprep.subr.mxu0 %v37
  %153 = vmatpush1.msra.mxu0 %v36
  %154 = vmatprep.subr.mxu0 %v43
  %155 = vmatpush1.msra.mxu0 %v42
  %156 = vmatprep.subr.mxu0 %v49
  %157 = vmatpush1.msra.mxu0 %v48
  %158 = vmatprep.subr.mxu0 %v55
  %159 = vmatpush1.msra.mxu0 %v54
  %160 = vmatprep.subr.mxu0 %v61
  %161 = vmatpush1.msra.mxu0 %v60
  %162 = vmatprep.subr.mxu0 %v67
  %163 = vmatpush1.msra.mxu0 %v66
  %164 = vmatprep.subr.mxu0 %v73
  %165 = vmatpush1.msra.mxu0 %v72
  %166 = vmatprep.subr.mxu0 %v79
  %167 = vmatpush1.msra.mxu0 %v78
  %168 = vmatprep.subr.mxu0 %v85
  %169 = vmatpush1.msra.mxu0 %v84
  %170 = vmatprep.subr.mxu0 %v91
  %171 = vmatpush1.msra.mxu0 %v90
  %172 = vmatprep.subr.mxu0 %v97
  %173 = vmatpush1.msra.mxu0 %v96
  %174 = vmatprep.subr.mxu0 %v103
  %175 = vmatpush1.msra.mxu0 %v102
  %176 = vmatprep.subr.mxu0 %v109
  %177 = vmatpush1.msra.mxu0 %v108
  %178 = vmatprep.subr.mxu0 0.0
  %179 = vmatpush1.msra.mxu0 0.0
  %180 = vmatprep.subr.mxu0 0.0
  %181 = vmatpush1.msra.mxu0 0.0
  %182 = vmatprep.subr.mxu0 0.0
  %183 = vmatpush1.msra.mxu0 0.0
  %184 = vmatprep.subr.mxu0 0.0
  %185 = vmatpush1.msra.mxu0 0.0
  %186 = vmatprep.subr.mxu0 0.0
  %187 = vmatpush1.msra.mxu0 0.0
  %188 = vmatprep.subr.mxu0 0.0
  %189 = vmatpush1.msra.mxu0 0.0
  %190 = vmatprep.subr.mxu0 0.0
  %191 = vmatpush1.msra.mxu0 0.0
  %192 = vmatprep.subr.mxu0 0.0
  %193 = vmatpush1.msra.mxu0 0.0
  %194 = vmatprep.subr.mxu0 0.0
  %195 = vmatpush1.msra.mxu0 0.0
  %196 = vmatprep.subr.mxu0 0.0
  %197 = vmatpush1.msra.mxu0 0.0
  %198 = vmatprep.subr.mxu0 0.0
  %199 = vmatpush1.msra.mxu0 0.0
  %200 = vmatprep.subr.mxu0 0.0
  %201 = vmatpush1.msra.mxu0 0.0
  %202 = vmatprep.subr.mxu0 0.0
  %203 = vmatpush1.msra.mxu0 0.0
  %204 = vmatprep.subr.mxu0 0.0
  %205 = vmatpush1.msra.mxu0 0.0
  %206 = vmatprep.subr.mxu0 0.0
  %207 = vmatpush1.msra.mxu0 0.0
  %208 = vmatprep.subr.mxu0 0.0
  %209 = vmatpush1.msra.mxu0 0.0
  %210 = vmatprep.mubr.f32.mxu0 0.0
  %211 = vmatmul.mubr.f32.gmra.mrb[0].mxu0 %v14
  %v212 = vpop.f32.mrb[0].mxu0
  %v213 = vadd.f32 %v119, %v212
  %v214 = vpop.f32.mrb[0].mxu0
  %v215 = vadd.f32 %v123, %v214
  %216 = vmatprep.mubr.f32.mxu0 0.0
  %217 = vmatmul.mubr.f32.gmra.mrb[0].mxu0 %v15
  %v218 = vpop.f32.mrb[0].mxu0
  %v219 = vadd.f32 %v119, %v218
  %v220 = vpop.f32.mrb[0].mxu0
  %v221 = vadd.f32 %v123, %v220
  %222 = vmatprep.mubr.f32.mxu0 0.0
  %223 = vmatmul.mubr.f32.gmra.mrb[0].mxu0 %v16
  %v224 = vpop.f32.mrb[0].mxu0
  %v225 = vadd.f32 %v119, %v224
  %v226 = vpop.f32.mrb[0].mxu0
  %v227 = vadd.f32 %v123, %v226
  %228 = vmatprep.mubr.f32.mxu0 0.0
  %229 = vmatmul.mubr.f32.gmra.mrb[0].mxu0 %v17
  %v230 = vpop.f32.mrb[0].mxu0
  %v231 = vadd.f32 %v119, %v230
  %v232 = vpop.f32.mrb[0].mxu0
  %v233 = vadd.f32 %v123, %v232
  %234 = vdwg.mxu0
  %235 = vmatprep.subr.mxu0 %v21
  %236 = vmatpush1.msra.mxu0 %v20
  %237 = vmatprep.subr.mxu0 %v27
  %238 = vmatpush1.msra.mxu0 %v26
  %239 = vmatprep.subr.mxu0 %v33
  %240 = vmatpush1.msra.mxu0 %v32
  %241 = vmatprep.subr.mxu0 %v39
  %242 = vmatpush1.msra.mxu0 %v38
  %243 = vmatprep.subr.mxu0 %v45
  %244 = vmatpush1.msra.mxu0 %v44
  %245 = vmatprep.subr.mxu0 %v51
  %246 = vmatpush1.msra.mxu0 %v50
  %247 = vmatprep.subr.mxu0 %v57
  %248 = vmatpush1.msra.mxu0 %v56
  %249 = vmatprep.subr.mxu0 %v63
  %250 = vmatpush1.msra.mxu0 %v62
  %251 = vmatprep.subr.mxu0 %v69
  %252 = vmatpush1.msra.mxu0 %v68
  %253 = vmatprep.subr.mxu0 %v75
  %254 = vmatpush1.msra.mxu0 %v74
  %255 = vmatprep.subr.mxu0 %v81
  %256 = vmatpush1.msra.mxu0 %v80
  %257 = vmatprep.subr.mxu0 %v87
  %258 = vmatpush1.msra.mxu0 %v86
  %259 = vmatprep.subr.mxu0 %v93
  %260 = vmatpush1.msra.mxu0 %v92
  %261 = vmatprep.subr.mxu0 %v99
  %262 = vmatpush1.msra.mxu0 %v98
  %263 = vmatprep.subr.mxu0 %v105
  %264 = vmatpush1.msra.mxu0 %v104
  %265 = vmatprep.subr.mxu0 %v111
  %266 = vmatpush1.msra.mxu0 %v110
  %267 = vmatprep.subr.mxu0 0.0
  %268 = vmatpush1.msra.mxu0 0.0
  %269 = vmatprep.subr.mxu0 0.0
  %270 = vmatpush1.msra.mxu0 0.0
  %271 = vmatprep.subr.mxu0 0.0
  %272 = vmatpush1.msra.mxu0 0.0
  %273 = vmatprep.subr.mxu0 0.0
  %274 = vmatpush1.msra.mxu0 0.0
  %275 = vmatprep.subr.mxu0 0.0
  %276 = vmatpush1.msra.mxu0 0.0
  %277 = vmatprep.subr.mxu0 0.0
  %278 = vmatpush1.msra.mxu0 0.0
  %279 = vmatprep.subr.mxu0 0.0
  %280 = vmatpush1.msra.mxu0 0.0
  %281 = vmatprep.subr.mxu0 0.0
  %282 = vmatpush1.msra.mxu0 0.0
  %283 = vmatprep.subr.mxu0 0.0
  %284 = vmatpush1.msra.mxu0 0.0
  %285 = vmatprep.subr.mxu0 0.0
  %286 = vmatpush1.msra.mxu0 0.0
  %287 = vmatprep.subr.mxu0 0.0
  %288 = vmatpush1.msra.mxu0 0.0
  %289 = vmatprep.subr.mxu0 0.0
  %290 = vmatpush1.msra.mxu0 0.0
  %291 = vmatprep.subr.mxu0 0.0
  %292 = vmatpush1.msra.mxu0 0.0
  %293 = vmatprep.subr.mxu0 0.0
  %294 = vmatpush1.msra.mxu0 0.0
  %295 = vmatprep.subr.mxu0 0.0
  %296 = vmatpush1.msra.mxu0 0.0
  %297 = vmatprep.subr.mxu0 0.0
  %298 = vmatpush1.msra.mxu0 0.0
  %299 = vmatprep.mubr.f32.mxu0 0.0
  %300 = vmatmul.mubr.f32.gmra.mrb[0].mxu0 %v14
  %v301 = vpop.f32.mrb[0].mxu0
  %v302 = vadd.f32 %v127, %v301
  %v303 = vpop.f32.mrb[0].mxu0
  %v304 = vadd.f32 %v131, %v303
  %305 = vmatprep.mubr.f32.mxu0 0.0
  %306 = vmatmul.mubr.f32.gmra.mrb[0].mxu0 %v15
  %v307 = vpop.f32.mrb[0].mxu0
  %v308 = vadd.f32 %v127, %v307
  %v309 = vpop.f32.mrb[0].mxu0
  %v310 = vadd.f32 %v131, %v309
  %311 = vmatprep.mubr.f32.mxu0 0.0
  %312 = vmatmul.mubr.f32.gmra.mrb[0].mxu0 %v16
  %v313 = vpop.f32.mrb[0].mxu0
  %v314 = vadd.f32 %v127, %v313
  %v315 = vpop.f32.mrb[0].mxu0
  %v316 = vadd.f32 %v131, %v315
  %317 = vmatprep.mubr.f32.mxu0 0.0
  %318 = vmatmul.mubr.f32.gmra.mrb[0].mxu0 %v17
  %v319 = vpop.f32.mrb[0].mxu0
  %v320 = vadd.f32 %v127, %v319
  %v321 = vpop.f32.mrb[0].mxu0
  %v322 = vadd.f32 %v131, %v321
  %323 = vdwg.mxu0
  %324 = vmatprep.subr.mxu0 %v23
  %325 = vmatpush1.msra.mxu0 %v22
  %326 = vmatprep.subr.mxu0 %v29
  %327 = vmatpush1.msra.mxu0 %v28
  %328 = vmatprep.subr.mxu0 %v35
  %329 = vmatpush1.msra.mxu0 %v34
  %330 = vmatprep.subr.mxu0 %v41
  %331 = vmatpush1.msra.mxu0 %v40
  %332 = vmatprep.subr.mxu0 %v47
  %333 = vmatpush1.msra.mxu0 %v46
  %334 = vmatprep.subr.mxu0 %v53
  %335 = vmatpush1.msra.mxu0 %v52
  %336 = vmatprep.subr.mxu0 %v59
  %337 = vmatpush1.msra.mxu0 %v58
  %338 = vmatprep.subr.mxu0 %v65
  %339 = vmatpush1.msra.mxu0 %v64
  %340 = vmatprep.subr.mxu0 %v71
  %341 = vmatpush1.msra.mxu0 %v70
  %342 = vmatprep.subr.mxu0 %v77
  %343 = vmatpush1.msra.mxu0 %v76
  %344 = vmatprep.subr.mxu0 %v83
  %345 = vmatpush1.msra.mxu0 %v82
  %346 = vmatprep.subr.mxu0 %v89
  %347 = vmatpush1.msra.mxu0 %v88
  %348 = vmatprep.subr.mxu0 %v95
  %349 = vmatpush1.msra.mxu0 %v94
  %350 = vmatprep.subr.mxu0 %v101
  %351 = vmatpush1.msra.mxu0 %v100
  %352 = vmatprep.subr.mxu0 %v107
  %353 = vmatpush1.msra.mxu0 %v106
  %354 = vmatprep.subr.mxu0 %v113
  %355 = vmatpush1.msra.mxu0 %v112
  %356 = vmatprep.subr.mxu0 0.0
  %357 = vmatpush1.msra.mxu0 0.0
  %358 = vmatprep.subr.mxu0 0.0
  %359 = vmatpush1.msra.mxu0 0.0
  %360 = vmatprep.subr.mxu0 0.0
  %361 = vmatpush1.msra.mxu0 0.0
  %362 = vmatprep.subr.mxu0 0.0
  %363 = vmatpush1.msra.mxu0 0.0
  %364 = vmatprep.subr.mxu0 0.0
  %365 = vmatpush1.msra.mxu0 0.0
  %366 = vmatprep.subr.mxu0 0.0
  %367 = vmatpush1.msra.mxu0 0.0
  %368 = vmatprep.subr.mxu0 0.0
  %369 = vmatpush1.msra.mxu0 0.0
  %370 = vmatprep.subr.mxu0 0.0
  %371 = vmatpush1.msra.mxu0 0.0
  %372 = vmatprep.subr.mxu0 0.0
  %373 = vmatpush1.msra.mxu0 0.0
  %374 = vmatprep.subr.mxu0 0.0
  %375 = vmatpush1.msra.mxu0 0.0
  %376 = vmatprep.subr.mxu0 0.0
  %377 = vmatpush1.msra.mxu0 0.0
  %378 = vmatprep.subr.mxu0 0.0
  %379 = vmatpush1.msra.mxu0 0.0
  %380 = vmatprep.subr.mxu0 0.0
  %381 = vmatpush1.msra.mxu0 0.0
  %382 = vmatprep.subr.mxu0 0.0
  %383 = vmatpush1.msra.mxu0 0.0
  %384 = vmatprep.subr.mxu0 0.0
  %385 = vmatpush1.msra.mxu0 0.0
  %386 = vmatprep.subr.mxu0 0.0
  %387 = vmatpush1.msra.mxu0 0.0
  %388 = vmatprep.mubr.f32.mxu0 0.0
  %389 = vmatmul.mubr.f32.gmra.mrb[0].mxu0 %v14
  %v390 = vpop.f32.mrb[0].mxu0
  %v391 = vadd.f32 %v135, %v390
  %v392 = vpop.f32.mrb[0].mxu0
  %v393 = vadd.f32 %v139, %v392
  %394 = vmatprep.mubr.f32.mxu0 0.0
  %395 = vmatmul.mubr.f32.gmra.mrb[0].mxu0 %v15
  %v396 = vpop.f32.mrb[0].mxu0
  %v397 = vadd.f32 %v135, %v396
  %v398 = vpop.f32.mrb[0].mxu0
  %v399 = vadd.f32 %v139, %v398
  %400 = vmatprep.mubr.f32.mxu0 0.0
  %401 = vmatmul.mubr.f32.gmra.mrb[0].mxu0 %v16
  %v402 = vpop.f32.mrb[0].mxu0
  %v403 = vadd.f32 %v135, %v402
  %v404 = vpop.f32.mrb[0].mxu0
  %v405 = vadd.f32 %v139, %v404
  %406 = vmatprep.mubr.f32.mxu0 0.0
  %407 = vmatmul.mubr.f32.gmra.mrb[0].mxu0 %v17
  %v408 = vpop.f32.mrb[0].mxu0
  %v409 = vadd.f32 %v135, %v408
  %v410 = vpop.f32.mrb[0].mxu0
  %v411 = vadd.f32 %v139, %v410
  %412 = vdwg.mxu0
  %413 = vst [vmem:[%s3] sm:$0xff] %v213
  %414 = vst [vmem:[%s3 + $0x8] sm:$0xff] %v215
  %415 = vst [vmem:[%s3 + $0x10] sm:$0xff] %v302
  %416 = vst [vmem:[%s3 + $0x18] sm:$0xff] %v304
  %417 = vst [vmem:[%s3 + $0x20] sm:$0xff] %v391
  %418 = vst [vmem:[%s3 + $0x28] sm:$0xff] %v393
  %419 = vst [vmem:[%s3 + $0x30] sm:$0xff] %v219
  %420 = vst [vmem:[%s3 + $0x38] sm:$0xff] %v221
  %421 = vst [vmem:[%s3 + $0x40] sm:$0xff] %v308
  %422 = vst [vmem:[%s3 + $0x48] sm:$0xff] %v310
  %423 = vst [vmem:[%s3 + $0x50] sm:$0xff] %v397
  %424 = vst [vmem:[%s3 + $0x58] sm:$0xff] %v399
  %425 = vst [vmem:[%s3 + $0x60] sm:$0xff] %v225
  %426 = vst [vmem:[%s3 + $0x68] sm:$0xff] %v227
  %427 = vst [vmem:[%s3 + $0x70] sm:$0xff] %v314
  %428 = vst [vmem:[%s3 + $0x78] sm:$0xff] %v316
  %429 = vst [vmem:[%s3 + $0x80] sm:$0xff] %v403
  %430 = vst [vmem:[%s3 + $0x88] sm:$0xff] %v405
  %431 = vst [vmem:[%s3 + $0x90] sm:$0xff] %v231
  %432 = vst [vmem:[%s3 + $0x98] sm:$0xff] %v233
  %433 = vst [vmem:[%s3 + $0xa0] sm:$0xff] %v320
  %434 = vst [vmem:[%s3 + $0xa8] sm:$0xff] %v322
  %435 = vst [vmem:[%s3 + $0xb0] sm:$0xff] %v409
  %436 = vst [vmem:[%s3 + $0xb8] sm:$0xff] %v411
  // Predicated region
  $region14: #{forward.11} parent=0 // pred_check
    _
  $region15: #{forward.11} parent=0 // pred_check_branch
    %438 = sbr.rel (0) target = $region17
  $region16: #{forward.11} parent=0 // pred_region
    _
  $region17: #{forward.11} parent=0 // pred_fallthru
    _
  // Predicated region
  $region18: #{forward.11} parent=0 // pred_check
    _
  $region19: #{forward.11} parent=0 // pred_check_branch
    %440 = sbr.rel (0) target = $region21
  $region20: #{forward.11} parent=0 // pred_region
    _
  $region21: #{forward.11} parent=0 // pred_fallthru
    _

// kernel: forward.12
$region0: #{forward.12}
  #allocation0 [shape = 'u32[]', space=smem, size = 0x4, offset = 0x4, fixed_abs, tag = 'smem constant byte address 0x4 - core index']
  #allocation1 [shape = 'u32[144,128]{1,0:T(1,128)}', space=vmem, size = 0x12000, scoped, tag = 'internal scratch']
  %s0 = inlined_call_operand.vmem [shape: f32[16,2,768], index: 0, kind: input, shape index: {}]
  %s1 = inlined_call_operand.vmem [shape: f32[2,128,384], index: 1, kind: input, shape index: {}]
  %s2 = inlined_call_operand.vmem [shape: f32[2,1,384], index: 2, kind: input, shape index: {}]
  %s3 = inlined_call_operand.vmem [shape: f32[16,2,256], index: 3, kind: output, shape index: {0}]
  %s4 = inlined_call_operand.hbm [shape: f32[2,2,128], index: 4, kind: output, shape index: {1}]
  %5 = xla_tuple %s3, %s4
  %s6 = sld [smem:[#allocation0]]
  $region138: #{forward.12} parent=0
    _
  %s8 = ssub.s32 1, %s6
  %s9 = scalar_select 0, %s8, %s6
  $region1: #{forward.12} parent=0
    #allocation2 [shape = 'u8[98304]{0}', space=vmem, size = 0x18000, scoped, tag = 'input window, operand 0']
    #allocation3 [shape = 'u8[32768]{0}', space=vmem, size = 0x8000, scoped, tag = 'output window, operand 0']
    #allocation4 [shape = 'u8[2048]{0}', space=vmem, size = 0x800, scoped, tag = 'output window, operand 1']
    #allocation5 [shape = 's32[2]{0}', space=sflag, size = 0x8, scoped, tag = 'scoped memory for forward.12']
    %10 = vsyncpa [#allocation5], 0
    %s11 = scalar_lea.sflag [#allocation5], 1
    %12 = vsyncpa %s11, 0
    loop: start=0, step=1, limit=4
    $region2: #{forward.12} parent=1 // loop_pre_header
      _
    $region3: #{forward.12} parent=1 // loop_header
      %s14 = sphi 0, %s18
      %p15 = scmp.ge.s32.totalorder %s14, 4
      %s24 = sphi 0, %s26
      %s27 = sphi 0, %s24
      %s28 = sphi 0, %s27
      %s44 = sphi 0, %s28
      %s50 = sphi 0, %s52
      %s53 = sphi 0, %s50
      %s54 = sphi 0, %s53
      %s70 = sphi 0, %s54
      %s76 = sphi 0, %s78
      %s79 = sphi 0, %s76
      %s80 = sphi 0, %s79
      %s96 = sphi 0, %s80
      %s102 = sphi 0, %s104
      %s105 = sphi 0, %s102
      %s106 = sphi 0, %s105
      %s122 = sphi 0, %s106
      %s128 = sphi 0, %s130
      %s131 = sphi 0, %s128
      %s132 = sphi 0, %s131
      %s148 = sphi 0, %s132
    $region4: #{forward.12} parent=1 // loop_header_branch
      %17 = sbr.rel (%p15) target = $region8
    $region5: #{forward.12} parent=1 // loop_body
      %s19 = ssub.s32 %s14, 1
      %s20 = ssub.s32 %s14, 2
      %s21 = sadd.s32 %s14, 1
      %s22 = ssub.s32 %s14, %s21
      %p23 = scmp.eq.s32.totalorder %s22, 0
      %s25 = sadd.s32 %s24, 1
      %s26 = scalar_select %p23, %s24, %s25
      %p29 = pneg %p23
      %p30 = scmp.eq.s32.totalorder %s14, 1
      %p31 = por %p29, %p30
      %p32 = scmp.ne.s32.totalorder %s24, %s27
      %p33 = scmp.eq.s32.totalorder %s14, 0
      %p34 = por %p32, %p33
      %p35 = scmp.ne.s32.totalorder %s24, %s27
      %p36 = scmp.eq.s32.totalorder %s19, 1
      %p37 = por %p35, %p36
      %p38 = scmp.ne.s32.totalorder %s27, %s28
      %p39 = scmp.eq.s32.totalorder %s19, 0
      %p40 = por %p38, %p39
      %p41 = scmp.ne.s32.totalorder %s27, %s28
      %p42 = scmp.eq.s32.totalorder %s20, 1
      %p43 = por %p41, %p42
      %p45 = scmp.ne.s32.totalorder %s28, %s44
      %p46 = scmp.eq.s32.totalorder %s20, 0
      %p47 = por %p45, %p46
      %s48 = ssub.s32 %s14, %s21
      %p49 = scmp.eq.s32.totalorder %s48, 0
      %s51 = sadd.s32 %s50, 1
      %s52 = scalar_select %p49, %s50, %s51
      %p55 = pneg %p49
      %p56 = scmp.eq.s32.totalorder %s14, 1
      %p57 = por %p55, %p56
      %p58 = scmp.ne.s32.totalorder %s50, %s53
      %p59 = scmp.eq.s32.totalorder %s14, 0
      %p60 = por %p58, %p59
      %p61 = scmp.ne.s32.totalorder %s50, %s53
      %p62 = scmp.eq.s32.totalorder %s19, 1
      %p63 = por %p61, %p62
      %p64 = scmp.ne.s32.totalorder %s53, %s54
      %p65 = scmp.eq.s32.totalorder %s19, 0
      %p66 = por %p64, %p65
      %p67 = scmp.ne.s32.totalorder %s53, %s54
      %p68 = scmp.eq.s32.totalorder %s20, 1
      %p69 = por %p67, %p68
      %p71 = scmp.ne.s32.totalorder %s54, %s70
      %p72 = scmp.eq.s32.totalorder %s20, 0
      %p73 = por %p71, %p72
      %s74 = ssub.s32 %s14, %s21
      %p75 = scmp.eq.s32.totalorder %s74, 0
      %s77 = sadd.s32 %s76, 1
      %s78 = scalar_select %p75, %s76, %s77
      %p81 = pneg %p75
      %p82 = scmp.eq.s32.totalorder %s14, 1
      %p83 = por %p81, %p82
      %p84 = scmp.ne.s32.totalorder %s76, %s79
      %p85 = scmp.eq.s32.totalorder %s14, 0
      %p86 = por %p84, %p85
      %p87 = scmp.ne.s32.totalorder %s76, %s79
      %p88 = scmp.eq.s32.totalorder %s19, 1
      %p89 = por %p87, %p88
      %p90 = scmp.ne.s32.totalorder %s79, %s80
      %p91 = scmp.eq.s32.totalorder %s19, 0
      %p92 = por %p90, %p91
      %p93 = scmp.ne.s32.totalorder %s79, %s80
      %p94 = scmp.eq.s32.totalorder %s20, 1
      %p95 = por %p93, %p94
      %p97 = scmp.ne.s32.totalorder %s80, %s96
      %p98 = scmp.eq.s32.totalorder %s20, 0
      %p99 = por %p97, %p98
      %s100 = ssub.s32 %s14, %s21
      %p101 = scmp.eq.s32.totalorder %s100, 0
      %s103 = sadd.s32 %s102, 1
      %s104 = scalar_select %p101, %s102, %s103
      %p107 = pneg %p101
      %p108 = scmp.eq.s32.totalorder %s14, 1
      %p109 = por %p107, %p108
      %p110 = scmp.ne.s32.totalorder %s102, %s105
      %p111 = scmp.eq.s32.totalorder %s14, 0
      %p112 = por %p110, %p111
      %p113 = scmp.ne.s32.totalorder %s102, %s105
      %p114 = scmp.eq.s32.totalorder %s19, 1
      %p115 = por %p113, %p114
      %p116 = scmp.ne.s32.totalorder %s105, %s106
      %p117 = scmp.eq.s32.totalorder %s19, 0
      %p118 = por %p116, %p117
      %p119 = scmp.ne.s32.totalorder %s105, %s106
      %p120 = scmp.eq.s32.totalorder %s20, 1
      %p121 = por %p119, %p120
      %p123 = scmp.ne.s32.totalorder %s106, %s122
      %p124 = scmp.eq.s32.totalorder %s20, 0
      %p125 = por %p123, %p124
      %s126 = ssub.s32 %s14, %s21
      %p127 = scmp.eq.s32.totalorder %s126, 0
      %s129 = sadd.s32 %s128, 1
      %s130 = scalar_select %p127, %s128, %s129
      %p133 = pneg %p127
      %p134 = scmp.eq.s32.totalorder %s14, 1
      %p135 = por %p133, %p134
      %p136 = scmp.ne.s32.totalorder %s128, %s131
      %p137 = scmp.eq.s32.totalorder %s14, 0
      %p138 = por %p136, %p137
      %p139 = scmp.ne.s32.totalorder %s128, %s131
      %p140 = scmp.eq.s32.totalorder %s19, 1
      %p141 = por %p139, %p140
      %p142 = scmp.ne.s32.totalorder %s131, %s132
      %p143 = scmp.eq.s32.totalorder %s19, 0
      %p144 = por %p142, %p143
      %p145 = scmp.ne.s32.totalorder %s131, %s132
      %p146 = scmp.eq.s32.totalorder %s20, 1
      %p147 = por %p145, %p146
      %p149 = scmp.ne.s32.totalorder %s132, %s148
      %p150 = scmp.eq.s32.totalorder %s20, 0
      %p151 = por %p149, %p150
      %p152 = scmp.le.s32.totalorder 1, %s14
      %p153 = scmp.lt.s32.totalorder %s14, 3
      %p154 = pnand %p152, %p153
      %p155 = pneg %p154
      // Predicated region
      $region9: #{forward.12} parent=5 // pred_check
        _
      $region10: #{forward.12} parent=5 // pred_check_branch
        %157 = sbr.rel (%p154) target = $region12
      $region11: #{forward.12} parent=5 // pred_region
        %s158 = ssub.s32 %s14, 1
      $region12: #{forward.12} parent=5 // pred_fallthru
        _
      %p159 = scmp.lt.s32.totalorder %s14, 2
      // Predicated region
      $region13: #{forward.12} parent=5 // pred_check
        %p160 = pneg %p159
      $region14: #{forward.12} parent=5 // pred_check_branch
        %162 = sbr.rel (%p160) target = $region16
      $region15: #{forward.12} parent=5 // pred_region
        // Predicated region
        $region17: #{forward.12} parent=15 // pred_check
          %p163 = pneg %p34
        $region18: #{forward.12} parent=15 // pred_check_branch
          %165 = sbr.rel (%p163) target = $region20
        $region19: #{forward.12} parent=15 // pred_region
          %s166 = sand.u32 %s24, 1
          %s167 = sand.u32 %s24, 1
          %s168 = smul.addr %s167, 96
          %s169 = scalar_lea.vmem [#allocation2], %s168
          %s170 = smul.u32 3, %s14
          %s171 = smul.addr %s170, 2
          %s172 = scalar_lea.vmem %s0, %s171
          // Predicated region
          $region21: #{forward.12} parent=19 // pred_check
            _
          $region22: #{forward.12} parent=19 // pred_check_branch
            %174 = sbr.rel (0) target = $region24
          $region23: #{forward.12} parent=19 // pred_region
            // Predicated region
            $region25: #{forward.12} parent=23 // pred_check
              _
            $region26: #{forward.12} parent=23 // pred_check_branch
              %176 = sbr.rel target = $region28
            $region27: #{forward.12} parent=23 // pred_region
              // Predicated region
              $region40: #{forward.12} parent=27 // pred_check
                _
              $region41: #{forward.12} parent=27 // pred_check_branch
                %221 = sbr.rel (0) target = $region43
              $region42: #{forward.12} parent=27 // pred_region
                loop: start=0, step=1, limit=1
                $region44: #{forward.12} parent=42 // loop_pre_header
                  _
                $region45: #{forward.12} parent=42 // loop_header
                  %s223 = sphi 0, %s227
                  %p224 = scmp.ge.s32.totalorder %s223, 1
                  %s228 = sphi %s172, %s172
                  %s229 = sphi %s169, %s169
                $region46: #{forward.12} parent=42 // loop_header_branch
                  %226 = sbr.rel (%p224) target = $region50
                $region47: #{forward.12} parent=42 // loop_body
                  _
                $region48: #{forward.12} parent=42 // loop_footer
                  %s227 = sadd.s32 1, %s223
                $region49: #{forward.12} parent=42 // loop_footer_branch
                  %222 = sbr.rel target = $region45
                $region50: #{forward.12} parent=42 // loop_exit
                  _
                loop: start=0, step=1, limit=1
                $region51: #{forward.12} parent=42 // loop_pre_header
                  _
                $region52: #{forward.12} parent=42 // loop_header
                  %s232 = sphi 0, %s236
                  %p233 = scmp.ge.s32.totalorder %s232, 1
                  %s237 = sphi %s172, %s172
                  %s238 = sphi %s169, %s169
                $region53: #{forward.12} parent=42 // loop_header_branch
                  %235 = sbr.rel (%p233) target = $region57
                $region54: #{forward.12} parent=42 // loop_body
                  %v239 = vld [vmem:[%s237] sm:$0x3f]
                  %240 = vst [vmem:[%s238] sm:$0x3f] %v239
                  %v241 = vld [vmem:[%s237 + $0xc] sm:$0x3f]
                  %242 = vst [vmem:[%s238 + $0x6] sm:$0x3f] %v241
                  %v243 = vld [vmem:[%s237 + $0x18] sm:$0x3f]
                  %244 = vst [vmem:[%s238 + $0xc] sm:$0x3f] %v243
                  %v245 = vld [vmem:[%s237 + $0x24] sm:$0x3f]
                  %246 = vst [vmem:[%s238 + $0x12] sm:$0x3f] %v245
                  %v247 = vld [vmem:[%s237 + $0x30] sm:$0x3f]
                  %248 = vst [vmem:[%s238 + $0x18] sm:$0x3f] %v247
                  %v249 = vld [vmem:[%s237 + $0x3c] sm:$0x3f]
                  %250 = vst [vmem:[%s238 + $0x1e] sm:$0x3f] %v249
                  %v251 = vld [vmem:[%s237 + $0x48] sm:$0x3f]
                  %252 = vst [vmem:[%s238 + $0x24] sm:$0x3f] %v251
                  %v253 = vld [vmem:[%s237 + $0x54] sm:$0x3f]
                  %254 = vst [vmem:[%s238 + $0x2a] sm:$0x3f] %v253
                  %v255 = vld [vmem:[%s237 + $0x60] sm:$0x3f]
                  %256 = vst [vmem:[%s238 + $0x30] sm:$0x3f] %v255
                  %v257 = vld [vmem:[%s237 + $0x6c] sm:$0x3f]
                  %258 = vst [vmem:[%s238 + $0x36] sm:$0x3f] %v257
                  %v259 = vld [vmem:[%s237 + $0x78] sm:$0x3f]
                  %260 = vst [vmem:[%s238 + $0x3c] sm:$0x3f] %v259
                  %v261 = vld [vmem:[%s237 + $0x84] sm:$0x3f]
                  %262 = vst [vmem:[%s238 + $0x42] sm:$0x3f] %v261
                  %v263 = vld [vmem:[%s237 + $0x90] sm:$0x3f]
                  %264 = vst [vmem:[%s238 + $0x48] sm:$0x3f] %v263
                  %v265 = vld [vmem:[%s237 + $0x9c] sm:$0x3f]
                  %266 = vst [vmem:[%s238 + $0x4e] sm:$0x3f] %v265
                  %v267 = vld [vmem:[%s237 + $0xa8] sm:$0x3f]
                  %268 = vst [vmem:[%s238 + $0x54] sm:$0x3f] %v267
                  %v269 = vld [vmem:[%s237 + $0xb4] sm:$0x3f]
                  %270 = vst [vmem:[%s238 + $0x5a] sm:$0x3f] %v269
                $region55: #{forward.12} parent=42 // loop_footer
                  %s236 = sadd.s32 1, %s232
                $region56: #{forward.12} parent=42 // loop_footer_branch
                  %231 = sbr.rel target = $region52
                $region57: #{forward.12} parent=42 // loop_exit
                  _
              $region43: #{forward.12} parent=27 // pred_fallthru
                _
            $region28: #{forward.12} parent=23 // pred_fallthru
              _
            // Predicated region
            $region29: #{forward.12} parent=23 // pred_check
              _
            $region30: #{forward.12} parent=23 // pred_check_branch
              %178 = sbr.rel (0) target = $region32
            $region31: #{forward.12} parent=23 // pred_region
              loop: start=0, step=1, limit=1
              $region33: #{forward.12} parent=31 // loop_pre_header
                _
              $region34: #{forward.12} parent=31 // loop_header
                %s181 = sphi 0, %s185
                %p182 = scmp.ge.s32.totalorder %s181, 1
                %s186 = sphi %s172, %s172
                %s187 = sphi %s169, %s169
              $region35: #{forward.12} parent=31 // loop_header_branch
                %184 = sbr.rel (%p182) target = $region39
              $region36: #{forward.12} parent=31 // loop_body
                %v188 = vld [vmem:[%s186] sm:$0x3f]
                %189 = vst [vmem:[%s187] sm:$0x3f] %v188
                %v190 = vld [vmem:[%s186 + $0xc] sm:$0x3f]
                %191 = vst [vmem:[%s187 + $0x6] sm:$0x3f] %v190
                %v192 = vld [vmem:[%s186 + $0x18] sm:$0x3f]
                %193 = vst [vmem:[%s187 + $0xc] sm:$0x3f] %v192
                %v194 = vld [vmem:[%s186 + $0x24] sm:$0x3f]
                %195 = vst [vmem:[%s187 + $0x12] sm:$0x3f] %v194
                %v196 = vld [vmem:[%s186 + $0x30] sm:$0x3f]
                %197 = vst [vmem:[%s187 + $0x18] sm:$0x3f] %v196
                %v198 = vld [vmem:[%s186 + $0x3c] sm:$0x3f]
                %199 = vst [vmem:[%s187 + $0x1e] sm:$0x3f] %v198
                %v200 = vld [vmem:[%s186 + $0x48] sm:$0x3f]
                %201 = vst [vmem:[%s187 + $0x24] sm:$0x3f] %v200
                %v202 = vld [vmem:[%s186 + $0x54] sm:$0x3f]
                %203 = vst [vmem:[%s187 + $0x2a] sm:$0x3f] %v202
                %v204 = vld [vmem:[%s186 + $0x60] sm:$0x3f]
                %205 = vst [vmem:[%s187 + $0x30] sm:$0x3f] %v204
                %v206 = vld [vmem:[%s186 + $0x6c] sm:$0x3f]
                %207 = vst [vmem:[%s187 + $0x36] sm:$0x3f] %v206
                %v208 = vld [vmem:[%s186 + $0x78] sm:$0x3f]
                %209 = vst [vmem:[%s187 + $0x3c] sm:$0x3f] %v208
                %v210 = vld [vmem:[%s186 + $0x84] sm:$0x3f]
                %211 = vst [vmem:[%s187 + $0x42] sm:$0x3f] %v210
                %v212 = vld [vmem:[%s186 + $0x90] sm:$0x3f]
                %213 = vst [vmem:[%s187 + $0x48] sm:$0x3f] %v212
                %v214 = vld [vmem:[%s186 + $0x9c] sm:$0x3f]
                %215 = vst [vmem:[%s187 + $0x4e] sm:$0x3f] %v214
                %v216 = vld [vmem:[%s186 + $0xa8] sm:$0x3f]
                %217 = vst [vmem:[%s187 + $0x54] sm:$0x3f] %v216
                %v218 = vld [vmem:[%s186 + $0xb4] sm:$0x3f]
                %219 = vst [vmem:[%s187 + $0x5a] sm:$0x3f] %v218
              $region37: #{forward.12} parent=31 // loop_footer
                %s185 = sadd.s32 1, %s181
              $region38: #{forward.12} parent=31 // loop_footer_branch
                %180 = sbr.rel target = $region34
              $region39: #{forward.12} parent=31 // loop_exit
                _
            $region32: #{forward.12} parent=23 // pred_fallthru
              _
          $region24: #{forward.12} parent=19 // pred_fallthru
            _
          %271 = vnop
        $region20: #{forward.12} parent=15 // pred_fallthru
          _
        // Predicated region
        $region58: #{forward.12} parent=15 // pred_check
          %p272 = pneg %p60
        $region59: #{forward.12} parent=15 // pred_check_branch
          %274 = sbr.rel (%p272) target = $region61
        $region60: #{forward.12} parent=15 // pred_region
          %p275 = scmp.lt.s32.totalorder %s14, 1
          %s276 = scalar_select %p275, %s14, 1
          %s277 = smul.addr %s276, 48
          %s278 = smul.addr %s277, 8
          %s279 = scalar_lea.vmem %s1, %s278
        $region61: #{forward.12} parent=15 // pred_fallthru
          _
        // Predicated region
        $region62: #{forward.12} parent=15 // pred_check
          %p280 = pneg %p86
        $region63: #{forward.12} parent=15 // pred_check_branch
          %282 = sbr.rel (%p280) target = $region65
        $region64: #{forward.12} parent=15 // pred_region
          %p283 = scmp.lt.s32.totalorder %s14, 1
          %s284 = scalar_select %p283, %s14, 1
          %s285 = smul.addr %s284, 3
          %s286 = scalar_lea.vmem %s2, %s285
        $region65: #{forward.12} parent=15 // pred_fallthru
          _
      $region16: #{forward.12} parent=5 // pred_fallthru
        _
      %p287 = scmp.le.s32.totalorder 1, %s14
      %p288 = scmp.lt.s32.totalorder %s14, 3
      %p289 = pnand %p287, %p288
      %p290 = pneg %p289
      // Predicated region
      $region66: #{forward.12} parent=5 // pred_check
        _
      $region67: #{forward.12} parent=5 // pred_check_branch
        %292 = sbr.rel (%p289) target = $region69
      $region68: #{forward.12} parent=5 // pred_region
        %s293 = ssub.s32 %s14, 1
        %s294 = sand.u32 %s27, 1
        %s295 = sand.u32 %s27, 1
        %s296 = smul.addr %s295, 96
        %s297 = scalar_lea.vmem [#allocation2], %s296
        // Predicated region
        $region70: #{forward.12} parent=68 // pred_check
          %p298 = pneg %p40
        $region71: #{forward.12} parent=68 // pred_check_branch
          %300 = sbr.rel (%p298) target = $region73
        $region72: #{forward.12} parent=68 // pred_region
          _
        $region73: #{forward.12} parent=68 // pred_fallthru
          _
        %s301 = sand.u32 %s27, 1
        %s302 = sand.u32 %s27, 1
        %s303 = smul.addr %s302, 96
        %s304 = scalar_lea.vmem [#allocation2], %s303
        %p305 = pneg %p40
        %p306 = pneg %p37
        %p307 = scmp.lt.s32.totalorder %s19, 1
        %s308 = scalar_select %p307, %s19, 1
        %s309 = smul.addr %s308, 48
        %s310 = smul.addr %s309, 8
        %s311 = scalar_lea.vmem %s1, %s310
        %p312 = pneg %p66
        %p313 = pneg %p63
        %p314 = scmp.lt.s32.totalorder %s19, 1
        %s315 = scalar_select %p314, %s19, 1
        %s316 = smul.addr %s315, 3
        %s317 = scalar_lea.vmem %s2, %s316
        %p318 = pneg %p92
        %p319 = pneg %p89
        %p320 = pneg %p118
        %p321 = pneg %p115
        %s322 = sand.u32 %s105, 1
        %s323 = sand.u32 %s105, 1
        %s324 = smul.addr %s323, 32
        %s325 = scalar_lea.vmem [#allocation3], %s324
        %p326 = pneg %p144
        %p327 = pneg %p141
        %s328 = sand.u32 %s131, 1
        %s329 = scalar_lea.sflag [#allocation5], %s328
        %s330 = sand.u32 %s131, 1
        %s331 = smul.addr %s330, 2
        %s332 = scalar_lea.vmem [#allocation4], %s331
        %s333 = smul.u32 3, %s19
        %p334 = scmp.lt.s32.totalorder %s19, 1
        %s335 = scalar_select %p334, %s19, 1
        %s336 = smul.addr %s335, 48
        %s337 = smul.addr %s336, 8
        %s338 = scalar_lea.vmem %s1, %s337
        %p339 = scmp.lt.s32.totalorder %s19, 1
        %s340 = scalar_select %p339, %s19, 1
        %s341 = smul.addr %s340, 3
        %s342 = scalar_lea.vmem %s2, %s341
        loop: start=0, step=1, limit=16
        $region74: #{forward.12} parent=68 // loop_pre_header
          _
        $region75: #{forward.12} parent=68 // loop_header
          %s344 = sphi 0, %s348
          %p345 = scmp.ge.s32.totalorder %s344, 16
          %v349 = vphi 0.0, %v588
        $region76: #{forward.12} parent=68 // loop_header_branch
          %347 = sbr.rel (%p345) target = $region80
        $region77: #{forward.12} parent=68 // loop_body
          %p350 = scmp.eq.s32.totalorder %s19, 0
          %s351 = ssub.s32 15, %s344
          %s352 = scalar_select %p350, %s344, %s351
          %s353 = smul.u32 %s352, 3
          %s354 = smul.addr %s353, 2
          %s355 = scalar_lea.vmem %s297, %s354 [#allocation2]
          %v356 = vld [vmem:[%s355] sm:$0x3f]
          %v357 = vld [vmem:[%s338] sm:$0xff]
          %v358 = vld [vmem:[%s338 + $0x8] sm:$0xff]
          %v359 = vld [vmem:[%s338 + $0x10] sm:$0xff]
          %v360 = vld [vmem:[%s338 + $0x18] sm:$0xff]
          %v361 = vld [vmem:[%s338 + $0x20] sm:$0xff]
          %v362 = vld [vmem:[%s338 + $0x28] sm:$0xff]
          %v363 = vld [vmem:[%s338 + $0x30] sm:$0xff]
          %v364 = vld [vmem:[%s338 + $0x38] sm:$0xff]
          %v365 = vld [vmem:[%s338 + $0x40] sm:$0xff]
          %v366 = vld [vmem:[%s338 + $0x48] sm:$0xff]
          %v367 = vld [vmem:[%s338 + $0x50] sm:$0xff]
          %v368 = vld [vmem:[%s338 + $0x58] sm:$0xff]
          %v369 = vld [vmem:[%s338 + $0x60] sm:$0xff]
          %v370 = vld [vmem:[%s338 + $0x68] sm:$0xff]
          %v371 = vld [vmem:[%s338 + $0x70] sm:$0xff]
          %v372 = vld [vmem:[%s338 + $0x78] sm:$0xff]
          %v373 = vld [vmem:[%s338 + $0x80] sm:$0xff]
          %v374 = vld [vmem:[%s338 + $0x88] sm:$0xff]
          %v375 = vld [vmem:[%s338 + $0x90] sm:$0xff]
          %v376 = vld [vmem:[%s338 + $0x98] sm:$0xff]
          %v377 = vld [vmem:[%s338 + $0xa0] sm:$0xff]
          %v378 = vld [vmem:[%s338 + $0xa8] sm:$0xff]
          %v379 = vld [vmem:[%s338 + $0xb0] sm:$0xff]
          %v380 = vld [vmem:[%s338 + $0xb8] sm:$0xff]
          %v381 = vld [vmem:[%s338 + $0xc0] sm:$0xff]
          %v382 = vld [vmem:[%s338 + $0xc8] sm:$0xff]
          %v383 = vld [vmem:[%s338 + $0xd0] sm:$0xff]
          %v384 = vld [vmem:[%s338 + $0xd8] sm:$0xff]
          %v385 = vld [vmem:[%s338 + $0xe0] sm:$0xff]
          %v386 = vld [vmem:[%s338 + $0xe8] sm:$0xff]
          %v387 = vld [vmem:[%s338 + $0xf0] sm:$0xff]
          %v388 = vld [vmem:[%s338 + $0xf8] sm:$0xff]
          %v389 = vld [vmem:[%s338 + $0x100] sm:$0xff]
          %v390 = vld [vmem:[%s338 + $0x108] sm:$0xff]
          %v391 = vld [vmem:[%s338 + $0x110] sm:$0xff]
          %v392 = vld [vmem:[%s338 + $0x118] sm:$0xff]
          %v393 = vld [vmem:[%s338 + $0x120] sm:$0xff]
          %v394 = vld [vmem:[%s338 + $0x128] sm:$0xff]
          %v395 = vld [vmem:[%s338 + $0x130] sm:$0xff]
          %v396 = vld [vmem:[%s338 + $0x138] sm:$0xff]
          %v397 = vld [vmem:[%s338 + $0x140] sm:$0xff]
          %v398 = vld [vmem:[%s338 + $0x148] sm:$0xff]
          %v399 = vld [vmem:[%s338 + $0x150] sm:$0xff]
          %v400 = vld [vmem:[%s338 + $0x158] sm:$0xff]
          %v401 = vld [vmem:[%s338 + $0x160] sm:$0xff]
          %v402 = vld [vmem:[%s338 + $0x168] sm:$0xff]
          %v403 = vld [vmem:[%s338 + $0x170] sm:$0xff]
          %v404 = vld [vmem:[%s338 + $0x178] sm:$0xff]
          %v405 = vld [vmem:[%s342] sm:$0x7]
          %v407 = vlaneseq
          %v408 = vshrl.u32 %v407, 7
          %v409 = vsub.s32 0, %v408
          %v410 = vrot.slane %v405, %v409
          %v411 = vlaneseq
          %v412 = vshrl.u32 %v411, 7
          %v413 = vsub.s32 1, %v412
          %v414 = vrot.slane %v405, %v413
          %v415 = vlaneseq
          %v416 = vshrl.u32 %v415, 7
          %v417 = vsub.s32 2, %v416
          %v418 = vrot.slane %v405, %v417
          %422 = vmatprep.subr.mxu0 %v358
          %423 = vmatpush1.msra.mxu0 %v357
          %424 = vmatprep.subr.mxu0 %v361
          %425 = vmatpush1.msra.mxu0 %v360
          %426 = vmatprep.subr.mxu0 %v364
          %427 = vmatpush1.msra.mxu0 %v363
          %428 = vmatprep.subr.mxu0 %v367
          %429 = vmatpush1.msra.mxu0 %v366
          %430 = vmatprep.subr.mxu0 %v370
          %431 = vmatpush1.msra.mxu0 %v369
          %432 = vmatprep.subr.mxu0 %v373
          %433 = vmatpush1.msra.mxu0 %v372
          %434 = vmatprep.subr.mxu0 %v376
          %435 = vmatpush1.msra.mxu0 %v375
          %436 = vmatprep.subr.mxu0 %v379
          %437 = vmatpush1.msra.mxu0 %v378
          %438 = vmatprep.subr.mxu0 %v382
          %439 = vmatpush1.msra.mxu0 %v381
          %440 = vmatprep.subr.mxu0 %v385
          %441 = vmatpush1.msra.mxu0 %v384
          %442 = vmatprep.subr.mxu0 %v388
          %443 = vmatpush1.msra.mxu0 %v387
          %444 = vmatprep.subr.mxu0 %v391
          %445 = vmatpush1.msra.mxu0 %v390
          %446 = vmatprep.subr.mxu0 %v394
          %447 = vmatpush1.msra.mxu0 %v393
          %448 = vmatprep.subr.mxu0 %v397
          %449 = vmatpush1.msra.mxu0 %v396
          %450 = vmatprep.subr.mxu0 %v400
          %451 = vmatpush1.msra.mxu0 %v399
          %452 = vmatprep.subr.mxu0 %v403
          %453 = vmatpush1.msra.mxu0 %v402
          %454 = vmatprep.subr.mxu0 0.0
          %455 = vmatpush1.msra.mxu0 0.0
          %456 = vmatprep.subr.mxu0 0.0
          %457 = vmatpush1.msra.mxu0 0.0
          %458 = vmatprep.subr.mxu0 0.0
          %459 = vmatpush1.msra.mxu0 0.0
          %460 = vmatprep.subr.mxu0 0.0
          %461 = vmatpush1.msra.mxu0 0.0
          %462 = vmatprep.subr.mxu0 0.0
          %463 = vmatpush1.msra.mxu0 0.0
          %464 = vmatprep.subr.mxu0 0.0
          %465 = vmatpush1.msra.mxu0 0.0
          %466 = vmatprep.subr.mxu0 0.0
          %467 = vmatpush1.msra.mxu0 0.0
          %468 = vmatprep.subr.mxu0 0.0
          %469 = vmatpush1.msra.mxu0 0.0
          %470 = vmatprep.subr.mxu0 0.0
          %471 = vmatpush1.msra.mxu0 0.0
          %472 = vmatprep.subr.mxu0 0.0
          %473 = vmatpush1.msra.mxu0 0.0
          %474 = vmatprep.subr.mxu0 0.0
          %475 = vmatpush1.msra.mxu0 0.0
          %476 = vmatprep.subr.mxu0 0.0
          %477 = vmatpush1.msra.mxu0 0.0
          %478 = vmatprep.subr.mxu0 0.0
          %479 = vmatpush1.msra.mxu0 0.0
          %480 = vmatprep.subr.mxu0 0.0
          %481 = vmatpush1.msra.mxu0 0.0
          %482 = vmatprep.subr.mxu0 0.0
          %483 = vmatpush1.msra.mxu0 0.0
          %484 = vmatprep.subr.mxu0 0.0
          %485 = vmatpush1.msra.mxu0 0.0
          %486 = vmatprep.mubr.f32.mxu0 0.0
          %487 = vmatmul.mubr.f32.gmra.mrb[0].mxu0 %v349
          %v488 = vpop.f32.mrb[0].mxu0
          %v489 = vadd.f32 %v410, %v488
          %v490 = vpop.f32.mrb[0].mxu0
          %v491 = vadd.f32 %v414, %v490
          %492 = vdwg.mxu0
          %493 = vmatprep.subr.mxu0 0.0
          %494 = vmatpush1.msra.mxu0 %v359
          %495 = vmatprep.subr.mxu0 0.0
          %496 = vmatpush1.msra.mxu0 %v362
          %497 = vmatprep.subr.mxu0 0.0
          %498 = vmatpush1.msra.mxu0 %v365
          %499 = vmatprep.subr.mxu0 0.0
          %500 = vmatpush1.msra.mxu0 %v368
          %501 = vmatprep.subr.mxu0 0.0
          %502 = vmatpush1.msra.mxu0 %v371
          %503 = vmatprep.subr.mxu0 0.0
          %504 = vmatpush1.msra.mxu0 %v374
          %505 = vmatprep.subr.mxu0 0.0
          %506 = vmatpush1.msra.mxu0 %v377
          %507 = vmatprep.subr.mxu0 0.0
          %508 = vmatpush1.msra.mxu0 %v380
          %509 = vmatprep.subr.mxu0 0.0
          %510 = vmatpush1.msra.mxu0 %v383
          %511 = vmatprep.subr.mxu0 0.0
          %512 = vmatpush1.msra.mxu0 %v386
          %513 = vmatprep.subr.mxu0 0.0
          %514 = vmatpush1.msra.mxu0 %v389
          %515 = vmatprep.subr.mxu0 0.0
          %516 = vmatpush1.msra.mxu0 %v392
          %517 = vmatprep.subr.mxu0 0.0
          %518 = vmatpush1.msra.mxu0 %v395
          %519 = vmatprep.subr.mxu0 0.0
          %520 = vmatpush1.msra.mxu0 %v398
          %521 = vmatprep.subr.mxu0 0.0
          %522 = vmatpush1.msra.mxu0 %v401
          %523 = vmatprep.subr.mxu0 0.0
          %524 = vmatpush1.msra.mxu0 %v404
          %525 = vmatprep.subr.mxu0 0.0
          %526 = vmatpush1.msra.mxu0 0.0
          %527 = vmatprep.subr.mxu0 0.0
          %528 = vmatpush1.msra.mxu0 0.0
          %529 = vmatprep.subr.mxu0 0.0
          %530 = vmatpush1.msra.mxu0 0.0
          %531 = vmatprep.subr.mxu0 0.0
          %532 = vmatpush1.msra.mxu0 0.0
          %533 = vmatprep.subr.mxu0 0.0
          %534 = vmatpush1.msra.mxu0 0.0
          %535 = vmatprep.subr.mxu0 0.0
          %536 = vmatpush1.msra.mxu0 0.0
          %537 = vmatprep.subr.mxu0 0.0
          %538 = vmatpush1.msra.mxu0 0.0
          %539 = vmatprep.subr.mxu0 0.0
          %540 = vmatpush1.msra.mxu0 0.0
          %541 = vmatprep.subr.mxu0 0.0
          %542 = vmatpush1.msra.mxu0 0.0
          %543 = vmatprep.subr.mxu0 0.0
          %544 = vmatpush1.msra.mxu0 0.0
          %545 = vmatprep.subr.mxu0 0.0
          %546 = vmatpush1.msra.mxu0 0.0
          %547 = vmatprep.subr.mxu0 0.0
          %548 = vmatpush1.msra.mxu0 0.0
          %549 = vmatprep.subr.mxu0 0.0
          %550 = vmatpush1.msra.mxu0 0.0
          %551 = vmatprep.subr.mxu0 0.0
          %552 = vmatpush1.msra.mxu0 0.0
          %553 = vmatprep.subr.mxu0 0.0
          %554 = vmatpush1.msra.mxu0 0.0
          %555 = vmatprep.subr.mxu0 0.0
          %556 = vmatpush1.msra.mxu0 0.0
          %557 = vmatprep.mubr.f32.mxu0 0.0
          %558 = vmatmul.mubr.f32.gmra.mrb[0].mxu0 %v349
          %v559 = vpop.f32.mrb[0].mxu0
          %v560 = vadd.f32 %v418, %v559
          %v561 = vpop.f32.mrb[0].mxu0
          %562 = vdwg.mxu0
          %v563 = vadd.f32 %v356, %v489
          %v564 = vxor.u32 %v563, 2147483648
          %v565 = vmul.f32 %v564, 1.442695
          %v566 = vpow.pop %v565
          %v567 = vadd.f32 %v566, 1.0
          %v568 = vrcp.pop %v567
          %v569 = vmul.f32 1.0, %v568
          %v571 = vrot.slane %v356, 2
          %v573 = vadd.f32 %v571, %v491
          %v574 = vxor.u32 %v573, 2147483648
          %v575 = vmul.f32 %v574, 1.442695
          %v576 = vpow.pop %v575
          %v577 = vadd.f32 %v576, 1.0
          %v578 = vrcp.pop %v577
          %v579 = vmul.f32 1.0, %v578
          %v580 = vmul.f32 %v569, %v560
          %v581 = vrot.slane %v356, 4
          %v583 = vadd.f32 %v581, %v580
          %v584 = vtanh.pop %v583
          %v585 = vsub.f32 1.0, %v579
          %v586 = vmul.f32 %v585, %v584
          %v587 = vmul.f32 %v579, %v349
          %v588 = vadd.f32 %v586, %v587
          %s589 = smul.u32 %s352, 2
          %s590 = scalar_lea.vmem %s325, %s589 [#allocation3]
          %591 = vst [vmem:[%s590] sm:$0x3] %v588
        $region78: #{forward.12} parent=68 // loop_footer
          %s348 = sadd.s32 1, %s344
        $region79: #{forward.12} parent=68 // loop_footer_branch
          %343 = sbr.rel target = $region75
        $region80: #{forward.12} parent=68 // loop_exit
          _
        %592 = vst [vmem:[%s332] sm:$0x3] %v349
        %s593 = sand.u32 %s105, 1
        %s594 = sand.u32 %s105, 1
        %s595 = smul.addr %s594, 32
        %s596 = scalar_lea.vmem [#allocation3], %s595
        %s597 = sand.u32 %s131, 1
        %s598 = scalar_lea.sflag [#allocation5], %s597
        %s599 = sand.u32 %s131, 1
        %s600 = smul.addr %s599, 2
        %s601 = scalar_lea.vmem [#allocation4], %s600
        // Predicated region
        $region81: #{forward.12} parent=68 // pred_check
          %p602 = pneg %p115
        $region82: #{forward.12} parent=68 // pred_check_branch
          %604 = sbr.rel (%p602) target = $region84
        $region83: #{forward.12} parent=68 // pred_region
          %s605 = smul.addr %s19, 2
          %s606 = scalar_lea.vmem %s3, %s605
          // Predicated region
          $region85: #{forward.12} parent=83 // pred_check
            _
          $region86: #{forward.12} parent=83 // pred_check_branch
            %608 = sbr.rel (0) target = $region88
          $region87: #{forward.12} parent=83 // pred_region
            // Predicated region
            $region89: #{forward.12} parent=87 // pred_check
              _
            $region90: #{forward.12} parent=87 // pred_check_branch
              %610 = sbr.rel target = $region92
            $region91: #{forward.12} parent=87 // pred_region
              // Predicated region
              $region104: #{forward.12} parent=91 // pred_check
                _
              $region105: #{forward.12} parent=91 // pred_check_branch
                %655 = sbr.rel (0) target = $region107
              $region106: #{forward.12} parent=91 // pred_region
                loop: start=0, step=1, limit=1
                $region108: #{forward.12} parent=106 // loop_pre_header
                  _
                $region109: #{forward.12} parent=106 // loop_header
                  %s657 = sphi 0, %s661
                  %p658 = scmp.ge.s32.totalorder %s657, 1
                  %s662 = sphi %s596, %s596
                  %s663 = sphi %s606, %s606
                $region110: #{forward.12} parent=106 // loop_header_branch
                  %660 = sbr.rel (%p658) target = $region114
                $region111: #{forward.12} parent=106 // loop_body
                  _
                $region112: #{forward.12} parent=106 // loop_footer
                  %s661 = sadd.s32 1, %s657
                $region113: #{forward.12} parent=106 // loop_footer_branch
                  %656 = sbr.rel target = $region109
                $region114: #{forward.12} parent=106 // loop_exit
                  _
                loop: start=0, step=1, limit=1
                $region115: #{forward.12} parent=106 // loop_pre_header
                  _
                $region116: #{forward.12} parent=106 // loop_header
                  %s666 = sphi 0, %s670
                  %p667 = scmp.ge.s32.totalorder %s666, 1
                  %s671 = sphi %s596, %s596
                  %s672 = sphi %s606, %s606
                $region117: #{forward.12} parent=106 // loop_header_branch
                  %669 = sbr.rel (%p667) target = $region121
                $region118: #{forward.12} parent=106 // loop_body
                  %v673 = vld [vmem:[%s671] sm:$0x3]
                  %674 = vst [vmem:[%s672] sm:$0x3] %v673
                  %v675 = vld [vmem:[%s671 + $0x2] sm:$0x3]
                  %676 = vst [vmem:[%s672 + $0x4] sm:$0x3] %v675
                  %v677 = vld [vmem:[%s671 + $0x4] sm:$0x3]
                  %678 = vst [vmem:[%s672 + $0x8] sm:$0x3] %v677
                  %v679 = vld [vmem:[%s671 + $0x6] sm:$0x3]
                  %680 = vst [vmem:[%s672 + $0xc] sm:$0x3] %v679
                  %v681 = vld [vmem:[%s671 + $0x8] sm:$0x3]
                  %682 = vst [vmem:[%s672 + $0x10] sm:$0x3] %v681
                  %v683 = vld [vmem:[%s671 + $0xa] sm:$0x3]
                  %684 = vst [vmem:[%s672 + $0x14] sm:$0x3] %v683
                  %v685 = vld [vmem:[%s671 + $0xc] sm:$0x3]
                  %686 = vst [vmem:[%s672 + $0x18] sm:$0x3] %v685
                  %v687 = vld [vmem:[%s671 + $0xe] sm:$0x3]
                  %688 = vst [vmem:[%s672 + $0x1c] sm:$0x3] %v687
                  %v689 = vld [vmem:[%s671 + $0x10] sm:$0x3]
                  %690 = vst [vmem:[%s672 + $0x20] sm:$0x3] %v689
                  %v691 = vld [vmem:[%s671 + $0x12] sm:$0x3]
                  %692 = vst [vmem:[%s672 + $0x24] sm:$0x3] %v691
                  %v693 = vld [vmem:[%s671 + $0x14] sm:$0x3]
                  %694 = vst [vmem:[%s672 + $0x28] sm:$0x3] %v693
                  %v695 = vld [vmem:[%s671 + $0x16] sm:$0x3]
                  %696 = vst [vmem:[%s672 + $0x2c] sm:$0x3] %v695
                  %v697 = vld [vmem:[%s671 + $0x18] sm:$0x3]
                  %698 = vst [vmem:[%s672 + $0x30] sm:$0x3] %v697
                  %v699 = vld [vmem:[%s671 + $0x1a] sm:$0x3]
                  %700 = vst [vmem:[%s672 + $0x34] sm:$0x3] %v699
                  %v701 = vld [vmem:[%s671 + $0x1c] sm:$0x3]
                  %702 = vst [vmem:[%s672 + $0x38] sm:$0x3] %v701
                  %v703 = vld [vmem:[%s671 + $0x1e] sm:$0x3]
                  %704 = vst [vmem:[%s672 + $0x3c] sm:$0x3] %v703
                $region119: #{forward.12} parent=106 // loop_footer
                  %s670 = sadd.s32 1, %s666
                $region120: #{forward.12} parent=106 // loop_footer_branch
                  %665 = sbr.rel target = $region116
                $region121: #{forward.12} parent=106 // loop_exit
                  _
              $region107: #{forward.12} parent=91 // pred_fallthru
                _
            $region92: #{forward.12} parent=87 // pred_fallthru
              _
            // Predicated region
            $region93: #{forward.12} parent=87 // pred_check
              _
            $region94: #{forward.12} parent=87 // pred_check_branch
              %612 = sbr.rel (0) target = $region96
            $region95: #{forward.12} parent=87 // pred_region
              loop: start=0, step=1, limit=1
              $region97: #{forward.12} parent=95 // loop_pre_header
                _
              $region98: #{forward.12} parent=95 // loop_header
                %s615 = sphi 0, %s619
                %p616 = scmp.ge.s32.totalorder %s615, 1
                %s620 = sphi %s596, %s596
                %s621 = sphi %s606, %s606
              $region99: #{forward.12} parent=95 // loop_header_branch
                %618 = sbr.rel (%p616) target = $region103
              $region100: #{forward.12} parent=95 // loop_body
                %v622 = vld [vmem:[%s620] sm:$0x3]
                %623 = vst [vmem:[%s621] sm:$0x3] %v622
                %v624 = vld [vmem:[%s620 + $0x2] sm:$0x3]
                %625 = vst [vmem:[%s621 + $0x4] sm:$0x3] %v624
                %v626 = vld [vmem:[%s620 + $0x4] sm:$0x3]
                %627 = vst [vmem:[%s621 + $0x8] sm:$0x3] %v626
                %v628 = vld [vmem:[%s620 + $0x6] sm:$0x3]
                %629 = vst [vmem:[%s621 + $0xc] sm:$0x3] %v628
                %v630 = vld [vmem:[%s620 + $0x8] sm:$0x3]
                %631 = vst [vmem:[%s621 + $0x10] sm:$0x3] %v630
                %v632 = vld [vmem:[%s620 + $0xa] sm:$0x3]
                %633 = vst [vmem:[%s621 + $0x14] sm:$0x3] %v632
                %v634 = vld [vmem:[%s620 + $0xc] sm:$0x3]
                %635 = vst [vmem:[%s621 + $0x18] sm:$0x3] %v634
                %v636 = vld [vmem:[%s620 + $0xe] sm:$0x3]
                %637 = vst [vmem:[%s621 + $0x1c] sm:$0x3] %v636
                %v638 = vld [vmem:[%s620 + $0x10] sm:$0x3]
                %639 = vst [vmem:[%s621 + $0x20] sm:$0x3] %v638
                %v640 = vld [vmem:[%s620 + $0x12] sm:$0x3]
                %641 = vst [vmem:[%s621 + $0x24] sm:$0x3] %v640
                %v642 = vld [vmem:[%s620 + $0x14] sm:$0x3]
                %643 = vst [vmem:[%s621 + $0x28] sm:$0x3] %v642
                %v644 = vld [vmem:[%s620 + $0x16] sm:$0x3]
                %645 = vst [vmem:[%s621 + $0x2c] sm:$0x3] %v644
                %v646 = vld [vmem:[%s620 + $0x18] sm:$0x3]
                %647 = vst [vmem:[%s621 + $0x30] sm:$0x3] %v646
                %v648 = vld [vmem:[%s620 + $0x1a] sm:$0x3]
                %649 = vst [vmem:[%s621 + $0x34] sm:$0x3] %v648
                %v650 = vld [vmem:[%s620 + $0x1c] sm:$0x3]
                %651 = vst [vmem:[%s621 + $0x38] sm:$0x3] %v650
                %v652 = vld [vmem:[%s620 + $0x1e] sm:$0x3]
                %653 = vst [vmem:[%s621 + $0x3c] sm:$0x3] %v652
              $region101: #{forward.12} parent=95 // loop_footer
                %s619 = sadd.s32 1, %s615
              $region102: #{forward.12} parent=95 // loop_footer_branch
                %614 = sbr.rel target = $region98
              $region103: #{forward.12} parent=95 // loop_exit
                _
            $region96: #{forward.12} parent=87 // pred_fallthru
              _
          $region88: #{forward.12} parent=83 // pred_fallthru
            _
          %705 = vnop
        $region84: #{forward.12} parent=68 // pred_fallthru
          _
        // Predicated region
        $region122: #{forward.12} parent=68 // pred_check
          %p706 = pneg %p141
        $region123: #{forward.12} parent=68 // pred_check_branch
          %708 = sbr.rel (%p706) target = $region125
        $region124: #{forward.12} parent=68 // pred_region
          %s710 = ssub.s32 32, 32
          %711 = vsyncadd %s598, %s710
          %s712 = smul.addr %s19, 32
          %s713 = scalar_lea.hbm %s4, %s712
          %s715 = sshll.u32 %s601, 4
          %s716 = int_to_ptr.vmem [resolvable:$true] %s715
          %718 = dma.vmem_to_hbm [thread:$0]  %s716, 32, %s713, %s598
        $region125: #{forward.12} parent=68 // pred_fallthru
          _
      $region69: #{forward.12} parent=5 // pred_fallthru
        _
      %p719 = scmp.le.s32.totalorder 2, %s14
      // Predicated region
      $region126: #{forward.12} parent=5 // pred_check
        %p720 = pneg %p719
      $region127: #{forward.12} parent=5 // pred_check_branch
        %722 = sbr.rel (%p720) target = $region129
      $region128: #{forward.12} parent=5 // pred_region
        %s723 = ssub.s32 %s14, 2
        // Predicated region
        $region130: #{forward.12} parent=128 // pred_check
          %p724 = pneg %p121
        $region131: #{forward.12} parent=128 // pred_check_branch
          %726 = sbr.rel (%p724) target = $region133
        $region132: #{forward.12} parent=128 // pred_region
          %s727 = sand.u32 %s106, 1
          %s728 = sand.u32 %s106, 1
          %s729 = smul.addr %s728, 32
          %s730 = scalar_lea.vmem [#allocation3], %s729
        $region133: #{forward.12} parent=128 // pred_fallthru
          _
        // Predicated region
        $region134: #{forward.12} parent=128 // pred_check
          %p731 = pneg %p147
        $region135: #{forward.12} parent=128 // pred_check_branch
          %733 = sbr.rel (%p731) target = $region137
        $region136: #{forward.12} parent=128 // pred_region
          %s734 = sand.u32 %s132, 1
          %s735 = scalar_lea.sflag [#allocation5], %s734
          %s736 = sand.u32 %s132, 1
          %s737 = smul.addr %s736, 2
          %s738 = scalar_lea.vmem [#allocation4], %s737
          %739 = dma.done %s735, 32
        $region137: #{forward.12} parent=128 // pred_fallthru
          _
      $region129: #{forward.12} parent=5 // pred_fallthru
        _
    $region6: #{forward.12} parent=1 // loop_footer
      %s18 = sadd.s32 1, %s14
    $region7: #{forward.12} parent=1 // loop_footer_branch
      %13 = sbr.rel target = $region3
    $region8: #{forward.12} parent=1 // loop_exit
      _
    %740 = vsyncpa [#allocation5], 1
    %s741 = scalar_lea.sflag [#allocation5], 1
    %742 = vsyncpa %s741, 1

// kernel: forward.10
$region0: #{forward.10}
  #allocation0 [shape = 'u32[]', space=smem, size = 0x4, offset = 0x4, fixed_abs, tag = 'smem constant byte address 0x4 - core index']
  #allocation1 [shape = 'u32[144,128]{1,0:T(1,128)}', space=vmem, size = 0x12000, scoped, tag = 'internal scratch']
  %s0 = inlined_call_operand.vmem [shape: f32[2,26,32], index: 0, kind: input, shape index: {}]
  %s1 = inlined_call_operand.vmem [shape: f32[3,32,32], index: 1, kind: input, shape index: {}]
  %s2 = inlined_call_operand.vmem [shape: f32[1,32], index: 2, kind: input, shape index: {}]
  %s3 = inlined_call_operand.hbm [shape: f32[7,32,32], index: 3, kind: input, shape index: {}]
  %s4 = inlined_call_operand.hbm [shape: f32[1,32], index: 4, kind: input, shape index: {}]
  %s5 = inlined_call_operand.vmem [shape: f32[11,32,32], index: 5, kind: input, shape index: {}]
  %s6 = inlined_call_operand.hbm [shape: f32[1,32], index: 6, kind: input, shape index: {}]
  %s7 = inlined_call_operand.vmem [shape: f32[2,16,128], index: 7, kind: output, shape index: {}]
  %s8 = sld [smem:[#allocation0]]
  $region73: #{forward.10} parent=0
    _
  %s10 = ssub.s32 1, %s8
  %s11 = scalar_select 0, %s10, %s8
  $region1: #{forward.10} parent=0
    #allocation2 [shape = 'u8[114688]{0}', space=vmem, size = 0x1c000, scoped, tag = 'input window, operand 3, single buffered']
    #allocation3 [shape = 's32[2]{0}', space=sflag, size = 0x8, scoped, tag = 'scoped memory for forward.10']
    #allocation4 [shape = 'u8[512]{0}', space=vmem, size = 0x400, scoped, tag = 'input window, operand 4, single buffered']
    #allocation5 [shape = 's32[1]{0}', space=sflag, size = 0x4, scoped, tag = 'scoped memory for forward.10']
    #allocation6 [shape = 'u8[512]{0}', space=vmem, size = 0x400, scoped, tag = 'input window, operand 6, single buffered']
    %12 = vsyncpa [#allocation3], 0
    %13 = vsyncpa [#allocation5], 0
    loop: start=0, step=1, limit=4
    $region2: #{forward.10} parent=1 // loop_pre_header
      _
    $region3: #{forward.10} parent=1 // loop_header
      %s15 = sphi 0, %s19
      %p16 = scmp.ge.s32.totalorder %s15, 4
      %s25 = sphi 0, %s27
      %s28 = sphi 0, %s25
      %s29 = sphi 0, %s28
      %s45 = sphi 0, %s29
      %s49 = sphi 0, %s49
      %s51 = sphi 0, %s49
      %s52 = sphi 0, %s51
      %s66 = sphi 0, %s52
      %s70 = sphi 0, %s70
      %s72 = sphi 0, %s70
      %s73 = sphi 0, %s72
      %s87 = sphi 0, %s73
      %s91 = sphi 0, %s91
      %s93 = sphi 0, %s91
      %s94 = sphi 0, %s93
      %s108 = sphi 0, %s94
      %s112 = sphi 0, %s112
      %s114 = sphi 0, %s112
      %s115 = sphi 0, %s114
      %s129 = sphi 0, %s115
      %s133 = sphi 0, %s133
      %s135 = sphi 0, %s133
      %s136 = sphi 0, %s135
      %s150 = sphi 0, %s136
      %s154 = sphi 0, %s154
      %s156 = sphi 0, %s154
      %s157 = sphi 0, %s156
      %s171 = sphi 0, %s157
      %s177 = sphi 0, %s179
      %s180 = sphi 0, %s177
      %s181 = sphi 0, %s180
      %s197 = sphi 0, %s181
    $region4: #{forward.10} parent=1 // loop_header_branch
      %18 = sbr.rel (%p16) target = $region8
    $region5: #{forward.10} parent=1 // loop_body
      %s20 = ssub.s32 %s15, 1
      %s21 = ssub.s32 %s15, 2
      %s22 = sadd.s32 %s15, 1
      %s23 = ssub.s32 %s15, %s22
      %p24 = scmp.eq.s32.totalorder %s23, 0
      %s26 = sadd.s32 %s25, 1
      %s27 = scalar_select %p24, %s25, %s26
      %p30 = pneg %p24
      %p31 = scmp.eq.s32.totalorder %s15, 1
      %p32 = por %p30, %p31
      %p33 = scmp.ne.s32.totalorder %s25, %s28
      %p34 = scmp.eq.s32.totalorder %s15, 0
      %p35 = por %p33, %p34
      %p36 = scmp.ne.s32.totalorder %s25, %s28
      %p37 = scmp.eq.s32.totalorder %s20, 1
      %p38 = por %p36, %p37
      %p39 = scmp.ne.s32.totalorder %s28, %s29
      %p40 = scmp.eq.s32.totalorder %s20, 0
      %p41 = por %p39, %p40
      %p42 = scmp.ne.s32.totalorder %s28, %s29
      %p43 = scmp.eq.s32.totalorder %s21, 1
      %p44 = por %p42, %p43
      %p46 = scmp.ne.s32.totalorder %s29, %s45
      %p47 = scmp.eq.s32.totalorder %s21, 0
      %p48 = por %p46, %p47
      %s50 = sadd.s32 %s49, 1
      %p53 = scmp.eq.s32.totalorder %s15, 1
      %p54 = scmp.ne.s32.totalorder %s49, %s51
      %p55 = scmp.eq.s32.totalorder %s15, 0
      %p56 = por %p54, %p55
      %p57 = scmp.ne.s32.totalorder %s49, %s51
      %p58 = scmp.eq.s32.totalorder %s20, 1
      %p59 = por %p57, %p58
      %p60 = scmp.ne.s32.totalorder %s51, %s52
      %p61 = scmp.eq.s32.totalorder %s20, 0
      %p62 = por %p60, %p61
      %p63 = scmp.ne.s32.totalorder %s51, %s52
      %p64 = scmp.eq.s32.totalorder %s21, 1
      %p65 = por %p63, %p64
      %p67 = scmp.ne.s32.totalorder %s52, %s66
      %p68 = scmp.eq.s32.totalorder %s21, 0
      %p69 = por %p67, %p68
      %s71 = sadd.s32 %s70, 1
      %p74 = scmp.eq.s32.totalorder %s15, 1
      %p75 = scmp.ne.s32.totalorder %s70, %s72
      %p76 = scmp.eq.s32.totalorder %s15, 0
      %p77 = por %p75, %p76
      %p78 = scmp.ne.s32.totalorder %s70, %s72
      %p79 = scmp.eq.s32.totalorder %s20, 1
      %p80 = por %p78, %p79
      %p81 = scmp.ne.s32.totalorder %s72, %s73
      %p82 = scmp.eq.s32.totalorder %s20, 0
      %p83 = por %p81, %p82
      %p84 = scmp.ne.s32.totalorder %s72, %s73
      %p85 = scmp.eq.s32.totalorder %s21, 1
      %p86 = por %p84, %p85
      %p88 = scmp.ne.s32.totalorder %s73, %s87
      %p89 = scmp.eq.s32.totalorder %s21, 0
      %p90 = por %p88, %p89
      %s92 = sadd.s32 %s91, 1
      %p95 = scmp.eq.s32.totalorder %s15, 1
      %p96 = scmp.ne.s32.totalorder %s91, %s93
      %p97 = scmp.eq.s32.totalorder %s15, 0
      %p98 = por %p96, %p97
      %p99 = scmp.ne.s32.totalorder %s91, %s93
      %p100 = scmp.eq.s32.totalorder %s20, 1
      %p101 = por %p99, %p100
      %p102 = scmp.ne.s32.totalorder %s93, %s94
      %p103 = scmp.eq.s32.totalorder %s20, 0
      %p104 = por %p102, %p103
      %p105 = scmp.ne.s32.totalorder %s93, %s94
      %p106 = scmp.eq.s32.totalorder %s21, 1
      %p107 = por %p105, %p106
      %p109 = scmp.ne.s32.totalorder %s94, %s108
      %p110 = scmp.eq.s32.totalorder %s21, 0
      %p111 = por %p109, %p110
      %s113 = sadd.s32 %s112, 1
      %p116 = scmp.eq.s32.totalorder %s15, 1
      %p117 = scmp.ne.s32.totalorder %s112, %s114
      %p118 = scmp.eq.s32.totalorder %s15, 0
      %p119 = por %p117, %p118
      %p120 = scmp.ne.s32.totalorder %s112, %s114
      %p121 = scmp.eq.s32.totalorder %s20, 1
      %p122 = por %p120, %p121
      %p123 = scmp.ne.s32.totalorder %s114, %s115
      %p124 = scmp.eq.s32.totalorder %s20, 0
      %p125 = por %p123, %p124
      %p126 = scmp.ne.s32.totalorder %s114, %s115
      %p127 = scmp.eq.s32.totalorder %s21, 1
      %p128 = por %p126, %p127
      %p130 = scmp.ne.s32.totalorder %s115, %s129
      %p131 = scmp.eq.s32.totalorder %s21, 0
      %p132 = por %p130, %p131
      %s134 = sadd.s32 %s133, 1
      %p137 = scmp.eq.s32.totalorder %s15, 1
      %p138 = scmp.ne.s32.totalorder %s133, %s135
      %p139 = scmp.eq.s32.totalorder %s15, 0
      %p140 = por %p138, %p139
      %p141 = scmp.ne.s32.totalorder %s133, %s135
      %p142 = scmp.eq.s32.totalorder %s20, 1
      %p143 = por %p141, %p142
      %p144 = scmp.ne.s32.totalorder %s135, %s136
      %p145 = scmp.eq.s32.totalorder %s20, 0
      %p146 = por %p144, %p145
      %p147 = scmp.ne.s32.totalorder %s135, %s136
      %p148 = scmp.eq.s32.totalorder %s21, 1
      %p149 = por %p147, %p148
      %p151 = scmp.ne.s32.totalorder %s136, %s150
      %p152 = scmp.eq.s32.totalorder %s21, 0
      %p153 = por %p151, %p152
      %s155 = sadd.s32 %s154, 1
      %p158 = scmp.eq.s32.totalorder %s15, 1
      %p159 = scmp.ne.s32.totalorder %s154, %s156
      %p160 = scmp.eq.s32.totalorder %s15, 0
      %p161 = por %p159, %p160
      %p162 = scmp.ne.s32.totalorder %s154, %s156
      %p163 = scmp.eq.s32.totalorder %s20, 1
      %p164 = por %p162, %p163
      %p165 = scmp.ne.s32.totalorder %s156, %s157
      %p166 = scmp.eq.s32.totalorder %s20, 0
      %p167 = por %p165, %p166
      %p168 = scmp.ne.s32.totalorder %s156, %s157
      %p169 = scmp.eq.s32.totalorder %s21, 1
      %p170 = por %p168, %p169
      %p172 = scmp.ne.s32.totalorder %s157, %s171
      %p173 = scmp.eq.s32.totalorder %s21, 0
      %p174 = por %p172, %p173
      %s175 = ssub.s32 %s15, %s22
      %p176 = scmp.eq.s32.totalorder %s175, 0
      %s178 = sadd.s32 %s177, 1
      %s179 = scalar_select %p176, %s177, %s178
      %p182 = pneg %p176
      %p183 = scmp.eq.s32.totalorder %s15, 1
      %p184 = por %p182, %p183
      %p185 = scmp.ne.s32.totalorder %s177, %s180
      %p186 = scmp.eq.s32.totalorder %s15, 0
      %p187 = por %p185, %p186
      %p188 = scmp.ne.s32.totalorder %s177, %s180
      %p189 = scmp.eq.s32.totalorder %s20, 1
      %p190 = por %p188, %p189
      %p191 = scmp.ne.s32.totalorder %s180, %s181
      %p192 = scmp.eq.s32.totalorder %s20, 0
      %p193 = por %p191, %p192
      %p194 = scmp.ne.s32.totalorder %s180, %s181
      %p195 = scmp.eq.s32.totalorder %s21, 1
      %p196 = por %p194, %p195
      %p198 = scmp.ne.s32.totalorder %s181, %s197
      %p199 = scmp.eq.s32.totalorder %s21, 0
      %p200 = por %p198, %p199
      %p201 = scmp.le.s32.totalorder 1, %s15
      %p202 = scmp.lt.s32.totalorder %s15, 3
      %p203 = pnand %p201, %p202
      %p204 = pneg %p203
      // Predicated region
      $region9: #{forward.10} parent=5 // pred_check
        _
      $region10: #{forward.10} parent=5 // pred_check_branch
        %206 = sbr.rel (%p203) target = $region12
      $region11: #{forward.10} parent=5 // pred_region
        %s207 = ssub.s32 %s15, 1
        // Predicated region
        $region13: #{forward.10} parent=11 // pred_check
          %p208 = pneg %p62
        $region14: #{forward.10} parent=11 // pred_check_branch
          %210 = sbr.rel (%p208) target = $region16
        $region15: #{forward.10} parent=11 // pred_region
          _
        $region16: #{forward.10} parent=11 // pred_fallthru
          _
        // Predicated region
        $region17: #{forward.10} parent=11 // pred_check
          %p211 = pneg %p83
        $region18: #{forward.10} parent=11 // pred_check_branch
          %213 = sbr.rel (%p211) target = $region20
        $region19: #{forward.10} parent=11 // pred_region
          _
        $region20: #{forward.10} parent=11 // pred_fallthru
          _
        // Predicated region
        $region21: #{forward.10} parent=11 // pred_check
          %p214 = pneg %p104
        $region22: #{forward.10} parent=11 // pred_check_branch
          %216 = sbr.rel (%p214) target = $region24
        $region23: #{forward.10} parent=11 // pred_region
          %s218 = ssub.s32 3584, 3584
          %219 = vsyncadd [#allocation3], %s218
          %s220 = sshll.u32 [#allocation2], 4
          %s221 = int_to_ptr.vmem [resolvable:$true] %s220
          %226 = dma.hbm_to_vmem [thread:$0]  %s3, 3584, %s221, [#allocation3], 128, 128, 8
        $region24: #{forward.10} parent=11 // pred_fallthru
          _
        // Predicated region
        $region25: #{forward.10} parent=11 // pred_check
          %p227 = pneg %p125
        $region26: #{forward.10} parent=11 // pred_check_branch
          %229 = sbr.rel (%p227) target = $region28
        $region27: #{forward.10} parent=11 // pred_region
          %s231 = ssub.s32 16, 16
          %232 = vsyncadd [#allocation5], %s231
          %s234 = sshll.u32 [#allocation4], 4
          %s235 = int_to_ptr.vmem [resolvable:$true] %s234
          %237 = dma.hbm_to_vmem [thread:$0]  %s4, 16, %s235, [#allocation5]
        $region28: #{forward.10} parent=11 // pred_fallthru
          _
        // Predicated region
        $region29: #{forward.10} parent=11 // pred_check
          %p238 = pneg %p146
        $region30: #{forward.10} parent=11 // pred_check_branch
          %240 = sbr.rel (%p238) target = $region32
        $region31: #{forward.10} parent=11 // pred_region
          _
        $region32: #{forward.10} parent=11 // pred_fallthru
          _
        // Predicated region
        $region33: #{forward.10} parent=11 // pred_check
          %p241 = pneg %p167
        $region34: #{forward.10} parent=11 // pred_check_branch
          %243 = sbr.rel (%p241) target = $region36
        $region35: #{forward.10} parent=11 // pred_region
          %s245 = ssub.s32 16, 16
          %246 = vsyncadd [#allocation5], %s245
          %s248 = sshll.u32 [#allocation6], 4
          %s249 = int_to_ptr.vmem [resolvable:$true] %s248
          %251 = dma.hbm_to_vmem [thread:$0]  %s6, 16, %s249, [#allocation5]
        $region36: #{forward.10} parent=11 // pred_fallthru
          _
      $region12: #{forward.10} parent=5 // pred_fallthru
        _
      %p252 = scmp.lt.s32.totalorder %s15, 2
      // Predicated region
      $region37: #{forward.10} parent=5 // pred_check
        %p253 = pneg %p252
      $region38: #{forward.10} parent=5 // pred_check_branch
        %255 = sbr.rel (%p253) target = $region40
      $region39: #{forward.10} parent=5 // pred_region
        // Predicated region
        $region41: #{forward.10} parent=39 // pred_check
          %p256 = pneg %p35
        $region42: #{forward.10} parent=39 // pred_check_branch
          %258 = sbr.rel (%p256) target = $region44
        $region43: #{forward.10} parent=39 // pred_region
          %p259 = scmp.lt.s32.totalorder %s15, 1
          %s260 = scalar_select %p259, %s15, 1
          %s261 = smul.addr %s260, 4
          %s262 = smul.addr %s261, 8
          %s263 = scalar_lea.vmem %s0, %s262
        $region44: #{forward.10} parent=39 // pred_fallthru
          _
      $region40: #{forward.10} parent=5 // pred_fallthru
        _
      %p264 = scmp.le.s32.totalorder 1, %s15
      %p265 = scmp.lt.s32.totalorder %s15, 3
      %p266 = pnand %p264, %p265
      %p267 = pneg %p266
      // Predicated region
      $region45: #{forward.10} parent=5 // pred_check
        _
      $region46: #{forward.10} parent=5 // pred_check_branch
        %269 = sbr.rel (%p266) target = $region48
      $region47: #{forward.10} parent=5 // pred_region
        %s270 = ssub.s32 %s15, 1
        // Predicated region
        $region49: #{forward.10} parent=47 // pred_check
          %p271 = pneg %p104
        $region50: #{forward.10} parent=47 // pred_check_branch
          %273 = sbr.rel (%p271) target = $region52
        $region51: #{forward.10} parent=47 // pred_region
          %274 = dma.done [#allocation3], 3584
        $region52: #{forward.10} parent=47 // pred_fallthru
          _
        // Predicated region
        $region53: #{forward.10} parent=47 // pred_check
          %p275 = pneg %p125
        $region54: #{forward.10} parent=47 // pred_check_branch
          %277 = sbr.rel (%p275) target = $region56
        $region55: #{forward.10} parent=47 // pred_region
          %278 = dma.done [#allocation5], 16
        $region56: #{forward.10} parent=47 // pred_fallthru
          _
        // Predicated region
        $region57: #{forward.10} parent=47 // pred_check
          %p279 = pneg %p167
        $region58: #{forward.10} parent=47 // pred_check_branch
          %281 = sbr.rel (%p279) target = $region60
        $region59: #{forward.10} parent=47 // pred_region
          %282 = dma.done [#allocation5], 16
        $region60: #{forward.10} parent=47 // pred_fallthru
          _
        %p283 = scmp.lt.s32.totalorder %s20, 1
        %s284 = scalar_select %p283, %s20, 1
        %s285 = smul.addr %s284, 4
        %s286 = smul.addr %s285, 8
        %s287 = scalar_lea.vmem %s0, %s286
        %p288 = pneg %p41
        %p289 = pneg %p38
        %p290 = pneg %p62
        %p291 = pneg %p59
        %p292 = pneg %p83
        %p293 = pneg %p80
        %p294 = pneg %p104
        %p295 = pneg %p101
        %p296 = pneg %p125
        %p297 = pneg %p122
        %p298 = pneg %p146
        %p299 = pneg %p143
        %p300 = pneg %p167
        %p301 = pneg %p164
        %p302 = pneg %p193
        %p303 = pneg %p190
        %p304 = scmp.lt.s32.totalorder %s20, 1
        %s305 = scalar_select %p304, %s20, 1
        %s306 = smul.addr %s305, 2
        %s307 = smul.addr %s306, 8
        %s308 = scalar_lea.vmem %s7, %s307
        %p309 = scmp.lt.s32.totalorder %s20, 1
        %s310 = scalar_select %p309, %s20, 1
        %s311 = smul.addr %s310, 4
        %s312 = smul.addr %s311, 8
        %s313 = scalar_lea.vmem %s0, %s312
        %p314 = scmp.lt.s32.totalorder %s20, 1
        %s315 = scalar_select %p314, %s20, 1
        %s316 = smul.addr %s315, 2
        %s317 = smul.addr %s316, 8
        %s318 = scalar_lea.vmem %s7, %s317
        %v319 = vld [vmem:[%s313 + $0x4] sm:$0xff]
        %v320 = vld [vmem:[%s313 + $0xc] sm:$0xff]
        %v321 = vld [vmem:[%s1] sm:$0xff]
        %v322 = vld [vmem:[%s1 + $0x8] sm:$0xff]
        %v323 = vld [vmem:[%s1 + $0x10] sm:$0xff]
        %v324 = vld [vmem:[%s1 + $0x18] sm:$0xff]
        %v325 = vld [vmem:[%s313 + $0x5] sm:$0xff]
        %v326 = vld [vmem:[%s313 + $0xd] sm:$0xff]
        %s327 = scalar_lea.vmem %s1, 32
        %v328 = vld [vmem:[%s327] sm:$0xff]
        %v329 = vld [vmem:[%s327 + $0x8] sm:$0xff]
        %v330 = vld [vmem:[%s327 + $0x10] sm:$0xff]
        %v331 = vld [vmem:[%s327 + $0x18] sm:$0xff]
        %vm332 = vcmask 261120
        %v334 = vsel %vm332, %v325, 0
        %v337 = vsel %vm332, %v326, 0
        %339 = vmatprep.subr.mxu0 0.0
        %340 = vmatpush1.msra.mxu0 %v328
        %341 = vmatprep.subr.mxu0 0.0
        %342 = vmatpush1.msra.mxu0 %v329
        %343 = vmatprep.subr.mxu0 0.0
        %344 = vmatpush1.msra.mxu0 %v330
        %345 = vmatprep.subr.mxu0 0.0
        %346 = vmatpush1.msra.mxu0 %v331
        %347 = vmatprep.subr.mxu0 0.0
        %348 = vmatpush1.msra.mxu0 0.0
        %349 = vmatprep.subr.mxu0 0.0
        %350 = vmatpush1.msra.mxu0 0.0
        %351 = vmatprep.subr.mxu0 0.0
        %352 = vmatpush1.msra.mxu0 0.0
        %353 = vmatprep.subr.mxu0 0.0
        %354 = vmatpush1.msra.mxu0 0.0
        %355 = vmatprep.subr.mxu0 0.0
        %356 = vmatpush1.msra.mxu0 0.0
        %357 = vmatprep.subr.mxu0 0.0
        %358 = vmatpush1.msra.mxu0 0.0
        %359 = vmatprep.subr.mxu0 0.0
        %360 = vmatpush1.msra.mxu0 0.0
        %361 = vmatprep.subr.mxu0 0.0
        %362 = vmatpush1.msra.mxu0 0.0
        %363 = vmatprep.subr.mxu0 0.0
        %364 = vmatpush1.msra.mxu0 0.0
        %365 = vmatprep.subr.mxu0 0.0
        %366 = vmatpush1.msra.mxu0 0.0
        %367 = vmatprep.subr.mxu0 0.0
        %368 = vmatpush1.msra.mxu0 0.0
        %369 = vmatprep.subr.mxu0 0.0
        %370 = vmatpush1.msra.mxu0 0.0
        %371 = vmatprep.subr.mxu0 0.0
        %372 = vmatpush1.msra.mxu0 0.0
        %373 = vmatprep.subr.mxu0 0.0
        %374 = vmatpush1.msra.mxu0 0.0
        %375 = vmatprep.subr.mxu0 0.0
        %376 = vmatpush1.msra.mxu0 0.0
        %377 = vmatprep.subr.mxu0 0.0
        %378 = vmatpush1.msra.mxu0 0.0
        %379 = vmatprep.subr.mxu0 0.0
        %380 = vmatpush1.msra.mxu0 0.0
        %381 = vmatprep.subr.mxu0 0.0
        %382 = vmatpush1.msra.mxu0 0.0
        %383 = vmatprep.subr.mxu0 0.0
        %384 = vmatpush1.msra.mxu0 0.0
        %385 = vmatprep.subr.mxu0 0.0
        %386 = vmatpush1.msra.mxu0 0.0
        %387 = vmatprep.subr.mxu0 0.0
        %388 = vmatpush1.msra.mxu0 0.0
        %389 = vmatprep.subr.mxu0 0.0
        %390 = vmatpush1.msra.mxu0 0.0
        %391 = vmatprep.subr.mxu0 0.0
        %392 = vmatpush1.msra.mxu0 0.0
        %393 = vmatprep.subr.mxu0 0.0
        %394 = vmatpush1.msra.mxu0 0.0
        %395 = vmatprep.subr.mxu0 0.0
        %396 = vmatpush1.msra.mxu0 0.0
        %397 = vmatprep.subr.mxu0 0.0
        %398 = vmatpush1.msra.mxu0 0.0
        %399 = vmatprep.subr.mxu0 0.0
        %400 = vmatpush1.msra.mxu0 0.0
        %401 = vmatprep.subr.mxu0 0.0
        %402 = vmatpush1.msra.mxu0 0.0
        %403 = vmatprep.mubr.f32.mxu0 0.0
        %404 = vmatmul.mubr.f32.gmra.mrb[0].mxu0 %v334
        %v405 = vpop.f32.mrb[0].mxu0
        %v406 = vadd.f32 0.0, %v405
        %v407 = vpop.f32.mrb[0].mxu0
        %408 = vmatprep.mubr.f32.mxu0 0.0
        %409 = vmatmul.mubr.f32.gmra.mrb[0].mxu0 %v337
        %v410 = vpop.f32.mrb[0].mxu0
        %v411 = vadd.f32 0.0, %v410
        %v412 = vpop.f32.mrb[0].mxu0
        %413 = vdwg.mxu0
        %v415 = vsel %vm332, %v319, 0
        %v418 = vsel %vm332, %v320, 0
        %420 = vmatprep.subr.mxu0 0.0
        %421 = vmatpush1.msra.mxu0 %v321
        %422 = vmatprep.subr.mxu0 0.0
        %423 = vmatpush1.msra.mxu0 %v322
        %424 = vmatprep.subr.mxu0 0.0
        %425 = vmatpush1.msra.mxu0 %v323
        %426 = vmatprep.subr.mxu0 0.0
        %427 = vmatpush1.msra.mxu0 %v324
        %428 = vmatprep.subr.mxu0 0.0
        %429 = vmatpush1.msra.mxu0 0.0
        %430 = vmatprep.subr.mxu0 0.0
        %431 = vmatpush1.msra.mxu0 0.0
        %432 = vmatprep.subr.mxu0 0.0
        %433 = vmatpush1.msra.mxu0 0.0
        %434 = vmatprep.subr.mxu0 0.0
        %435 = vmatpush1.msra.mxu0 0.0
        %436 = vmatprep.subr.mxu0 0.0
        %437 = vmatpush1.msra.mxu0 0.0
        %438 = vmatprep.subr.mxu0 0.0
        %439 = vmatpush1.msra.mxu0 0.0
        %440 = vmatprep.subr.mxu0 0.0
        %441 = vmatpush1.msra.mxu0 0.0
        %442 = vmatprep.subr.mxu0 0.0
        %443 = vmatpush1.msra.mxu0 0.0
        %444 = vmatprep.subr.mxu0 0.0
        %445 = vmatpush1.msra.mxu0 0.0
        %446 = vmatprep.subr.mxu0 0.0
        %447 = vmatpush1.msra.mxu0 0.0
        %448 = vmatprep.subr.mxu0 0.0
        %449 = vmatpush1.msra.mxu0 0.0
        %450 = vmatprep.subr.mxu0 0.0
        %451 = vmatpush1.msra.mxu0 0.0
        %452 = vmatprep.subr.mxu0 0.0
        %453 = vmatpush1.msra.mxu0 0.0
        %454 = vmatprep.subr.mxu0 0.0
        %455 = vmatpush1.msra.mxu0 0.0
        %456 = vmatprep.subr.mxu0 0.0
        %457 = vmatpush1.msra.mxu0 0.0
        %458 = vmatprep.subr.mxu0 0.0
        %459 = vmatpush1.msra.mxu0 0.0
        %460 = vmatprep.subr.mxu0 0.0
        %461 = vmatpush1.msra.mxu0 0.0
        %462 = vmatprep.subr.mxu0 0.0
        %463 = vmatpush1.msra.mxu0 0.0
        %464 = vmatprep.subr.mxu0 0.0
        %465 = vmatpush1.msra.mxu0 0.0
        %466 = vmatprep.subr.mxu0 0.0
        %467 = vmatpush1.msra.mxu0 0.0
        %468 = vmatprep.subr.mxu0 0.0
        %469 = vmatpush1.msra.mxu0 0.0
        %470 = vmatprep.subr.mxu0 0.0
        %471 = vmatpush1.msra.mxu0 0.0
        %472 = vmatprep.subr.mxu0 0.0
        %473 = vmatpush1.msra.mxu0 0.0
        %474 = vmatprep.subr.mxu0 0.0
        %475 = vmatpush1.msra.mxu0 0.0
        %476 = vmatprep.subr.mxu0 0.0
        %477 = vmatpush1.msra.mxu0 0.0
        %478 = vmatprep.subr.mxu0 0.0
        %479 = vmatpush1.msra.mxu0 0.0
        %480 = vmatprep.subr.mxu0 0.0
        %481 = vmatpush1.msra.mxu0 0.0
        %482 = vmatprep.subr.mxu0 0.0
        %483 = vmatpush1.msra.mxu0 0.0
        %484 = vmatprep.mubr.f32.mxu0 0.0
        %485 = vmatmul.mubr.f32.gmra.mrb[0].mxu0 %v415
        %v486 = vpop.f32.mrb[0].mxu0
        %v487 = vadd.f32 %v406, %v486
        %v488 = vpop.f32.mrb[0].mxu0
        %489 = vmatprep.mubr.f32.mxu0 0.0
        %490 = vmatmul.mubr.f32.gmra.mrb[0].mxu0 %v418
        %v491 = vpop.f32.mrb[0].mxu0
        %v492 = vadd.f32 %v411, %v491
        %v493 = vpop.f32.mrb[0].mxu0
        %494 = vdwg.mxu0
        %v495 = vld [vmem:[%s313 + $0x6] sm:$0xff]
        %v496 = vld [vmem:[%s313 + $0xe] sm:$0xff]
        %s497 = scalar_lea.vmem %s1, 64
        %v498 = vld [vmem:[%s497] sm:$0xff]
        %v499 = vld [vmem:[%s497 + $0x8] sm:$0xff]
        %v500 = vld [vmem:[%s497 + $0x10] sm:$0xff]
        %v501 = vld [vmem:[%s497 + $0x18] sm:$0xff]
        %v503 = vsel %vm332, %v495, 0
        %v506 = vsel %vm332, %v496, 0
        %508 = vmatprep.subr.mxu0 0.0
        %509 = vmatpush1.msra.mxu0 %v498
        %510 = vmatprep.subr.mxu0 0.0
        %511 = vmatpush1.msra.mxu0 %v499
        %512 = vmatprep.subr.mxu0 0.0
        %513 = vmatpush1.msra.mxu0 %v500
        %514 = vmatprep.subr.mxu0 0.0
        %515 = vmatpush1.msra.mxu0 %v501
        %516 = vmatprep.subr.mxu0 0.0
        %517 = vmatpush1.msra.mxu0 0.0
        %518 = vmatprep.subr.mxu0 0.0
        %519 = vmatpush1.msra.mxu0 0.0
        %520 = vmatprep.subr.mxu0 0.0
        %521 = vmatpush1.msra.mxu0 0.0
        %522 = vmatprep.subr.mxu0 0.0
        %523 = vmatpush1.msra.mxu0 0.0
        %524 = vmatprep.subr.mxu0 0.0
        %525 = vmatpush1.msra.mxu0 0.0
        %526 = vmatprep.subr.mxu0 0.0
        %527 = vmatpush1.msra.mxu0 0.0
        %528 = vmatprep.subr.mxu0 0.0
        %529 = vmatpush1.msra.mxu0 0.0
        %530 = vmatprep.subr.mxu0 0.0
        %531 = vmatpush1.msra.mxu0 0.0
        %532 = vmatprep.subr.mxu0 0.0
        %533 = vmatpush1.msra.mxu0 0.0
        %534 = vmatprep.subr.mxu0 0.0
        %535 = vmatpush1.msra.mxu0 0.0
        %536 = vmatprep.subr.mxu0 0.0
        %537 = vmatpush1.msra.mxu0 0.0
        %538 = vmatprep.subr.mxu0 0.0
        %539 = vmatpush1.msra.mxu0 0.0
        %540 = vmatprep.subr.mxu0 0.0
        %541 = vmatpush1.msra.mxu0 0.0
        %542 = vmatprep.subr.mxu0 0.0
        %543 = vmatpush1.msra.mxu0 0.0
        %544 = vmatprep.subr.mxu0 0.0
        %545 = vmatpush1.msra.mxu0 0.0
        %546 = vmatprep.subr.mxu0 0.0
        %547 = vmatpush1.msra.mxu0 0.0
        %548 = vmatprep.subr.mxu0 0.0
        %549 = vmatpush1.msra.mxu0 0.0
        %550 = vmatprep.subr.mxu0 0.0
        %551 = vmatpush1.msra.mxu0 0.0
        %552 = vmatprep.subr.mxu0 0.0
        %553 = vmatpush1.msra.mxu0 0.0
        %554 = vmatprep.subr.mxu0 0.0
        %555 = vmatpush1.msra.mxu0 0.0
        %556 = vmatprep.subr.mxu0 0.0
        %557 = vmatpush1.msra.mxu0 0.0
        %558 = vmatprep.subr.mxu0 0.0
        %559 = vmatpush1.msra.mxu0 0.0
        %560 = vmatprep.subr.mxu0 0.0
        %561 = vmatpush1.msra.mxu0 0.0
        %562 = vmatprep.subr.mxu0 0.0
        %563 = vmatpush1.msra.mxu0 0.0
        %564 = vmatprep.subr.mxu0 0.0
        %565 = vmatpush1.msra.mxu0 0.0
        %566 = vmatprep.subr.mxu0 0.0
        %567 = vmatpush1.msra.mxu0 0.0
        %568 = vmatprep.subr.mxu0 0.0
        %569 = vmatpush1.msra.mxu0 0.0
        %570 = vmatprep.subr.mxu0 0.0
        %571 = vmatpush1.msra.mxu0 0.0
        %572 = vmatprep.mubr.f32.mxu0 0.0
        %573 = vmatmul.mubr.f32.gmra.mrb[0].mxu0 %v503
        %v574 = vpop.f32.mrb[0].mxu0
        %v575 = vadd.f32 0.0, %v574
        %v576 = vpop.f32.mrb[0].mxu0
        %577 = vmatprep.mubr.f32.mxu0 0.0
        %578 = vmatmul.mubr.f32.gmra.mrb[0].mxu0 %v506
        %v579 = vpop.f32.mrb[0].mxu0
        %v580 = vadd.f32 0.0, %v579
        %v581 = vpop.f32.mrb[0].mxu0
        %582 = vdwg.mxu0
        %v583 = vadd.f32 %v487, %v575
        %v584 = vadd.f32 %v492, %v580
        %v585 = vld [vmem:[%s2] sm:$0x1]
        %v587 = vlaneseq
        %v588 = vshrl.u32 %v587, 7
        %v589 = vsub.s32 0, %v588
        %v590 = vrot.slane %v585, %v589
        %v592 = vadd.f32 %v583, %v590
        %v593 = vadd.f32 %v584, %v590
        %v594 = vmax.f32 %v592, 0.0
        %v595 = vmax.f32 %v593, 0.0
        %596 = vst.msk [vmem:[%s318] sm:$0xff] %vm332, %v594
        %597 = vst.msk [vmem:[%s318 + $0x8] sm:$0xff] %vm332, %v595
        %v598 = vld [vmem:[%s313 + $0x2] sm:$0xff]
        %v599 = vld [vmem:[%s313 + $0xa] sm:$0xff]
        %v600 = vld [vmem:[#allocation2] sm:$0xff]
        %v601 = vld [vmem:[#allocation2 + $0x8] sm:$0xff]
        %v602 = vld [vmem:[#allocation2 + $0x10] sm:$0xff]
        %v603 = vld [vmem:[#allocation2 + $0x18] sm:$0xff]
        %v604 = vld [vmem:[%s313 + $0x3] sm:$0xff]
        %v605 = vld [vmem:[%s313 + $0xb] sm:$0xff]
        %s606 = scalar_lea.vmem [#allocation2], 32
        %v607 = vld [vmem:[%s606] sm:$0xff]
        %v608 = vld [vmem:[%s606 + $0x8] sm:$0xff]
        %v609 = vld [vmem:[%s606 + $0x10] sm:$0xff]
        %v610 = vld [vmem:[%s606 + $0x18] sm:$0xff]
        %v612 = vsel %vm332, %v604, 0
        %v615 = vsel %vm332, %v605, 0
        %617 = vmatprep.subr.mxu0 0.0
        %618 = vmatpush1.msra.mxu0 %v607
        %619 = vmatprep.subr.mxu0 0.0
        %620 = vmatpush1.msra.mxu0 %v608
        %621 = vmatprep.subr.mxu0 0.0
        %622 = vmatpush1.msra.mxu0 %v609
        %623 = vmatprep.subr.mxu0 0.0
        %624 = vmatpush1.msra.mxu0 %v610
        %625 = vmatprep.subr.mxu0 0.0
        %626 = vmatpush1.msra.mxu0 0.0
        %627 = vmatprep.subr.mxu0 0.0
        %628 = vmatpush1.msra.mxu0 0.0
        %629 = vmatprep.subr.mxu0 0.0
        %630 = vmatpush1.msra.mxu0 0.0
        %631 = vmatprep.subr.mxu0 0.0
        %632 = vmatpush1.msra.mxu0 0.0
        %633 = vmatprep.subr.mxu0 0.0
        %634 = vmatpush1.msra.mxu0 0.0
        %635 = vmatprep.subr.mxu0 0.0
        %636 = vmatpush1.msra.mxu0 0.0
        %637 = vmatprep.subr.mxu0 0.0
        %638 = vmatpush1.msra.mxu0 0.0
        %639 = vmatprep.subr.mxu0 0.0
        %640 = vmatpush1.msra.mxu0 0.0
        %641 = vmatprep.subr.mxu0 0.0
        %642 = vmatpush1.msra.mxu0 0.0
        %643 = vmatprep.subr.mxu0 0.0
        %644 = vmatpush1.msra.mxu0 0.0
        %645 = vmatprep.subr.mxu0 0.0
        %646 = vmatpush1.msra.mxu0 0.0
        %647 = vmatprep.subr.mxu0 0.0
        %648 = vmatpush1.msra.mxu0 0.0
        %649 = vmatprep.subr.mxu0 0.0
        %650 = vmatpush1.msra.mxu0 0.0
        %651 = vmatprep.subr.mxu0 0.0
        %652 = vmatpush1.msra.mxu0 0.0
        %653 = vmatprep.subr.mxu0 0.0
        %654 = vmatpush1.msra.mxu0 0.0
        %655 = vmatprep.subr.mxu0 0.0
        %656 = vmatpush1.msra.mxu0 0.0
        %657 = vmatprep.subr.mxu0 0.0
        %658 = vmatpush1.msra.mxu0 0.0
        %659 = vmatprep.subr.mxu0 0.0
        %660 = vmatpush1.msra.mxu0 0.0
        %661 = vmatprep.subr.mxu0 0.0
        %662 = vmatpush1.msra.mxu0 0.0
        %663 = vmatprep.subr.mxu0 0.0
        %664 = vmatpush1.msra.mxu0 0.0
        %665 = vmatprep.subr.mxu0 0.0
        %666 = vmatpush1.msra.mxu0 0.0
        %667 = vmatprep.subr.mxu0 0.0
        %668 = vmatpush1.msra.mxu0 0.0
        %669 = vmatprep.subr.mxu0 0.0
        %670 = vmatpush1.msra.mxu0 0.0
        %671 = vmatprep.subr.mxu0 0.0
        %672 = vmatpush1.msra.mxu0 0.0
        %673 = vmatprep.subr.mxu0 0.0
        %674 = vmatpush1.msra.mxu0 0.0
        %675 = vmatprep.subr.mxu0 0.0
        %676 = vmatpush1.msra.mxu0 0.0
        %677 = vmatprep.subr.mxu0 0.0
        %678 = vmatpush1.msra.mxu0 0.0
        %679 = vmatprep.subr.mxu0 0.0
        %680 = vmatpush1.msra.mxu0 0.0
        %681 = vmatprep.mubr.f32.mxu0 0.0
        %682 = vmatmul.mubr.f32.gmra.mrb[0].mxu0 %v612
        %v683 = vpop.f32.mrb[0].mxu0
        %v684 = vadd.f32 0.0, %v683
        %v685 = vpop.f32.mrb[0].mxu0
        %686 = vmatprep.mubr.f32.mxu0 0.0
        %687 = vmatmul.mubr.f32.gmra.mrb[0].mxu0 %v615
        %v688 = vpop.f32.mrb[0].mxu0
        %v689 = vadd.f32 0.0, %v688
        %v690 = vpop.f32.mrb[0].mxu0
        %691 = vdwg.mxu0
        %v693 = vsel %vm332, %v598, 0
        %v696 = vsel %vm332, %v599, 0
        %698 = vmatprep.subr.mxu0 0.0
        %699 = vmatpush1.msra.mxu0 %v600
        %700 = vmatprep.subr.mxu0 0.0
        %701 = vmatpush1.msra.mxu0 %v601
        %702 = vmatprep.subr.mxu0 0.0
        %703 = vmatpush1.msra.mxu0 %v602
        %704 = vmatprep.subr.mxu0 0.0
        %705 = vmatpush1.msra.mxu0 %v603
        %706 = vmatprep.subr.mxu0 0.0
        %707 = vmatpush1.msra.mxu0 0.0
        %708 = vmatprep.subr.mxu0 0.0
        %709 = vmatpush1.msra.mxu0 0.0
        %710 = vmatprep.subr.mxu0 0.0
        %711 = vmatpush1.msra.mxu0 0.0
        %712 = vmatprep.subr.mxu0 0.0
        %713 = vmatpush1.msra.mxu0 0.0
        %714 = vmatprep.subr.mxu0 0.0
        %715 = vmatpush1.msra.mxu0 0.0
        %716 = vmatprep.subr.mxu0 0.0
        %717 = vmatpush1.msra.mxu0 0.0
        %718 = vmatprep.subr.mxu0 0.0
        %719 = vmatpush1.msra.mxu0 0.0
        %720 = vmatprep.subr.mxu0 0.0
        %721 = vmatpush1.msra.mxu0 0.0
        %722 = vmatprep.subr.mxu0 0.0
        %723 = vmatpush1.msra.mxu0 0.0
        %724 = vmatprep.subr.mxu0 0.0
        %725 = vmatpush1.msra.mxu0 0.0
        %726 = vmatprep.subr.mxu0 0.0
        %727 = vmatpush1.msra.mxu0 0.0
        %728 = vmatprep.subr.mxu0 0.0
        %729 = vmatpush1.msra.mxu0 0.0
        %730 = vmatprep.subr.mxu0 0.0
        %731 = vmatpush1.msra.mxu0 0.0
        %732 = vmatprep.subr.mxu0 0.0
        %733 = vmatpush1.msra.mxu0 0.0
        %734 = vmatprep.subr.mxu0 0.0
        %735 = vmatpush1.msra.mxu0 0.0
        %736 = vmatprep.subr.mxu0 0.0
        %737 = vmatpush1.msra.mxu0 0.0
        %738 = vmatprep.subr.mxu0 0.0
        %739 = vmatpush1.msra.mxu0 0.0
        %740 = vmatprep.subr.mxu0 0.0
        %741 = vmatpush1.msra.mxu0 0.0
        %742 = vmatprep.subr.mxu0 0.0
        %743 = vmatpush1.msra.mxu0 0.0
        %744 = vmatprep.subr.mxu0 0.0
        %745 = vmatpush1.msra.mxu0 0.0
        %746 = vmatprep.subr.mxu0 0.0
        %747 = vmatpush1.msra.mxu0 0.0
        %748 = vmatprep.subr.mxu0 0.0
        %749 = vmatpush1.msra.mxu0 0.0
        %750 = vmatprep.subr.mxu0 0.0
        %751 = vmatpush1.msra.mxu0 0.0
        %752 = vmatprep.subr.mxu0 0.0
        %753 = vmatpush1.msra.mxu0 0.0
        %754 = vmatprep.subr.mxu0 0.0
        %755 = vmatpush1.msra.mxu0 0.0
        %756 = vmatprep.subr.mxu0 0.0
        %757 = vmatpush1.msra.mxu0 0.0
        %758 = vmatprep.subr.mxu0 0.0
        %759 = vmatpush1.msra.mxu0 0.0
        %760 = vmatprep.subr.mxu0 0.0
        %761 = vmatpush1.msra.mxu0 0.0
        %762 = vmatprep.mubr.f32.mxu0 0.0
        %763 = vmatmul.mubr.f32.gmra.mrb[0].mxu0 %v693
        %v764 = vpop.f32.mrb[0].mxu0
        %v765 = vadd.f32 %v684, %v764
        %v766 = vpop.f32.mrb[0].mxu0
        %767 = vmatprep.mubr.f32.mxu0 0.0
        %768 = vmatmul.mubr.f32.gmra.mrb[0].mxu0 %v696
        %v769 = vpop.f32.mrb[0].mxu0
        %v770 = vadd.f32 %v689, %v769
        %v771 = vpop.f32.mrb[0].mxu0
        %772 = vdwg.mxu0
        %v773 = vld [vmem:[%s313 + $0x4] sm:$0xff]
        %v774 = vld [vmem:[%s313 + $0xc] sm:$0xff]
        %s775 = scalar_lea.vmem [#allocation2], 64
        %v776 = vld [vmem:[%s775] sm:$0xff]
        %v777 = vld [vmem:[%s775 + $0x8] sm:$0xff]
        %v778 = vld [vmem:[%s775 + $0x10] sm:$0xff]
        %v779 = vld [vmem:[%s775 + $0x18] sm:$0xff]
        %v781 = vsel %vm332, %v773, 0
        %v784 = vsel %vm332, %v774, 0
        %786 = vmatprep.subr.mxu0 0.0
        %787 = vmatpush1.msra.mxu0 %v776
        %788 = vmatprep.subr.mxu0 0.0
        %789 = vmatpush1.msra.mxu0 %v777
        %790 = vmatprep.subr.mxu0 0.0
        %791 = vmatpush1.msra.mxu0 %v778
        %792 = vmatprep.subr.mxu0 0.0
        %793 = vmatpush1.msra.mxu0 %v779
        %794 = vmatprep.subr.mxu0 0.0
        %795 = vmatpush1.msra.mxu0 0.0
        %796 = vmatprep.subr.mxu0 0.0
        %797 = vmatpush1.msra.mxu0 0.0
        %798 = vmatprep.subr.mxu0 0.0
        %799 = vmatpush1.msra.mxu0 0.0
        %800 = vmatprep.subr.mxu0 0.0
        %801 = vmatpush1.msra.mxu0 0.0
        %802 = vmatprep.subr.mxu0 0.0
        %803 = vmatpush1.msra.mxu0 0.0
        %804 = vmatprep.subr.mxu0 0.0
        %805 = vmatpush1.msra.mxu0 0.0
        %806 = vmatprep.subr.mxu0 0.0
        %807 = vmatpush1.msra.mxu0 0.0
        %808 = vmatprep.subr.mxu0 0.0
        %809 = vmatpush1.msra.mxu0 0.0
        %810 = vmatprep.subr.mxu0 0.0
        %811 = vmatpush1.msra.mxu0 0.0
        %812 = vmatprep.subr.mxu0 0.0
        %813 = vmatpush1.msra.mxu0 0.0
        %814 = vmatprep.subr.mxu0 0.0
        %815 = vmatpush1.msra.mxu0 0.0
        %816 = vmatprep.subr.mxu0 0.0
        %817 = vmatpush1.msra.mxu0 0.0
        %818 = vmatprep.subr.mxu0 0.0
        %819 = vmatpush1.msra.mxu0 0.0
        %820 = vmatprep.subr.mxu0 0.0
        %821 = vmatpush1.msra.mxu0 0.0
        %822 = vmatprep.subr.mxu0 0.0
        %823 = vmatpush1.msra.mxu0 0.0
        %824 = vmatprep.subr.mxu0 0.0
        %825 = vmatpush1.msra.mxu0 0.0
        %826 = vmatprep.subr.mxu0 0.0
        %827 = vmatpush1.msra.mxu0 0.0
        %828 = vmatprep.subr.mxu0 0.0
        %829 = vmatpush1.msra.mxu0 0.0
        %830 = vmatprep.subr.mxu0 0.0
        %831 = vmatpush1.msra.mxu0 0.0
        %832 = vmatprep.subr.mxu0 0.0
        %833 = vmatpush1.msra.mxu0 0.0
        %834 = vmatprep.subr.mxu0 0.0
        %835 = vmatpush1.msra.mxu0 0.0
        %836 = vmatprep.subr.mxu0 0.0
        %837 = vmatpush1.msra.mxu0 0.0
        %838 = vmatprep.subr.mxu0 0.0
        %839 = vmatpush1.msra.mxu0 0.0
        %840 = vmatprep.subr.mxu0 0.0
        %841 = vmatpush1.msra.mxu0 0.0
        %842 = vmatprep.subr.mxu0 0.0
        %843 = vmatpush1.msra.mxu0 0.0
        %844 = vmatprep.subr.mxu0 0.0
        %845 = vmatpush1.msra.mxu0 0.0
        %846 = vmatprep.subr.mxu0 0.0
        %847 = vmatpush1.msra.mxu0 0.0
        %848 = vmatprep.subr.mxu0 0.0
        %849 = vmatpush1.msra.mxu0 0.0
        %850 = vmatprep.mubr.f32.mxu0 0.0
        %851 = vmatmul.mubr.f32.gmra.mrb[0].mxu0 %v781
        %v852 = vpop.f32.mrb[0].mxu0
        %v853 = vadd.f32 0.0, %v852
        %v854 = vpop.f32.mrb[0].mxu0
        %855 = vmatprep.mubr.f32.mxu0 0.0
        %856 = vmatmul.mubr.f32.gmra.mrb[0].mxu0 %v784
        %v857 = vpop.f32.mrb[0].mxu0
        %v858 = vadd.f32 0.0, %v857
        %v859 = vpop.f32.mrb[0].mxu0
        %860 = vdwg.mxu0
        %v861 = vadd.f32 %v765, %v853
        %v862 = vadd.f32 %v770, %v858
        %v863 = vld [vmem:[%s313 + $0x5] sm:$0xff]
        %v864 = vld [vmem:[%s313 + $0xd] sm:$0xff]
        %s865 = scalar_lea.vmem [#allocation2], 96
        %v866 = vld [vmem:[%s865] sm:$0xff]
        %v867 = vld [vmem:[%s865 + $0x8] sm:$0xff]
        %v868 = vld [vmem:[%s865 + $0x10] sm:$0xff]
        %v869 = vld [vmem:[%s865 + $0x18] sm:$0xff]
        %v871 = vsel %vm332, %v863, 0
        %v874 = vsel %vm332, %v864, 0
        %876 = vmatprep.subr.mxu0 0.0
        %877 = vmatpush1.msra.mxu0 %v866
        %878 = vmatprep.subr.mxu0 0.0
        %879 = vmatpush1.msra.mxu0 %v867
        %880 = vmatprep.subr.mxu0 0.0
        %881 = vmatpush1.msra.mxu0 %v868
        %882 = vmatprep.subr.mxu0 0.0
        %883 = vmatpush1.msra.mxu0 %v869
        %884 = vmatprep.subr.mxu0 0.0
        %885 = vmatpush1.msra.mxu0 0.0
        %886 = vmatprep.subr.mxu0 0.0
        %887 = vmatpush1.msra.mxu0 0.0
        %888 = vmatprep.subr.mxu0 0.0
        %889 = vmatpush1.msra.mxu0 0.0
        %890 = vmatprep.subr.mxu0 0.0
        %891 = vmatpush1.msra.mxu0 0.0
        %892 = vmatprep.subr.mxu0 0.0
        %893 = vmatpush1.msra.mxu0 0.0
        %894 = vmatprep.subr.mxu0 0.0
        %895 = vmatpush1.msra.mxu0 0.0
        %896 = vmatprep.subr.mxu0 0.0
        %897 = vmatpush1.msra.mxu0 0.0
        %898 = vmatprep.subr.mxu0 0.0
        %899 = vmatpush1.msra.mxu0 0.0
        %900 = vmatprep.subr.mxu0 0.0
        %901 = vmatpush1.msra.mxu0 0.0
        %902 = vmatprep.subr.mxu0 0.0
        %903 = vmatpush1.msra.mxu0 0.0
        %904 = vmatprep.subr.mxu0 0.0
        %905 = vmatpush1.msra.mxu0 0.0
        %906 = vmatprep.subr.mxu0 0.0
        %907 = vmatpush1.msra.mxu0 0.0
        %908 = vmatprep.subr.mxu0 0.0
        %909 = vmatpush1.msra.mxu0 0.0
        %910 = vmatprep.subr.mxu0 0.0
        %911 = vmatpush1.msra.mxu0 0.0
        %912 = vmatprep.subr.mxu0 0.0
        %913 = vmatpush1.msra.mxu0 0.0
        %914 = vmatprep.subr.mxu0 0.0
        %915 = vmatpush1.msra.mxu0 0.0
        %916 = vmatprep.subr.mxu0 0.0
        %917 = vmatpush1.msra.mxu0 0.0
        %918 = vmatprep.subr.mxu0 0.0
        %919 = vmatpush1.msra.mxu0 0.0
        %920 = vmatprep.subr.mxu0 0.0
        %921 = vmatpush1.msra.mxu0 0.0
        %922 = vmatprep.subr.mxu0 0.0
        %923 = vmatpush1.msra.mxu0 0.0
        %924 = vmatprep.subr.mxu0 0.0
        %925 = vmatpush1.msra.mxu0 0.0
        %926 = vmatprep.subr.mxu0 0.0
        %927 = vmatpush1.msra.mxu0 0.0
        %928 = vmatprep.subr.mxu0 0.0
        %929 = vmatpush1.msra.mxu0 0.0
        %930 = vmatprep.subr.mxu0 0.0
        %931 = vmatpush1.msra.mxu0 0.0
        %932 = vmatprep.subr.mxu0 0.0
        %933 = vmatpush1.msra.mxu0 0.0
        %934 = vmatprep.subr.mxu0 0.0
        %935 = vmatpush1.msra.mxu0 0.0
        %936 = vmatprep.subr.mxu0 0.0
        %937 = vmatpush1.msra.mxu0 0.0
        %938 = vmatprep.subr.mxu0 0.0
        %939 = vmatpush1.msra.mxu0 0.0
        %940 = vmatprep.mubr.f32.mxu0 0.0
        %941 = vmatmul.mubr.f32.gmra.mrb[0].mxu0 %v871
        %v942 = vpop.f32.mrb[0].mxu0
        %v943 = vadd.f32 0.0, %v942
        %v944 = vpop.f32.mrb[0].mxu0
        %945 = vmatprep.mubr.f32.mxu0 0.0
        %946 = vmatmul.mubr.f32.gmra.mrb[0].mxu0 %v874
        %v947 = vpop.f32.mrb[0].mxu0
        %v948 = vadd.f32 0.0, %v947
        %v949 = vpop.f32.mrb[0].mxu0
        %950 = vdwg.mxu0
        %v951 = vadd.f32 %v861, %v943
        %v952 = vadd.f32 %v862, %v948
        %v953 = vld [vmem:[%s313 + $0x6] sm:$0xff]
        %v954 = vld [vmem:[%s313 + $0xe] sm:$0xff]
        %s955 = scalar_lea.vmem [#allocation2], 128
        %v956 = vld [vmem:[%s955] sm:$0xff]
        %v957 = vld [vmem:[%s955 + $0x8] sm:$0xff]
        %v958 = vld [vmem:[%s955 + $0x10] sm:$0xff]
        %v959 = vld [vmem:[%s955 + $0x18] sm:$0xff]
        %v961 = vsel %vm332, %v953, 0
        %v964 = vsel %vm332, %v954, 0
        %966 = vmatprep.subr.mxu0 0.0
        %967 = vmatpush1.msra.mxu0 %v956
        %968 = vmatprep.subr.mxu0 0.0
        %969 = vmatpush1.msra.mxu0 %v957
        %970 = vmatprep.subr.mxu0 0.0
        %971 = vmatpush1.msra.mxu0 %v958
        %972 = vmatprep.subr.mxu0 0.0
        %973 = vmatpush1.msra.mxu0 %v959
        %974 = vmatprep.subr.mxu0 0.0
        %975 = vmatpush1.msra.mxu0 0.0
        %976 = vmatprep.subr.mxu0 0.0
        %977 = vmatpush1.msra.mxu0 0.0
        %978 = vmatprep.subr.mxu0 0.0
        %979 = vmatpush1.msra.mxu0 0.0
        %980 = vmatprep.subr.mxu0 0.0
        %981 = vmatpush1.msra.mxu0 0.0
        %982 = vmatprep.subr.mxu0 0.0
        %983 = vmatpush1.msra.mxu0 0.0
        %984 = vmatprep.subr.mxu0 0.0
        %985 = vmatpush1.msra.mxu0 0.0
        %986 = vmatprep.subr.mxu0 0.0
        %987 = vmatpush1.msra.mxu0 0.0
        %988 = vmatprep.subr.mxu0 0.0
        %989 = vmatpush1.msra.mxu0 0.0
        %990 = vmatprep.subr.mxu0 0.0
        %991 = vmatpush1.msra.mxu0 0.0
        %992 = vmatprep.subr.mxu0 0.0
        %993 = vmatpush1.msra.mxu0 0.0
        %994 = vmatprep.subr.mxu0 0.0
        %995 = vmatpush1.msra.mxu0 0.0
        %996 = vmatprep.subr.mxu0 0.0
        %997 = vmatpush1.msra.mxu0 0.0
        %998 = vmatprep.subr.mxu0 0.0
        %999 = vmatpush1.msra.mxu0 0.0
        %1000 = vmatprep.subr.mxu0 0.0
        %1001 = vmatpush1.msra.mxu0 0.0
        %1002 = vmatprep.subr.mxu0 0.0
        %1003 = vmatpush1.msra.mxu0 0.0
        %1004 = vmatprep.subr.mxu0 0.0
        %1005 = vmatpush1.msra.mxu0 0.0
        %1006 = vmatprep.subr.mxu0 0.0
        %1007 = vmatpush1.msra.mxu0 0.0
        %1008 = vmatprep.subr.mxu0 0.0
        %1009 = vmatpush1.msra.mxu0 0.0
        %1010 = vmatprep.subr.mxu0 0.0
        %1011 = vmatpush1.msra.mxu0 0.0
        %1012 = vmatprep.subr.mxu0 0.0
        %1013 = vmatpush1.msra.mxu0 0.0
        %1014 = vmatprep.subr.mxu0 0.0
        %1015 = vmatpush1.msra.mxu0 0.0
        %1016 = vmatprep.subr.mxu0 0.0
        %1017 = vmatpush1.msra.mxu0 0.0
        %1018 = vmatprep.subr.mxu0 0.0
        %1019 = vmatpush1.msra.mxu0 0.0
        %1020 = vmatprep.subr.mxu0 0.0
        %1021 = vmatpush1.msra.mxu0 0.0
        %1022 = vmatprep.subr.mxu0 0.0
        %1023 = vmatpush1.msra.mxu0 0.0
        %1024 = vmatprep.subr.mxu0 0.0
        %1025 = vmatpush1.msra.mxu0 0.0
        %1026 = vmatprep.subr.mxu0 0.0
        %1027 = vmatpush1.msra.mxu0 0.0
        %1028 = vmatprep.subr.mxu0 0.0
        %1029 = vmatpush1.msra.mxu0 0.0
        %1030 = vmatprep.mubr.f32.mxu0 0.0
        %1031 = vmatmul.mubr.f32.gmra.mrb[0].mxu0 %v961
        %v1032 = vpop.f32.mrb[0].mxu0
        %v1033 = vadd.f32 0.0, %v1032
        %v1034 = vpop.f32.mrb[0].mxu0
        %1035 = vmatprep.mubr.f32.mxu0 0.0
        %1036 = vmatmul.mubr.f32.gmra.mrb[0].mxu0 %v964
        %v1037 = vpop.f32.mrb[0].mxu0
        %v1038 = vadd.f32 0.0, %v1037
        %v1039 = vpop.f32.mrb[0].mxu0
        %1040 = vdwg.mxu0
        %v1041 = vadd.f32 %v951, %v1033
        %v1042 = vadd.f32 %v952, %v1038
        %v1043 = vld [vmem:[%s313 + $0x7] sm:$0xff]
        %v1044 = vld [vmem:[%s313 + $0xf] sm:$0xff]
        %s1045 = scalar_lea.vmem [#allocation2], 160
        %v1046 = vld [vmem:[%s1045] sm:$0xff]
        %v1047 = vld [vmem:[%s1045 + $0x8] sm:$0xff]
        %v1048 = vld [vmem:[%s1045 + $0x10] sm:$0xff]
        %v1049 = vld [vmem:[%s1045 + $0x18] sm:$0xff]
        %v1051 = vsel %vm332, %v1043, 0
        %v1054 = vsel %vm332, %v1044, 0
        %1056 = vmatprep.subr.mxu0 0.0
        %1057 = vmatpush1.msra.mxu0 %v1046
        %1058 = vmatprep.subr.mxu0 0.0
        %1059 = vmatpush1.msra.mxu0 %v1047
        %1060 = vmatprep.subr.mxu0 0.0
        %1061 = vmatpush1.msra.mxu0 %v1048
        %1062 = vmatprep.subr.mxu0 0.0
        %1063 = vmatpush1.msra.mxu0 %v1049
        %1064 = vmatprep.subr.mxu0 0.0
        %1065 = vmatpush1.msra.mxu0 0.0
        %1066 = vmatprep.subr.mxu0 0.0
        %1067 = vmatpush1.msra.mxu0 0.0
        %1068 = vmatprep.subr.mxu0 0.0
        %1069 = vmatpush1.msra.mxu0 0.0
        %1070 = vmatprep.subr.mxu0 0.0
        %1071 = vmatpush1.msra.mxu0 0.0
        %1072 = vmatprep.subr.mxu0 0.0
        %1073 = vmatpush1.msra.mxu0 0.0
        %1074 = vmatprep.subr.mxu0 0.0
        %1075 = vmatpush1.msra.mxu0 0.0
        %1076 = vmatprep.subr.mxu0 0.0
        %1077 = vmatpush1.msra.mxu0 0.0
        %1078 = vmatprep.subr.mxu0 0.0
        %1079 = vmatpush1.msra.mxu0 0.0
        %1080 = vmatprep.subr.mxu0 0.0
        %1081 = vmatpush1.msra.mxu0 0.0
        %1082 = vmatprep.subr.mxu0 0.0
        %1083 = vmatpush1.msra.mxu0 0.0
        %1084 = vmatprep.subr.mxu0 0.0
        %1085 = vmatpush1.msra.mxu0 0.0
        %1086 = vmatprep.subr.mxu0 0.0
        %1087 = vmatpush1.msra.mxu0 0.0
        %1088 = vmatprep.subr.mxu0 0.0
        %1089 = vmatpush1.msra.mxu0 0.0
        %1090 = vmatprep.subr.mxu0 0.0
        %1091 = vmatpush1.msra.mxu0 0.0
        %1092 = vmatprep.subr.mxu0 0.0
        %1093 = vmatpush1.msra.mxu0 0.0
        %1094 = vmatprep.subr.mxu0 0.0
        %1095 = vmatpush1.msra.mxu0 0.0
        %1096 = vmatprep.subr.mxu0 0.0
        %1097 = vmatpush1.msra.mxu0 0.0
        %1098 = vmatprep.subr.mxu0 0.0
        %1099 = vmatpush1.msra.mxu0 0.0
        %1100 = vmatprep.subr.mxu0 0.0
        %1101 = vmatpush1.msra.mxu0 0.0
        %1102 = vmatprep.subr.mxu0 0.0
        %1103 = vmatpush1.msra.mxu0 0.0
        %1104 = vmatprep.subr.mxu0 0.0
        %1105 = vmatpush1.msra.mxu0 0.0
        %1106 = vmatprep.subr.mxu0 0.0
        %1107 = vmatpush1.msra.mxu0 0.0
        %1108 = vmatprep.subr.mxu0 0.0
        %1109 = vmatpush1.msra.mxu0 0.0
        %1110 = vmatprep.subr.mxu0 0.0
        %1111 = vmatpush1.msra.mxu0 0.0
        %1112 = vmatprep.subr.mxu0 0.0
        %1113 = vmatpush1.msra.mxu0 0.0
        %1114 = vmatprep.subr.mxu0 0.0
        %1115 = vmatpush1.msra.mxu0 0.0
        %1116 = vmatprep.subr.mxu0 0.0
        %1117 = vmatpush1.msra.mxu0 0.0
        %1118 = vmatprep.subr.mxu0 0.0
        %1119 = vmatpush1.msra.mxu0 0.0
        %1120 = vmatprep.mubr.f32.mxu0 0.0
        %1121 = vmatmul.mubr.f32.gmra.mrb[0].mxu0 %v1051
        %v1122 = vpop.f32.mrb[0].mxu0
        %v1123 = vadd.f32 0.0, %v1122
        %v1124 = vpop.f32.mrb[0].mxu0
        %1125 = vmatprep.mubr.f32.mxu0 0.0
        %1126 = vmatmul.mubr.f32.gmra.mrb[0].mxu0 %v1054
        %v1127 = vpop.f32.mrb[0].mxu0
        %v1128 = vadd.f32 0.0, %v1127
        %v1129 = vpop.f32.mrb[0].mxu0
        %1130 = vdwg.mxu0
        %v1131 = vadd.f32 %v1041, %v1123
        %v1132 = vadd.f32 %v1042, %v1128
        %v1133 = vld [vmem:[%s313 + $0x8] sm:$0xff]
        %v1134 = vld [vmem:[%s313 + $0x10] sm:$0xff]
        %s1135 = scalar_lea.vmem [#allocation2], 192
        %v1136 = vld [vmem:[%s1135] sm:$0xff]
        %v1137 = vld [vmem:[%s1135 + $0x8] sm:$0xff]
        %v1138 = vld [vmem:[%s1135 + $0x10] sm:$0xff]
        %v1139 = vld [vmem:[%s1135 + $0x18] sm:$0xff]
        %v1141 = vsel %vm332, %v1133, 0
        %v1144 = vsel %vm332, %v1134, 0
        %1146 = vmatprep.subr.mxu0 0.0
        %1147 = vmatpush1.msra.mxu0 %v1136
        %1148 = vmatprep.subr.mxu0 0.0
        %1149 = vmatpush1.msra.mxu0 %v1137
        %1150 = vmatprep.subr.mxu0 0.0
        %1151 = vmatpush1.msra.mxu0 %v1138
        %1152 = vmatprep.subr.mxu0 0.0
        %1153 = vmatpush1.msra.mxu0 %v1139
        %1154 = vmatprep.subr.mxu0 0.0
        %1155 = vmatpush1.msra.mxu0 0.0
        %1156 = vmatprep.subr.mxu0 0.0
        %1157 = vmatpush1.msra.mxu0 0.0
        %1158 = vmatprep.subr.mxu0 0.0
        %1159 = vmatpush1.msra.mxu0 0.0
        %1160 = vmatprep.subr.mxu0 0.0
        %1161 = vmatpush1.msra.mxu0 0.0
        %1162 = vmatprep.subr.mxu0 0.0
        %1163 = vmatpush1.msra.mxu0 0.0
        %1164 = vmatprep.subr.mxu0 0.0
        %1165 = vmatpush1.msra.mxu0 0.0
        %1166 = vmatprep.subr.mxu0 0.0
        %1167 = vmatpush1.msra.mxu0 0.0
        %1168 = vmatprep.subr.mxu0 0.0
        %1169 = vmatpush1.msra.mxu0 0.0
        %1170 = vmatprep.subr.mxu0 0.0
        %1171 = vmatpush1.msra.mxu0 0.0
        %1172 = vmatprep.subr.mxu0 0.0
        %1173 = vmatpush1.msra.mxu0 0.0
        %1174 = vmatprep.subr.mxu0 0.0
        %1175 = vmatpush1.msra.mxu0 0.0
        %1176 = vmatprep.subr.mxu0 0.0
        %1177 = vmatpush1.msra.mxu0 0.0
        %1178 = vmatprep.subr.mxu0 0.0
        %1179 = vmatpush1.msra.mxu0 0.0
        %1180 = vmatprep.subr.mxu0 0.0
        %1181 = vmatpush1.msra.mxu0 0.0
        %1182 = vmatprep.subr.mxu0 0.0
        %1183 = vmatpush1.msra.mxu0 0.0
        %1184 = vmatprep.subr.mxu0 0.0
        %1185 = vmatpush1.msra.mxu0 0.0
        %1186 = vmatprep.subr.mxu0 0.0
        %1187 = vmatpush1.msra.mxu0 0.0
        %1188 = vmatprep.subr.mxu0 0.0
        %1189 = vmatpush1.msra.mxu0 0.0
        %1190 = vmatprep.subr.mxu0 0.0
        %1191 = vmatpush1.msra.mxu0 0.0
        %1192 = vmatprep.subr.mxu0 0.0
        %1193 = vmatpush1.msra.mxu0 0.0
        %1194 = vmatprep.subr.mxu0 0.0
        %1195 = vmatpush1.msra.mxu0 0.0
        %1196 = vmatprep.subr.mxu0 0.0
        %1197 = vmatpush1.msra.mxu0 0.0
        %1198 = vmatprep.subr.mxu0 0.0
        %1199 = vmatpush1.msra.mxu0 0.0
        %1200 = vmatprep.subr.mxu0 0.0
        %1201 = vmatpush1.msra.mxu0 0.0
        %1202 = vmatprep.subr.mxu0 0.0
        %1203 = vmatpush1.msra.mxu0 0.0
        %1204 = vmatprep.subr.mxu0 0.0
        %1205 = vmatpush1.msra.mxu0 0.0
        %1206 = vmatprep.subr.mxu0 0.0
        %1207 = vmatpush1.msra.mxu0 0.0
        %1208 = vmatprep.subr.mxu0 0.0
        %1209 = vmatpush1.msra.mxu0 0.0
        %1210 = vmatprep.mubr.f32.mxu0 0.0
        %1211 = vmatmul.mubr.f32.gmra.mrb[0].mxu0 %v1141
        %v1212 = vpop.f32.mrb[0].mxu0
        %v1213 = vadd.f32 0.0, %v1212
        %v1214 = vpop.f32.mrb[0].mxu0
        %1215 = vmatprep.mubr.f32.mxu0 0.0
        %1216 = vmatmul.mubr.f32.gmra.mrb[0].mxu0 %v1144
        %v1217 = vpop.f32.mrb[0].mxu0
        %v1218 = vadd.f32 0.0, %v1217
        %v1219 = vpop.f32.mrb[0].mxu0
        %1220 = vdwg.mxu0
        %v1221 = vadd.f32 %v1131, %v1213
        %v1222 = vadd.f32 %v1132, %v1218
        %v1223 = vld [vmem:[#allocation4] sm:$0x1]
        %v1225 = vlaneseq
        %v1226 = vshrl.u32 %v1225, 7
        %v1227 = vsub.s32 0, %v1226
        %v1228 = vrot.slane %v1223, %v1227
        %v1230 = vadd.f32 %v1221, %v1228
        %v1231 = vadd.f32 %v1222, %v1228
        %v1232 = vmax.f32 %v1230, 0.0
        %v1233 = vmax.f32 %v1231, 0.0
        %1236 = vrot.lane.b32.xlu0 %v1232, 32
        %v1237 = vpop.permute.xlu0 %1236
        %1238 = vrot.lane.b32.xlu0 %v1233, 32
        %v1239 = vpop.permute.xlu0 %1238
        %vm1242 = vcmask 523520
        %1243 = vst.msk [vmem:[%s318] sm:$0xff] %vm1242, %v1237
        %1244 = vst.msk [vmem:[%s318 + $0x8] sm:$0xff] %vm1242, %v1239
        %v1245 = vld [vmem:[%s313] sm:$0xff]
        %v1246 = vld [vmem:[%s313 + $0x8] sm:$0xff]
        %v1247 = vld [vmem:[%s5] sm:$0xff]
        %v1248 = vld [vmem:[%s5 + $0x8] sm:$0xff]
        %v1249 = vld [vmem:[%s5 + $0x10] sm:$0xff]
        %v1250 = vld [vmem:[%s5 + $0x18] sm:$0xff]
        %v1251 = vld [vmem:[%s313 + $0x1] sm:$0xff]
        %v1252 = vld [vmem:[%s313 + $0x9] sm:$0xff]
        %s1253 = scalar_lea.vmem %s5, 32
        %v1254 = vld [vmem:[%s1253] sm:$0xff]
        %v1255 = vld [vmem:[%s1253 + $0x8] sm:$0xff]
        %v1256 = vld [vmem:[%s1253 + $0x10] sm:$0xff]
        %v1257 = vld [vmem:[%s1253 + $0x18] sm:$0xff]
        %v1259 = vsel %vm332, %v1251, 0
        %v1262 = vsel %vm332, %v1252, 0
        %1264 = vmatprep.subr.mxu0 0.0
        %1265 = vmatpush1.msra.mxu0 %v1254
        %1266 = vmatprep.subr.mxu0 0.0
        %1267 = vmatpush1.msra.mxu0 %v1255
        %1268 = vmatprep.subr.mxu0 0.0
        %1269 = vmatpush1.msra.mxu0 %v1256
        %1270 = vmatprep.subr.mxu0 0.0
        %1271 = vmatpush1.msra.mxu0 %v1257
        %1272 = vmatprep.subr.mxu0 0.0
        %1273 = vmatpush1.msra.mxu0 0.0
        %1274 = vmatprep.subr.mxu0 0.0
        %1275 = vmatpush1.msra.mxu0 0.0
        %1276 = vmatprep.subr.mxu0 0.0
        %1277 = vmatpush1.msra.mxu0 0.0
        %1278 = vmatprep.subr.mxu0 0.0
        %1279 = vmatpush1.msra.mxu0 0.0
        %1280 = vmatprep.subr.mxu0 0.0
        %1281 = vmatpush1.msra.mxu0 0.0
        %1282 = vmatprep.subr.mxu0 0.0
        %1283 = vmatpush1.msra.mxu0 0.0
        %1284 = vmatprep.subr.mxu0 0.0
        %1285 = vmatpush1.msra.mxu0 0.0
        %1286 = vmatprep.subr.mxu0 0.0
        %1287 = vmatpush1.msra.mxu0 0.0
        %1288 = vmatprep.subr.mxu0 0.0
        %1289 = vmatpush1.msra.mxu0 0.0
        %1290 = vmatprep.subr.mxu0 0.0
        %1291 = vmatpush1.msra.mxu0 0.0
        %1292 = vmatprep.subr.mxu0 0.0
        %1293 = vmatpush1.msra.mxu0 0.0
        %1294 = vmatprep.subr.mxu0 0.0
        %1295 = vmatpush1.msra.mxu0 0.0
        %1296 = vmatprep.subr.mxu0 0.0
        %1297 = vmatpush1.msra.mxu0 0.0
        %1298 = vmatprep.subr.mxu0 0.0
        %1299 = vmatpush1.msra.mxu0 0.0
        %1300 = vmatprep.subr.mxu0 0.0
        %1301 = vmatpush1.msra.mxu0 0.0
        %1302 = vmatprep.subr.mxu0 0.0
        %1303 = vmatpush1.msra.mxu0 0.0
        %1304 = vmatprep.subr.mxu0 0.0
        %1305 = vmatpush1.msra.mxu0 0.0
        %1306 = vmatprep.subr.mxu0 0.0
        %1307 = vmatpush1.msra.mxu0 0.0
        %1308 = vmatprep.subr.mxu0 0.0
        %1309 = vmatpush1.msra.mxu0 0.0
        %1310 = vmatprep.subr.mxu0 0.0
        %1311 = vmatpush1.msra.mxu0 0.0
        %1312 = vmatprep.subr.mxu0 0.0
        %1313 = vmatpush1.msra.mxu0 0.0
        %1314 = vmatprep.subr.mxu0 0.0
        %1315 = vmatpush1.msra.mxu0 0.0
        %1316 = vmatprep.subr.mxu0 0.0
        %1317 = vmatpush1.msra.mxu0 0.0
        %1318 = vmatprep.subr.mxu0 0.0
        %1319 = vmatpush1.msra.mxu0 0.0
        %1320 = vmatprep.subr.mxu0 0.0
        %1321 = vmatpush1.msra.mxu0 0.0
        %1322 = vmatprep.subr.mxu0 0.0
        %1323 = vmatpush1.msra.mxu0 0.0
        %1324 = vmatprep.subr.mxu0 0.0
        %1325 = vmatpush1.msra.mxu0 0.0
        %1326 = vmatprep.subr.mxu0 0.0
        %1327 = vmatpush1.msra.mxu0 0.0
        %1328 = vmatprep.mubr.f32.mxu0 0.0
        %1329 = vmatmul.mubr.f32.gmra.mrb[0].mxu0 %v1259
        %v1330 = vpop.f32.mrb[0].mxu0
        %v1331 = vadd.f32 0.0, %v1330
        %v1332 = vpop.f32.mrb[0].mxu0
        %1333 = vmatprep.mubr.f32.mxu0 0.0
        %1334 = vmatmul.mubr.f32.gmra.mrb[0].mxu0 %v1262
        %v1335 = vpop.f32.mrb[0].mxu0
        %v1336 = vadd.f32 0.0, %v1335
        %v1337 = vpop.f32.mrb[0].mxu0
        %1338 = vdwg.mxu0
        %v1340 = vsel %vm332, %v1245, 0
        %v1343 = vsel %vm332, %v1246, 0
        %1345 = vmatprep.subr.mxu0 0.0
        %1346 = vmatpush1.msra.mxu0 %v1247
        %1347 = vmatprep.subr.mxu0 0.0
        %1348 = vmatpush1.msra.mxu0 %v1248
        %1349 = vmatprep.subr.mxu0 0.0
        %1350 = vmatpush1.msra.mxu0 %v1249
        %1351 = vmatprep.subr.mxu0 0.0
        %1352 = vmatpush1.msra.mxu0 %v1250
        %1353 = vmatprep.subr.mxu0 0.0
        %1354 = vmatpush1.msra.mxu0 0.0
        %1355 = vmatprep.subr.mxu0 0.0
        %1356 = vmatpush1.msra.mxu0 0.0
        %1357 = vmatprep.subr.mxu0 0.0
        %1358 = vmatpush1.msra.mxu0 0.0
        %1359 = vmatprep.subr.mxu0 0.0
        %1360 = vmatpush1.msra.mxu0 0.0
        %1361 = vmatprep.subr.mxu0 0.0
        %1362 = vmatpush1.msra.mxu0 0.0
        %1363 = vmatprep.subr.mxu0 0.0
        %1364 = vmatpush1.msra.mxu0 0.0
        %1365 = vmatprep.subr.mxu0 0.0
        %1366 = vmatpush1.msra.mxu0 0.0
        %1367 = vmatprep.subr.mxu0 0.0
        %1368 = vmatpush1.msra.mxu0 0.0
        %1369 = vmatprep.subr.mxu0 0.0
        %1370 = vmatpush1.msra.mxu0 0.0
        %1371 = vmatprep.subr.mxu0 0.0
        %1372 = vmatpush1.msra.mxu0 0.0
        %1373 = vmatprep.subr.mxu0 0.0
        %1374 = vmatpush1.msra.mxu0 0.0
        %1375 = vmatprep.subr.mxu0 0.0
        %1376 = vmatpush1.msra.mxu0 0.0
        %1377 = vmatprep.subr.mxu0 0.0
        %1378 = vmatpush1.msra.mxu0 0.0
        %1379 = vmatprep.subr.mxu0 0.0
        %1380 = vmatpush1.msra.mxu0 0.0
        %1381 = vmatprep.subr.mxu0 0.0
        %1382 = vmatpush1.msra.mxu0 0.0
        %1383 = vmatprep.subr.mxu0 0.0
        %1384 = vmatpush1.msra.mxu0 0.0
        %1385 = vmatprep.subr.mxu0 0.0
        %1386 = vmatpush1.msra.mxu0 0.0
        %1387 = vmatprep.subr.mxu0 0.0
        %1388 = vmatpush1.msra.mxu0 0.0
        %1389 = vmatprep.subr.mxu0 0.0
        %1390 = vmatpush1.msra.mxu0 0.0
        %1391 = vmatprep.subr.mxu0 0.0
        %1392 = vmatpush1.msra.mxu0 0.0
        %1393 = vmatprep.subr.mxu0 0.0
        %1394 = vmatpush1.msra.mxu0 0.0
        %1395 = vmatprep.subr.mxu0 0.0
        %1396 = vmatpush1.msra.mxu0 0.0
        %1397 = vmatprep.subr.mxu0 0.0
        %1398 = vmatpush1.msra.mxu0 0.0
        %1399 = vmatprep.subr.mxu0 0.0
        %1400 = vmatpush1.msra.mxu0 0.0
        %1401 = vmatprep.subr.mxu0 0.0
        %1402 = vmatpush1.msra.mxu0 0.0
        %1403 = vmatprep.subr.mxu0 0.0
        %1404 = vmatpush1.msra.mxu0 0.0
        %1405 = vmatprep.subr.mxu0 0.0
        %1406 = vmatpush1.msra.mxu0 0.0
        %1407 = vmatprep.subr.mxu0 0.0
        %1408 = vmatpush1.msra.mxu0 0.0
        %1409 = vmatprep.mubr.f32.mxu0 0.0
        %1410 = vmatmul.mubr.f32.gmra.mrb[0].mxu0 %v1340
        %v1411 = vpop.f32.mrb[0].mxu0
        %v1412 = vadd.f32 %v1331, %v1411
        %v1413 = vpop.f32.mrb[0].mxu0
        %1414 = vmatprep.mubr.f32.mxu0 0.0
        %1415 = vmatmul.mubr.f32.gmra.mrb[0].mxu0 %v1343
        %v1416 = vpop.f32.mrb[0].mxu0
        %v1417 = vadd.f32 %v1336, %v1416
        %v1418 = vpop.f32.mrb[0].mxu0
        %1419 = vdwg.mxu0
        %v1420 = vld [vmem:[%s313 + $0x2] sm:$0xff]
        %v1421 = vld [vmem:[%s313 + $0xa] sm:$0xff]
        %s1422 = scalar_lea.vmem %s5, 64
        %v1423 = vld [vmem:[%s1422] sm:$0xff]
        %v1424 = vld [vmem:[%s1422 + $0x8] sm:$0xff]
        %v1425 = vld [vmem:[%s1422 + $0x10] sm:$0xff]
        %v1426 = vld [vmem:[%s1422 + $0x18] sm:$0xff]
        %v1428 = vsel %vm332, %v1420, 0
        %v1431 = vsel %vm332, %v1421, 0
        %1433 = vmatprep.subr.mxu0 0.0
        %1434 = vmatpush1.msra.mxu0 %v1423
        %1435 = vmatprep.subr.mxu0 0.0
        %1436 = vmatpush1.msra.mxu0 %v1424
        %1437 = vmatprep.subr.mxu0 0.0
        %1438 = vmatpush1.msra.mxu0 %v1425
        %1439 = vmatprep.subr.mxu0 0.0
        %1440 = vmatpush1.msra.mxu0 %v1426
        %1441 = vmatprep.subr.mxu0 0.0
        %1442 = vmatpush1.msra.mxu0 0.0
        %1443 = vmatprep.subr.mxu0 0.0
        %1444 = vmatpush1.msra.mxu0 0.0
        %1445 = vmatprep.subr.mxu0 0.0
        %1446 = vmatpush1.msra.mxu0 0.0
        %1447 = vmatprep.subr.mxu0 0.0
        %1448 = vmatpush1.msra.mxu0 0.0
        %1449 = vmatprep.subr.mxu0 0.0
        %1450 = vmatpush1.msra.mxu0 0.0
        %1451 = vmatprep.subr.mxu0 0.0
        %1452 = vmatpush1.msra.mxu0 0.0
        %1453 = vmatprep.subr.mxu0 0.0
        %1454 = vmatpush1.msra.mxu0 0.0
        %1455 = vmatprep.subr.mxu0 0.0
        %1456 = vmatpush1.msra.mxu0 0.0
        %1457 = vmatprep.subr.mxu0 0.0
        %1458 = vmatpush1.msra.mxu0 0.0
        %1459 = vmatprep.subr.mxu0 0.0
        %1460 = vmatpush1.msra.mxu0 0.0
        %1461 = vmatprep.subr.mxu0 0.0
        %1462 = vmatpush1.msra.mxu0 0.0
        %1463 = vmatprep.subr.mxu0 0.0
        %1464 = vmatpush1.msra.mxu0 0.0
        %1465 = vmatprep.subr.mxu0 0.0
        %1466 = vmatpush1.msra.mxu0 0.0
        %1467 = vmatprep.subr.mxu0 0.0
        %1468 = vmatpush1.msra.mxu0 0.0
        %1469 = vmatprep.subr.mxu0 0.0
        %1470 = vmatpush1.msra.mxu0 0.0
        %1471 = vmatprep.subr.mxu0 0.0
        %1472 = vmatpush1.msra.mxu0 0.0
        %1473 = vmatprep.subr.mxu0 0.0
        %1474 = vmatpush1.msra.mxu0 0.0
        %1475 = vmatprep.subr.mxu0 0.0
        %1476 = vmatpush1.msra.mxu0 0.0
        %1477 = vmatprep.subr.mxu0 0.0
        %1478 = vmatpush1.msra.mxu0 0.0
        %1479 = vmatprep.subr.mxu0 0.0
        %1480 = vmatpush1.msra.mxu0 0.0
        %1481 = vmatprep.subr.mxu0 0.0
        %1482 = vmatpush1.msra.mxu0 0.0
        %1483 = vmatprep.subr.mxu0 0.0
        %1484 = vmatpush1.msra.mxu0 0.0
        %1485 = vmatprep.subr.mxu0 0.0
        %1486 = vmatpush1.msra.mxu0 0.0
        %1487 = vmatprep.subr.mxu0 0.0
        %1488 = vmatpush1.msra.mxu0 0.0
        %1489 = vmatprep.subr.mxu0 0.0
        %1490 = vmatpush1.msra.mxu0 0.0
        %1491 = vmatprep.subr.mxu0 0.0
        %1492 = vmatpush1.msra.mxu0 0.0
        %1493 = vmatprep.subr.mxu0 0.0
        %1494 = vmatpush1.msra.mxu0 0.0
        %1495 = vmatprep.subr.mxu0 0.0
        %1496 = vmatpush1.msra.mxu0 0.0
        %1497 = vmatprep.mubr.f32.mxu0 0.0
        %1498 = vmatmul.mubr.f32.gmra.mrb[0].mxu0 %v1428
        %v1499 = vpop.f32.mrb[0].mxu0
        %v1500 = vadd.f32 0.0, %v1499
        %v1501 = vpop.f32.mrb[0].mxu0
        %1502 = vmatprep.mubr.f32.mxu0 0.0
        %1503 = vmatmul.mubr.f32.gmra.mrb[0].mxu0 %v1431
        %v1504 = vpop.f32.mrb[0].mxu0
        %v1505 = vadd.f32 0.0, %v1504
        %v1506 = vpop.f32.mrb[0].mxu0
        %1507 = vdwg.mxu0
        %v1508 = vadd.f32 %v1412, %v1500
        %v1509 = vadd.f32 %v1417, %v1505
        %v1510 = vld [vmem:[%s313 + $0x3] sm:$0xff]
        %v1511 = vld [vmem:[%s313 + $0xb] sm:$0xff]
        %s1512 = scalar_lea.vmem %s5, 96
        %v1513 = vld [vmem:[%s1512] sm:$0xff]
        %v1514 = vld [vmem:[%s1512 + $0x8] sm:$0xff]
        %v1515 = vld [vmem:[%s1512 + $0x10] sm:$0xff]
        %v1516 = vld [vmem:[%s1512 + $0x18] sm:$0xff]
        %v1518 = vsel %vm332, %v1510, 0
        %v1521 = vsel %vm332, %v1511, 0
        %1523 = vmatprep.subr.mxu0 0.0
        %1524 = vmatpush1.msra.mxu0 %v1513
        %1525 = vmatprep.subr.mxu0 0.0
        %1526 = vmatpush1.msra.mxu0 %v1514
        %1527 = vmatprep.subr.mxu0 0.0
        %1528 = vmatpush1.msra.mxu0 %v1515
        %1529 = vmatprep.subr.mxu0 0.0
        %1530 = vmatpush1.msra.mxu0 %v1516
        %1531 = vmatprep.subr.mxu0 0.0
        %1532 = vmatpush1.msra.mxu0 0.0
        %1533 = vmatprep.subr.mxu0 0.0
        %1534 = vmatpush1.msra.mxu0 0.0
        %1535 = vmatprep.subr.mxu0 0.0
        %1536 = vmatpush1.msra.mxu0 0.0
        %1537 = vmatprep.subr.mxu0 0.0
        %1538 = vmatpush1.msra.mxu0 0.0
        %1539 = vmatprep.subr.mxu0 0.0
        %1540 = vmatpush1.msra.mxu0 0.0
        %1541 = vmatprep.subr.mxu0 0.0
        %1542 = vmatpush1.msra.mxu0 0.0
        %1543 = vmatprep.subr.mxu0 0.0
        %1544 = vmatpush1.msra.mxu0 0.0
        %1545 = vmatprep.subr.mxu0 0.0
        %1546 = vmatpush1.msra.mxu0 0.0
        %1547 = vmatprep.subr.mxu0 0.0
        %1548 = vmatpush1.msra.mxu0 0.0
        %1549 = vmatprep.subr.mxu0 0.0
        %1550 = vmatpush1.msra.mxu0 0.0
        %1551 = vmatprep.subr.mxu0 0.0
        %1552 = vmatpush1.msra.mxu0 0.0
        %1553 = vmatprep.subr.mxu0 0.0
        %1554 = vmatpush1.msra.mxu0 0.0
        %1555 = vmatprep.subr.mxu0 0.0
        %1556 = vmatpush1.msra.mxu0 0.0
        %1557 = vmatprep.subr.mxu0 0.0
        %1558 = vmatpush1.msra.mxu0 0.0
        %1559 = vmatprep.subr.mxu0 0.0
        %1560 = vmatpush1.msra.mxu0 0.0
        %1561 = vmatprep.subr.mxu0 0.0
        %1562 = vmatpush1.msra.mxu0 0.0
        %1563 = vmatprep.subr.mxu0 0.0
        %1564 = vmatpush1.msra.mxu0 0.0
        %1565 = vmatprep.subr.mxu0 0.0
        %1566 = vmatpush1.msra.mxu0 0.0
        %1567 = vmatprep.subr.mxu0 0.0
        %1568 = vmatpush1.msra.mxu0 0.0
        %1569 = vmatprep.subr.mxu0 0.0
        %1570 = vmatpush1.msra.mxu0 0.0
        %1571 = vmatprep.subr.mxu0 0.0
        %1572 = vmatpush1.msra.mxu0 0.0
        %1573 = vmatprep.subr.mxu0 0.0
        %1574 = vmatpush1.msra.mxu0 0.0
        %1575 = vmatprep.subr.mxu0 0.0
        %1576 = vmatpush1.msra.mxu0 0.0
        %1577 = vmatprep.subr.mxu0 0.0
        %1578 = vmatpush1.msra.mxu0 0.0
        %1579 = vmatprep.subr.mxu0 0.0
        %1580 = vmatpush1.msra.mxu0 0.0
        %1581 = vmatprep.subr.mxu0 0.0
        %1582 = vmatpush1.msra.mxu0 0.0
        %1583 = vmatprep.subr.mxu0 0.0
        %1584 = vmatpush1.msra.mxu0 0.0
        %1585 = vmatprep.subr.mxu0 0.0
        %1586 = vmatpush1.msra.mxu0 0.0
        %1587 = vmatprep.mubr.f32.mxu0 0.0
        %1588 = vmatmul.mubr.f32.gmra.mrb[0].mxu0 %v1518
        %v1589 = vpop.f32.mrb[0].mxu0
        %v1590 = vadd.f32 0.0, %v1589
        %v1591 = vpop.f32.mrb[0].mxu0
        %1592 = vmatprep.mubr.f32.mxu0 0.0
        %1593 = vmatmul.mubr.f32.gmra.mrb[0].mxu0 %v1521
        %v1594 = vpop.f32.mrb[0].mxu0
        %v1595 = vadd.f32 0.0, %v1594
        %v1596 = vpop.f32.mrb[0].mxu0
        %1597 = vdwg.mxu0
        %v1598 = vadd.f32 %v1508, %v1590
        %v1599 = vadd.f32 %v1509, %v1595
        %v1600 = vld [vmem:[%s313 + $0x4] sm:$0xff]
        %v1601 = vld [vmem:[%s313 + $0xc] sm:$0xff]
        %s1602 = scalar_lea.vmem %s5, 128
        %v1603 = vld [vmem:[%s1602] sm:$0xff]
        %v1604 = vld [vmem:[%s1602 + $0x8] sm:$0xff]
        %v1605 = vld [vmem:[%s1602 + $0x10] sm:$0xff]
        %v1606 = vld [vmem:[%s1602 + $0x18] sm:$0xff]
        %v1608 = vsel %vm332, %v1600, 0
        %v1611 = vsel %vm332, %v1601, 0
        %1613 = vmatprep.subr.mxu0 0.0
        %1614 = vmatpush1.msra.mxu0 %v1603
        %1615 = vmatprep.subr.mxu0 0.0
        %1616 = vmatpush1.msra.mxu0 %v1604
        %1617 = vmatprep.subr.mxu0 0.0
        %1618 = vmatpush1.msra.mxu0 %v1605
        %1619 = vmatprep.subr.mxu0 0.0
        %1620 = vmatpush1.msra.mxu0 %v1606
        %1621 = vmatprep.subr.mxu0 0.0
        %1622 = vmatpush1.msra.mxu0 0.0
        %1623 = vmatprep.subr.mxu0 0.0
        %1624 = vmatpush1.msra.mxu0 0.0
        %1625 = vmatprep.subr.mxu0 0.0
        %1626 = vmatpush1.msra.mxu0 0.0
        %1627 = vmatprep.subr.mxu0 0.0
        %1628 = vmatpush1.msra.mxu0 0.0
        %1629 = vmatprep.subr.mxu0 0.0
        %1630 = vmatpush1.msra.mxu0 0.0
        %1631 = vmatprep.subr.mxu0 0.0
        %1632 = vmatpush1.msra.mxu0 0.0
        %1633 = vmatprep.subr.mxu0 0.0
        %1634 = vmatpush1.msra.mxu0 0.0
        %1635 = vmatprep.subr.mxu0 0.0
        %1636 = vmatpush1.msra.mxu0 0.0
        %1637 = vmatprep.subr.mxu0 0.0
        %1638 = vmatpush1.msra.mxu0 0.0
        %1639 = vmatprep.subr.mxu0 0.0
        %1640 = vmatpush1.msra.mxu0 0.0
        %1641 = vmatprep.subr.mxu0 0.0
        %1642 = vmatpush1.msra.mxu0 0.0
        %1643 = vmatprep.subr.mxu0 0.0
        %1644 = vmatpush1.msra.mxu0 0.0
        %1645 = vmatprep.subr.mxu0 0.0
        %1646 = vmatpush1.msra.mxu0 0.0
        %1647 = vmatprep.subr.mxu0 0.0
        %1648 = vmatpush1.msra.mxu0 0.0
        %1649 = vmatprep.subr.mxu0 0.0
        %1650 = vmatpush1.msra.mxu0 0.0
        %1651 = vmatprep.subr.mxu0 0.0
        %1652 = vmatpush1.msra.mxu0 0.0
        %1653 = vmatprep.subr.mxu0 0.0
        %1654 = vmatpush1.msra.mxu0 0.0
        %1655 = vmatprep.subr.mxu0 0.0
        %1656 = vmatpush1.msra.mxu0 0.0
        %1657 = vmatprep.subr.mxu0 0.0
        %1658 = vmatpush1.msra.mxu0 0.0
        %1659 = vmatprep.subr.mxu0 0.0
        %1660 = vmatpush1.msra.mxu0 0.0
        %1661 = vmatprep.subr.mxu0 0.0
        %1662 = vmatpush1.msra.mxu0 0.0
        %1663 = vmatprep.subr.mxu0 0.0
        %1664 = vmatpush1.msra.mxu0 0.0
        %1665 = vmatprep.subr.mxu0 0.0
        %1666 = vmatpush1.msra.mxu0 0.0
        %1667 = vmatprep.subr.mxu0 0.0
        %1668 = vmatpush1.msra.mxu0 0.0
        %1669 = vmatprep.subr.mxu0 0.0
        %1670 = vmatpush1.msra.mxu0 0.0
        %1671 = vmatprep.subr.mxu0 0.0
        %1672 = vmatpush1.msra.mxu0 0.0
        %1673 = vmatprep.subr.mxu0 0.0
        %1674 = vmatpush1.msra.mxu0 0.0
        %1675 = vmatprep.subr.mxu0 0.0
        %1676 = vmatpush1.msra.mxu0 0.0
        %1677 = vmatprep.mubr.f32.mxu0 0.0
        %1678 = vmatmul.mubr.f32.gmra.mrb[0].mxu0 %v1608
        %v1679 = vpop.f32.mrb[0].mxu0
        %v1680 = vadd.f32 0.0, %v1679
        %v1681 = vpop.f32.mrb[0].mxu0
        %1682 = vmatprep.mubr.f32.mxu0 0.0
        %1683 = vmatmul.mubr.f32.gmra.mrb[0].mxu0 %v1611
        %v1684 = vpop.f32.mrb[0].mxu0
        %v1685 = vadd.f32 0.0, %v1684
        %v1686 = vpop.f32.mrb[0].mxu0
        %1687 = vdwg.mxu0
        %v1688 = vadd.f32 %v1598, %v1680
        %v1689 = vadd.f32 %v1599, %v1685
        %v1690 = vld [vmem:[%s313 + $0x5] sm:$0xff]
        %v1691 = vld [vmem:[%s313 + $0xd] sm:$0xff]
        %s1692 = scalar_lea.vmem %s5, 160
        %v1693 = vld [vmem:[%s1692] sm:$0xff]
        %v1694 = vld [vmem:[%s1692 + $0x8] sm:$0xff]
        %v1695 = vld [vmem:[%s1692 + $0x10] sm:$0xff]
        %v1696 = vld [vmem:[%s1692 + $0x18] sm:$0xff]
        %v1698 = vsel %vm332, %v1690, 0
        %v1701 = vsel %vm332, %v1691, 0
        %1703 = vmatprep.subr.mxu0 0.0
        %1704 = vmatpush1.msra.mxu0 %v1693
        %1705 = vmatprep.subr.mxu0 0.0
        %1706 = vmatpush1.msra.mxu0 %v1694
        %1707 = vmatprep.subr.mxu0 0.0
        %1708 = vmatpush1.msra.mxu0 %v1695
        %1709 = vmatprep.subr.mxu0 0.0
        %1710 = vmatpush1.msra.mxu0 %v1696
        %1711 = vmatprep.subr.mxu0 0.0
        %1712 = vmatpush1.msra.mxu0 0.0
        %1713 = vmatprep.subr.mxu0 0.0
        %1714 = vmatpush1.msra.mxu0 0.0
        %1715 = vmatprep.subr.mxu0 0.0
        %1716 = vmatpush1.msra.mxu0 0.0
        %1717 = vmatprep.subr.mxu0 0.0
        %1718 = vmatpush1.msra.mxu0 0.0
        %1719 = vmatprep.subr.mxu0 0.0
        %1720 = vmatpush1.msra.mxu0 0.0
        %1721 = vmatprep.subr.mxu0 0.0
        %1722 = vmatpush1.msra.mxu0 0.0
        %1723 = vmatprep.subr.mxu0 0.0
        %1724 = vmatpush1.msra.mxu0 0.0
        %1725 = vmatprep.subr.mxu0 0.0
        %1726 = vmatpush1.msra.mxu0 0.0
        %1727 = vmatprep.subr.mxu0 0.0
        %1728 = vmatpush1.msra.mxu0 0.0
        %1729 = vmatprep.subr.mxu0 0.0
        %1730 = vmatpush1.msra.mxu0 0.0
        %1731 = vmatprep.subr.mxu0 0.0
        %1732 = vmatpush1.msra.mxu0 0.0
        %1733 = vmatprep.subr.mxu0 0.0
        %1734 = vmatpush1.msra.mxu0 0.0
        %1735 = vmatprep.subr.mxu0 0.0
        %1736 = vmatpush1.msra.mxu0 0.0
        %1737 = vmatprep.subr.mxu0 0.0
        %1738 = vmatpush1.msra.mxu0 0.0
        %1739 = vmatprep.subr.mxu0 0.0
        %1740 = vmatpush1.msra.mxu0 0.0
        %1741 = vmatprep.subr.mxu0 0.0
        %1742 = vmatpush1.msra.mxu0 0.0
        %1743 = vmatprep.subr.mxu0 0.0
        %1744 = vmatpush1.msra.mxu0 0.0
        %1745 = vmatprep.subr.mxu0 0.0
        %1746 = vmatpush1.msra.mxu0 0.0
        %1747 = vmatprep.subr.mxu0 0.0
        %1748 = vmatpush1.msra.mxu0 0.0
        %1749 = vmatprep.subr.mxu0 0.0
        %1750 = vmatpush1.msra.mxu0 0.0
        %1751 = vmatprep.subr.mxu0 0.0
        %1752 = vmatpush1.msra.mxu0 0.0
        %1753 = vmatprep.subr.mxu0 0.0
        %1754 = vmatpush1.msra.mxu0 0.0
        %1755 = vmatprep.subr.mxu0 0.0
        %1756 = vmatpush1.msra.mxu0 0.0
        %1757 = vmatprep.subr.mxu0 0.0
        %1758 = vmatpush1.msra.mxu0 0.0
        %1759 = vmatprep.subr.mxu0 0.0
        %1760 = vmatpush1.msra.mxu0 0.0
        %1761 = vmatprep.subr.mxu0 0.0
        %1762 = vmatpush1.msra.mxu0 0.0
        %1763 = vmatprep.subr.mxu0 0.0
        %1764 = vmatpush1.msra.mxu0 0.0
        %1765 = vmatprep.subr.mxu0 0.0
        %1766 = vmatpush1.msra.mxu0 0.0
        %1767 = vmatprep.mubr.f32.mxu0 0.0
        %1768 = vmatmul.mubr.f32.gmra.mrb[0].mxu0 %v1698
        %v1769 = vpop.f32.mrb[0].mxu0
        %v1770 = vadd.f32 0.0, %v1769
        %v1771 = vpop.f32.mrb[0].mxu0
        %1772 = vmatprep.mubr.f32.mxu0 0.0
        %1773 = vmatmul.mubr.f32.gmra.mrb[0].mxu0 %v1701
        %v1774 = vpop.f32.mrb[0].mxu0
        %v1775 = vadd.f32 0.0, %v1774
        %v1776 = vpop.f32.mrb[0].mxu0
        %1777 = vdwg.mxu0
        %v1778 = vadd.f32 %v1688, %v1770
        %v1779 = vadd.f32 %v1689, %v1775
        %v1780 = vld [vmem:[%s313 + $0x6] sm:$0xff]
        %v1781 = vld [vmem:[%s313 + $0xe] sm:$0xff]
        %s1782 = scalar_lea.vmem %s5, 192
        %v1783 = vld [vmem:[%s1782] sm:$0xff]
        %v1784 = vld [vmem:[%s1782 + $0x8] sm:$0xff]
        %v1785 = vld [vmem:[%s1782 + $0x10] sm:$0xff]
        %v1786 = vld [vmem:[%s1782 + $0x18] sm:$0xff]
        %v1788 = vsel %vm332, %v1780, 0
        %v1791 = vsel %vm332, %v1781, 0
        %1793 = vmatprep.subr.mxu0 0.0
        %1794 = vmatpush1.msra.mxu0 %v1783
        %1795 = vmatprep.subr.mxu0 0.0
        %1796 = vmatpush1.msra.mxu0 %v1784
        %1797 = vmatprep.subr.mxu0 0.0
        %1798 = vmatpush1.msra.mxu0 %v1785
        %1799 = vmatprep.subr.mxu0 0.0
        %1800 = vmatpush1.msra.mxu0 %v1786
        %1801 = vmatprep.subr.mxu0 0.0
        %1802 = vmatpush1.msra.mxu0 0.0
        %1803 = vmatprep.subr.mxu0 0.0
        %1804 = vmatpush1.msra.mxu0 0.0
        %1805 = vmatprep.subr.mxu0 0.0
        %1806 = vmatpush1.msra.mxu0 0.0
        %1807 = vmatprep.subr.mxu0 0.0
        %1808 = vmatpush1.msra.mxu0 0.0
        %1809 = vmatprep.subr.mxu0 0.0
        %1810 = vmatpush1.msra.mxu0 0.0
        %1811 = vmatprep.subr.mxu0 0.0
        %1812 = vmatpush1.msra.mxu0 0.0
        %1813 = vmatprep.subr.mxu0 0.0
        %1814 = vmatpush1.msra.mxu0 0.0
        %1815 = vmatprep.subr.mxu0 0.0
        %1816 = vmatpush1.msra.mxu0 0.0
        %1817 = vmatprep.subr.mxu0 0.0
        %1818 = vmatpush1.msra.mxu0 0.0
        %1819 = vmatprep.subr.mxu0 0.0
        %1820 = vmatpush1.msra.mxu0 0.0
        %1821 = vmatprep.subr.mxu0 0.0
        %1822 = vmatpush1.msra.mxu0 0.0
        %1823 = vmatprep.subr.mxu0 0.0
        %1824 = vmatpush1.msra.mxu0 0.0
        %1825 = vmatprep.subr.mxu0 0.0
        %1826 = vmatpush1.msra.mxu0 0.0
        %1827 = vmatprep.subr.mxu0 0.0
        %1828 = vmatpush1.msra.mxu0 0.0
        %1829 = vmatprep.subr.mxu0 0.0
        %1830 = vmatpush1.msra.mxu0 0.0
        %1831 = vmatprep.subr.mxu0 0.0
        %1832 = vmatpush1.msra.mxu0 0.0
        %1833 = vmatprep.subr.mxu0 0.0
        %1834 = vmatpush1.msra.mxu0 0.0
        %1835 = vmatprep.subr.mxu0 0.0
        %1836 = vmatpush1.msra.mxu0 0.0
        %1837 = vmatprep.subr.mxu0 0.0
        %1838 = vmatpush1.msra.mxu0 0.0
        %1839 = vmatprep.subr.mxu0 0.0
        %1840 = vmatpush1.msra.mxu0 0.0
        %1841 = vmatprep.subr.mxu0 0.0
        %1842 = vmatpush1.msra.mxu0 0.0
        %1843 = vmatprep.subr.mxu0 0.0
        %1844 = vmatpush1.msra.mxu0 0.0
        %1845 = vmatprep.subr.mxu0 0.0
        %1846 = vmatpush1.msra.mxu0 0.0
        %1847 = vmatprep.subr.mxu0 0.0
        %1848 = vmatpush1.msra.mxu0 0.0
        %1849 = vmatprep.subr.mxu0 0.0
        %1850 = vmatpush1.msra.mxu0 0.0
        %1851 = vmatprep.subr.mxu0 0.0
        %1852 = vmatpush1.msra.mxu0 0.0
        %1853 = vmatprep.subr.mxu0 0.0
        %1854 = vmatpush1.msra.mxu0 0.0
        %1855 = vmatprep.subr.mxu0 0.0
        %1856 = vmatpush1.msra.mxu0 0.0
        %1857 = vmatprep.mubr.f32.mxu0 0.0
        %1858 = vmatmul.mubr.f32.gmra.mrb[0].mxu0 %v1788
        %v1859 = vpop.f32.mrb[0].mxu0
        %v1860 = vadd.f32 0.0, %v1859
        %v1861 = vpop.f32.mrb[0].mxu0
        %1862 = vmatprep.mubr.f32.mxu0 0.0
        %1863 = vmatmul.mubr.f32.gmra.mrb[0].mxu0 %v1791
        %v1864 = vpop.f32.mrb[0].mxu0
        %v1865 = vadd.f32 0.0, %v1864
        %v1866 = vpop.f32.mrb[0].mxu0
        %1867 = vdwg.mxu0
        %v1868 = vadd.f32 %v1778, %v1860
        %v1869 = vadd.f32 %v1779, %v1865
        %v1870 = vld [vmem:[%s313 + $0x7] sm:$0xff]
        %v1871 = vld [vmem:[%s313 + $0xf] sm:$0xff]
        %s1872 = scalar_lea.vmem %s5, 224
        %v1873 = vld [vmem:[%s1872] sm:$0xff]
        %v1874 = vld [vmem:[%s1872 + $0x8] sm:$0xff]
        %v1875 = vld [vmem:[%s1872 + $0x10] sm:$0xff]
        %v1876 = vld [vmem:[%s1872 + $0x18] sm:$0xff]
        %v1878 = vsel %vm332, %v1870, 0
        %v1881 = vsel %vm332, %v1871, 0
        %1883 = vmatprep.subr.mxu0 0.0
        %1884 = vmatpush1.msra.mxu0 %v1873
        %1885 = vmatprep.subr.mxu0 0.0
        %1886 = vmatpush1.msra.mxu0 %v1874
        %1887 = vmatprep.subr.mxu0 0.0
        %1888 = vmatpush1.msra.mxu0 %v1875
        %1889 = vmatprep.subr.mxu0 0.0
        %1890 = vmatpush1.msra.mxu0 %v1876
        %1891 = vmatprep.subr.mxu0 0.0
        %1892 = vmatpush1.msra.mxu0 0.0
        %1893 = vmatprep.subr.mxu0 0.0
        %1894 = vmatpush1.msra.mxu0 0.0
        %1895 = vmatprep.subr.mxu0 0.0
        %1896 = vmatpush1.msra.mxu0 0.0
        %1897 = vmatprep.subr.mxu0 0.0
        %1898 = vmatpush1.msra.mxu0 0.0
        %1899 = vmatprep.subr.mxu0 0.0
        %1900 = vmatpush1.msra.mxu0 0.0
        %1901 = vmatprep.subr.mxu0 0.0
        %1902 = vmatpush1.msra.mxu0 0.0
        %1903 = vmatprep.subr.mxu0 0.0
        %1904 = vmatpush1.msra.mxu0 0.0
        %1905 = vmatprep.subr.mxu0 0.0
        %1906 = vmatpush1.msra.mxu0 0.0
        %1907 = vmatprep.subr.mxu0 0.0
        %1908 = vmatpush1.msra.mxu0 0.0
        %1909 = vmatprep.subr.mxu0 0.0
        %1910 = vmatpush1.msra.mxu0 0.0
        %1911 = vmatprep.subr.mxu0 0.0
        %1912 = vmatpush1.msra.mxu0 0.0
        %1913 = vmatprep.subr.mxu0 0.0
        %1914 = vmatpush1.msra.mxu0 0.0
        %1915 = vmatprep.subr.mxu0 0.0
        %1916 = vmatpush1.msra.mxu0 0.0
        %1917 = vmatprep.subr.mxu0 0.0
        %1918 = vmatpush1.msra.mxu0 0.0
        %1919 = vmatprep.subr.mxu0 0.0
        %1920 = vmatpush1.msra.mxu0 0.0
        %1921 = vmatprep.subr.mxu0 0.0
        %1922 = vmatpush1.msra.mxu0 0.0
        %1923 = vmatprep.subr.mxu0 0.0
        %1924 = vmatpush1.msra.mxu0 0.0
        %1925 = vmatprep.subr.mxu0 0.0
        %1926 = vmatpush1.msra.mxu0 0.0
        %1927 = vmatprep.subr.mxu0 0.0
        %1928 = vmatpush1.msra.mxu0 0.0
        %1929 = vmatprep.subr.mxu0 0.0
        %1930 = vmatpush1.msra.mxu0 0.0
        %1931 = vmatprep.subr.mxu0 0.0
        %1932 = vmatpush1.msra.mxu0 0.0
        %1933 = vmatprep.subr.mxu0 0.0
        %1934 = vmatpush1.msra.mxu0 0.0
        %1935 = vmatprep.subr.mxu0 0.0
        %1936 = vmatpush1.msra.mxu0 0.0
        %1937 = vmatprep.subr.mxu0 0.0
        %1938 = vmatpush1.msra.mxu0 0.0
        %1939 = vmatprep.subr.mxu0 0.0
        %1940 = vmatpush1.msra.mxu0 0.0
        %1941 = vmatprep.subr.mxu0 0.0
        %1942 = vmatpush1.msra.mxu0 0.0
        %1943 = vmatprep.subr.mxu0 0.0
        %1944 = vmatpush1.msra.mxu0 0.0
        %1945 = vmatprep.subr.mxu0 0.0
        %1946 = vmatpush1.msra.mxu0 0.0
        %1947 = vmatprep.mubr.f32.mxu0 0.0
        %1948 = vmatmul.mubr.f32.gmra.mrb[0].mxu0 %v1878
        %v1949 = vpop.f32.mrb[0].mxu0
        %v1950 = vadd.f32 0.0, %v1949
        %v1951 = vpop.f32.mrb[0].mxu0
        %1952 = vmatprep.mubr.f32.mxu0 0.0
        %1953 = vmatmul.mubr.f32.gmra.mrb[0].mxu0 %v1881
        %v1954 = vpop.f32.mrb[0].mxu0
        %v1955 = vadd.f32 0.0, %v1954
        %v1956 = vpop.f32.mrb[0].mxu0
        %1957 = vdwg.mxu0
        %v1958 = vadd.f32 %v1868, %v1950
        %v1959 = vadd.f32 %v1869, %v1955
        %v1960 = vld [vmem:[%s313 + $0x8] sm:$0xff]
        %v1961 = vld [vmem:[%s313 + $0x10] sm:$0xff]
        %s1962 = scalar_lea.vmem %s5, 256
        %v1963 = vld [vmem:[%s1962] sm:$0xff]
        %v1964 = vld [vmem:[%s1962 + $0x8] sm:$0xff]
        %v1965 = vld [vmem:[%s1962 + $0x10] sm:$0xff]
        %v1966 = vld [vmem:[%s1962 + $0x18] sm:$0xff]
        %v1968 = vsel %vm332, %v1960, 0
        %v1971 = vsel %vm332, %v1961, 0
        %1973 = vmatprep.subr.mxu0 0.0
        %1974 = vmatpush1.msra.mxu0 %v1963
        %1975 = vmatprep.subr.mxu0 0.0
        %1976 = vmatpush1.msra.mxu0 %v1964
        %1977 = vmatprep.subr.mxu0 0.0
        %1978 = vmatpush1.msra.mxu0 %v1965
        %1979 = vmatprep.subr.mxu0 0.0
        %1980 = vmatpush1.msra.mxu0 %v1966
        %1981 = vmatprep.subr.mxu0 0.0
        %1982 = vmatpush1.msra.mxu0 0.0
        %1983 = vmatprep.subr.mxu0 0.0
        %1984 = vmatpush1.msra.mxu0 0.0
        %1985 = vmatprep.subr.mxu0 0.0
        %1986 = vmatpush1.msra.mxu0 0.0
        %1987 = vmatprep.subr.mxu0 0.0
        %1988 = vmatpush1.msra.mxu0 0.0
        %1989 = vmatprep.subr.mxu0 0.0
        %1990 = vmatpush1.msra.mxu0 0.0
        %1991 = vmatprep.subr.mxu0 0.0
        %1992 = vmatpush1.msra.mxu0 0.0
        %1993 = vmatprep.subr.mxu0 0.0
        %1994 = vmatpush1.msra.mxu0 0.0
        %1995 = vmatprep.subr.mxu0 0.0
        %1996 = vmatpush1.msra.mxu0 0.0
        %1997 = vmatprep.subr.mxu0 0.0
        %1998 = vmatpush1.msra.mxu0 0.0
        %1999 = vmatprep.subr.mxu0 0.0
        %2000 = vmatpush1.msra.mxu0 0.0
        %2001 = vmatprep.subr.mxu0 0.0
        %2002 = vmatpush1.msra.mxu0 0.0
        %2003 = vmatprep.subr.mxu0 0.0
        %2004 = vmatpush1.msra.mxu0 0.0
        %2005 = vmatprep.subr.mxu0 0.0
        %2006 = vmatpush1.msra.mxu0 0.0
        %2007 = vmatprep.subr.mxu0 0.0
        %2008 = vmatpush1.msra.mxu0 0.0
        %2009 = vmatprep.subr.mxu0 0.0
        %2010 = vmatpush1.msra.mxu0 0.0
        %2011 = vmatprep.subr.mxu0 0.0
        %2012 = vmatpush1.msra.mxu0 0.0
        %2013 = vmatprep.subr.mxu0 0.0
        %2014 = vmatpush1.msra.mxu0 0.0
        %2015 = vmatprep.subr.mxu0 0.0
        %2016 = vmatpush1.msra.mxu0 0.0
        %2017 = vmatprep.subr.mxu0 0.0
        %2018 = vmatpush1.msra.mxu0 0.0
        %2019 = vmatprep.subr.mxu0 0.0
        %2020 = vmatpush1.msra.mxu0 0.0
        %2021 = vmatprep.subr.mxu0 0.0
        %2022 = vmatpush1.msra.mxu0 0.0
        %2023 = vmatprep.subr.mxu0 0.0
        %2024 = vmatpush1.msra.mxu0 0.0
        %2025 = vmatprep.subr.mxu0 0.0
        %2026 = vmatpush1.msra.mxu0 0.0
        %2027 = vmatprep.subr.mxu0 0.0
        %2028 = vmatpush1.msra.mxu0 0.0
        %2029 = vmatprep.subr.mxu0 0.0
        %2030 = vmatpush1.msra.mxu0 0.0
        %2031 = vmatprep.subr.mxu0 0.0
        %2032 = vmatpush1.msra.mxu0 0.0
        %2033 = vmatprep.subr.mxu0 0.0
        %2034 = vmatpush1.msra.mxu0 0.0
        %2035 = vmatprep.subr.mxu0 0.0
        %2036 = vmatpush1.msra.mxu0 0.0
        %2037 = vmatprep.mubr.f32.mxu0 0.0
        %2038 = vmatmul.mubr.f32.gmra.mrb[0].mxu0 %v1968
        %v2039 = vpop.f32.mrb[0].mxu0
        %v2040 = vadd.f32 0.0, %v2039
        %v2041 = vpop.f32.mrb[0].mxu0
        %2042 = vmatprep.mubr.f32.mxu0 0.0
        %2043 = vmatmul.mubr.f32.gmra.mrb[0].mxu0 %v1971
        %v2044 = vpop.f32.mrb[0].mxu0
        %v2045 = vadd.f32 0.0, %v2044
        %v2046 = vpop.f32.mrb[0].mxu0
        %2047 = vdwg.mxu0
        %v2048 = vadd.f32 %v1958, %v2040
        %v2049 = vadd.f32 %v1959, %v2045
        %v2050 = vld [vmem:[%s313 + $0x9] sm:$0xff]
        %v2051 = vld [vmem:[%s313 + $0x11] sm:$0xff]
        %s2052 = scalar_lea.vmem %s5, 288
        %v2053 = vld [vmem:[%s2052] sm:$0xff]
        %v2054 = vld [vmem:[%s2052 + $0x8] sm:$0xff]
        %v2055 = vld [vmem:[%s2052 + $0x10] sm:$0xff]
        %v2056 = vld [vmem:[%s2052 + $0x18] sm:$0xff]
        %v2058 = vsel %vm332, %v2050, 0
        %v2061 = vsel %vm332, %v2051, 0
        %2063 = vmatprep.subr.mxu0 0.0
        %2064 = vmatpush1.msra.mxu0 %v2053
        %2065 = vmatprep.subr.mxu0 0.0
        %2066 = vmatpush1.msra.mxu0 %v2054
        %2067 = vmatprep.subr.mxu0 0.0
        %2068 = vmatpush1.msra.mxu0 %v2055
        %2069 = vmatprep.subr.mxu0 0.0
        %2070 = vmatpush1.msra.mxu0 %v2056
        %2071 = vmatprep.subr.mxu0 0.0
        %2072 = vmatpush1.msra.mxu0 0.0
        %2073 = vmatprep.subr.mxu0 0.0
        %2074 = vmatpush1.msra.mxu0 0.0
        %2075 = vmatprep.subr.mxu0 0.0
        %2076 = vmatpush1.msra.mxu0 0.0
        %2077 = vmatprep.subr.mxu0 0.0
        %2078 = vmatpush1.msra.mxu0 0.0
        %2079 = vmatprep.subr.mxu0 0.0
        %2080 = vmatpush1.msra.mxu0 0.0
        %2081 = vmatprep.subr.mxu0 0.0
        %2082 = vmatpush1.msra.mxu0 0.0
        %2083 = vmatprep.subr.mxu0 0.0
        %2084 = vmatpush1.msra.mxu0 0.0
        %2085 = vmatprep.subr.mxu0 0.0
        %2086 = vmatpush1.msra.mxu0 0.0
        %2087 = vmatprep.subr.mxu0 0.0
        %2088 = vmatpush1.msra.mxu0 0.0
        %2089 = vmatprep.subr.mxu0 0.0
        %2090 = vmatpush1.msra.mxu0 0.0
        %2091 = vmatprep.subr.mxu0 0.0
        %2092 = vmatpush1.msra.mxu0 0.0
        %2093 = vmatprep.subr.mxu0 0.0
        %2094 = vmatpush1.msra.mxu0 0.0
        %2095 = vmatprep.subr.mxu0 0.0
        %2096 = vmatpush1.msra.mxu0 0.0
        %2097 = vmatprep.subr.mxu0 0.0
        %2098 = vmatpush1.msra.mxu0 0.0
        %2099 = vmatprep.subr.mxu0 0.0
        %2100 = vmatpush1.msra.mxu0 0.0
        %2101 = vmatprep.subr.mxu0 0.0
        %2102 = vmatpush1.msra.mxu0 0.0
        %2103 = vmatprep.subr.mxu0 0.0
        %2104 = vmatpush1.msra.mxu0 0.0
        %2105 = vmatprep.subr.mxu0 0.0
        %2106 = vmatpush1.msra.mxu0 0.0
        %2107 = vmatprep.subr.mxu0 0.0
        %2108 = vmatpush1.msra.mxu0 0.0
        %2109 = vmatprep.subr.mxu0 0.0
        %2110 = vmatpush1.msra.mxu0 0.0
        %2111 = vmatprep.subr.mxu0 0.0
        %2112 = vmatpush1.msra.mxu0 0.0
        %2113 = vmatprep.subr.mxu0 0.0
        %2114 = vmatpush1.msra.mxu0 0.0
        %2115 = vmatprep.subr.mxu0 0.0
        %2116 = vmatpush1.msra.mxu0 0.0
        %2117 = vmatprep.subr.mxu0 0.0
        %2118 = vmatpush1.msra.mxu0 0.0
        %2119 = vmatprep.subr.mxu0 0.0
        %2120 = vmatpush1.msra.mxu0 0.0
        %2121 = vmatprep.subr.mxu0 0.0
        %2122 = vmatpush1.msra.mxu0 0.0
        %2123 = vmatprep.subr.mxu0 0.0
        %2124 = vmatpush1.msra.mxu0 0.0
        %2125 = vmatprep.subr.mxu0 0.0
        %2126 = vmatpush1.msra.mxu0 0.0
        %2127 = vmatprep.mubr.f32.mxu0 0.0
        %2128 = vmatmul.mubr.f32.gmra.mrb[0].mxu0 %v2058
        %v2129 = vpop.f32.mrb[0].mxu0
        %v2130 = vadd.f32 0.0, %v2129
        %v2131 = vpop.f32.mrb[0].mxu0
        %2132 = vmatprep.mubr.f32.mxu0 0.0
        %2133 = vmatmul.mubr.f32.gmra.mrb[0].mxu0 %v2061
        %v2134 = vpop.f32.mrb[0].mxu0
        %v2135 = vadd.f32 0.0, %v2134
        %v2136 = vpop.f32.mrb[0].mxu0
        %2137 = vdwg.mxu0
        %v2138 = vadd.f32 %v2048, %v2130
        %v2139 = vadd.f32 %v2049, %v2135
        %v2140 = vld [vmem:[%s313 + $0xa] sm:$0xff]
        %v2141 = vld [vmem:[%s313 + $0x12] sm:$0xff]
        %s2142 = scalar_lea.vmem %s5, 320
        %v2143 = vld [vmem:[%s2142] sm:$0xff]
        %v2144 = vld [vmem:[%s2142 + $0x8] sm:$0xff]
        %v2145 = vld [vmem:[%s2142 + $0x10] sm:$0xff]
        %v2146 = vld [vmem:[%s2142 + $0x18] sm:$0xff]
        %v2148 = vsel %vm332, %v2140, 0
        %v2151 = vsel %vm332, %v2141, 0
        %2153 = vmatprep.subr.mxu0 0.0
        %2154 = vmatpush1.msra.mxu0 %v2143
        %2155 = vmatprep.subr.mxu0 0.0
        %2156 = vmatpush1.msra.mxu0 %v2144
        %2157 = vmatprep.subr.mxu0 0.0
        %2158 = vmatpush1.msra.mxu0 %v2145
        %2159 = vmatprep.subr.mxu0 0.0
        %2160 = vmatpush1.msra.mxu0 %v2146
        %2161 = vmatprep.subr.mxu0 0.0
        %2162 = vmatpush1.msra.mxu0 0.0
        %2163 = vmatprep.subr.mxu0 0.0
        %2164 = vmatpush1.msra.mxu0 0.0
        %2165 = vmatprep.subr.mxu0 0.0
        %2166 = vmatpush1.msra.mxu0 0.0
        %2167 = vmatprep.subr.mxu0 0.0
        %2168 = vmatpush1.msra.mxu0 0.0
        %2169 = vmatprep.subr.mxu0 0.0
        %2170 = vmatpush1.msra.mxu0 0.0
        %2171 = vmatprep.subr.mxu0 0.0
        %2172 = vmatpush1.msra.mxu0 0.0
        %2173 = vmatprep.subr.mxu0 0.0
        %2174 = vmatpush1.msra.mxu0 0.0
        %2175 = vmatprep.subr.mxu0 0.0
        %2176 = vmatpush1.msra.mxu0 0.0
        %2177 = vmatprep.subr.mxu0 0.0
        %2178 = vmatpush1.msra.mxu0 0.0
        %2179 = vmatprep.subr.mxu0 0.0
        %2180 = vmatpush1.msra.mxu0 0.0
        %2181 = vmatprep.subr.mxu0 0.0
        %2182 = vmatpush1.msra.mxu0 0.0
        %2183 = vmatprep.subr.mxu0 0.0
        %2184 = vmatpush1.msra.mxu0 0.0
        %2185 = vmatprep.subr.mxu0 0.0
        %2186 = vmatpush1.msra.mxu0 0.0
        %2187 = vmatprep.subr.mxu0 0.0
        %2188 = vmatpush1.msra.mxu0 0.0
        %2189 = vmatprep.subr.mxu0 0.0
        %2190 = vmatpush1.msra.mxu0 0.0
        %2191 = vmatprep.subr.mxu0 0.0
        %2192 = vmatpush1.msra.mxu0 0.0
        %2193 = vmatprep.subr.mxu0 0.0
        %2194 = vmatpush1.msra.mxu0 0.0
        %2195 = vmatprep.subr.mxu0 0.0
        %2196 = vmatpush1.msra.mxu0 0.0
        %2197 = vmatprep.subr.mxu0 0.0
        %2198 = vmatpush1.msra.mxu0 0.0
        %2199 = vmatprep.subr.mxu0 0.0
        %2200 = vmatpush1.msra.mxu0 0.0
        %2201 = vmatprep.subr.mxu0 0.0
        %2202 = vmatpush1.msra.mxu0 0.0
        %2203 = vmatprep.subr.mxu0 0.0
        %2204 = vmatpush1.msra.mxu0 0.0
        %2205 = vmatprep.subr.mxu0 0.0
        %2206 = vmatpush1.msra.mxu0 0.0
        %2207 = vmatprep.subr.mxu0 0.0
        %2208 = vmatpush1.msra.mxu0 0.0
        %2209 = vmatprep.subr.mxu0 0.0
        %2210 = vmatpush1.msra.mxu0 0.0
        %2211 = vmatprep.subr.mxu0 0.0
        %2212 = vmatpush1.msra.mxu0 0.0
        %2213 = vmatprep.subr.mxu0 0.0
        %2214 = vmatpush1.msra.mxu0 0.0
        %2215 = vmatprep.subr.mxu0 0.0
        %2216 = vmatpush1.msra.mxu0 0.0
        %2217 = vmatprep.mubr.f32.mxu0 0.0
        %2218 = vmatmul.mubr.f32.gmra.mrb[0].mxu0 %v2148
        %v2219 = vpop.f32.mrb[0].mxu0
        %v2220 = vadd.f32 0.0, %v2219
        %v2221 = vpop.f32.mrb[0].mxu0
        %2222 = vmatprep.mubr.f32.mxu0 0.0
        %2223 = vmatmul.mubr.f32.gmra.mrb[0].mxu0 %v2151
        %v2224 = vpop.f32.mrb[0].mxu0
        %v2225 = vadd.f32 0.0, %v2224
        %v2226 = vpop.f32.mrb[0].mxu0
        %2227 = vdwg.mxu0
        %v2228 = vadd.f32 %v2138, %v2220
        %v2229 = vadd.f32 %v2139, %v2225
        %v2230 = vld [vmem:[#allocation6] sm:$0x1]
        %v2232 = vlaneseq
        %v2233 = vshrl.u32 %v2232, 7
        %v2234 = vsub.s32 0, %v2233
        %v2235 = vrot.slane %v2230, %v2234
        %v2237 = vadd.f32 %v2228, %v2235
        %v2238 = vadd.f32 %v2229, %v2235
        %v2239 = vmax.f32 %v2237, 0.0
        %v2240 = vmax.f32 %v2238, 0.0
        %2243 = vrot.lane.b32.xlu0 %v2239, 64
        %v2244 = vpop.permute.xlu0 %2243
        %2245 = vrot.lane.b32.xlu0 %v2240, 64
        %v2246 = vpop.permute.xlu0 %2245
        %vm2249 = vcmask 785920
        %2250 = vst.msk [vmem:[%s318] sm:$0xff] %vm2249, %v2244
        %2251 = vst.msk [vmem:[%s318 + $0x8] sm:$0xff] %vm2249, %v2246
        %v2252 = vld [vmem:[%s313 + $0x5] sm:$0xff]
        %v2253 = vld [vmem:[%s313 + $0xd] sm:$0xff]
        %2256 = vrot.lane.b32.xlu0 %v2252, 96
        %v2257 = vpop.permute.xlu0 %2256
        %2258 = vrot.lane.b32.xlu0 %v2253, 96
        %v2259 = vpop.permute.xlu0 %2258
        %vm2262 = vcmask 1048320
        %2263 = vst.msk [vmem:[%s318] sm:$0xff] %vm2262, %v2257
        %2264 = vst.msk [vmem:[%s318 + $0x8] sm:$0xff] %vm2262, %v2259
        %p2265 = scmp.lt.s32.totalorder %s20, 1
        %s2266 = scalar_select %p2265, %s20, 1
        %s2267 = smul.addr %s2266, 2
        %s2268 = smul.addr %s2267, 8
        %s2269 = scalar_lea.vmem %s7, %s2268
        // Predicated region
        $region61: #{forward.10} parent=47 // pred_check
          %p2270 = pneg %p190
        $region62: #{forward.10} parent=47 // pred_check_branch
          %2272 = sbr.rel (%p2270) target = $region64
        $region63: #{forward.10} parent=47 // pred_region
          _
        $region64: #{forward.10} parent=47 // pred_fallthru
          _
      $region48: #{forward.10} parent=5 // pred_fallthru
        _
      %p2273 = scmp.le.s32.totalorder 2, %s15
      // Predicated region
      $region65: #{forward.10} parent=5 // pred_check
        %p2274 = pneg %p2273
      $region66: #{forward.10} parent=5 // pred_check_branch
        %2276 = sbr.rel (%p2274) target = $region68
      $region67: #{forward.10} parent=5 // pred_region
        %s2277 = ssub.s32 %s15, 2
        // Predicated region
        $region69: #{forward.10} parent=67 // pred_check
          %p2278 = pneg %p196
        $region70: #{forward.10} parent=67 // pred_check_branch
          %2280 = sbr.rel (%p2278) target = $region72
        $region71: #{forward.10} parent=67 // pred_region
          %p2281 = scmp.lt.s32.totalorder %s21, 1
          %s2282 = scalar_select %p2281, %s21, 1
          %s2283 = smul.addr %s2282, 2
          %s2284 = smul.addr %s2283, 8
          %s2285 = scalar_lea.vmem %s7, %s2284
        $region72: #{forward.10} parent=67 // pred_fallthru
          _
      $region68: #{forward.10} parent=5 // pred_fallthru
        _
    $region6: #{forward.10} parent=1 // loop_footer
      %s19 = sadd.s32 1, %s15
    $region7: #{forward.10} parent=1 // loop_footer_branch
      %14 = sbr.rel target = $region3
    $region8: #{forward.10} parent=1 // loop_exit
      _
    %2286 = vsyncpa [#allocation3], 1
    %s2287 = scalar_lea.sflag [#allocation3], 1
    %2288 = vsyncpa %s2287, 1
    %2289 = vsyncpa [#allocation5], 1

// kernel: forward.17
$region0: #{forward.17}
  #allocation0 [shape = 'u32[]', space=smem, size = 0x4, offset = 0x4, fixed_abs, tag = 'smem constant byte address 0x4 - core index']
  #allocation1 [shape = 'u32[144,128]{1,0:T(1,128)}', space=vmem, size = 0x12000, scoped, tag = 'internal scratch']
  %s0 = inlined_call_operand.vmem [shape: f32[32,128], index: 0, kind: input, shape index: {}]
  %s1 = inlined_call_operand.vmem [shape: f32[128,128], index: 1, kind: input, shape index: {}]
  %s2 = inlined_call_operand.vmem [shape: f32[1,128], index: 2, kind: input, shape index: {}]
  %s3 = inlined_call_operand.vmem [shape: f32[32,128], index: 3, kind: output, shape index: {}]
  %s4 = sld [smem:[#allocation0]]
  $region22: #{forward.17} parent=0
    _
  %s6 = ssub.s32 1, %s4
  %s7 = scalar_select 0, %s6, %s4
  // Predicated region
  $region2: #{forward.17} parent=0 // pred_check
    _
  $region3: #{forward.17} parent=0 // pred_check_branch
    %9 = sbr.rel (0) target = $region5
  $region4: #{forward.17} parent=0 // pred_region
    _
  $region5: #{forward.17} parent=0 // pred_fallthru
    _
  // Predicated region
  $region6: #{forward.17} parent=0 // pred_check
    _
  $region7: #{forward.17} parent=0 // pred_check_branch
    %11 = sbr.rel (0) target = $region9
  $region8: #{forward.17} parent=0 // pred_region
    _
  $region9: #{forward.17} parent=0 // pred_fallthru
    _
  // Predicated region
  $region10: #{forward.17} parent=0 // pred_check
    _
  $region11: #{forward.17} parent=0 // pred_check_branch
    %13 = sbr.rel (0) target = $region13
  $region12: #{forward.17} parent=0 // pred_region
    _
  $region13: #{forward.17} parent=0 // pred_fallthru
    _
  %v14 = vld [vmem:[%s0] sm:$0xff]
  %v15 = vld [vmem:[%s0 + $0x8] sm:$0xff]
  %v16 = vld [vmem:[%s0 + $0x10] sm:$0xff]
  %v17 = vld [vmem:[%s0 + $0x18] sm:$0xff]
  %v18 = vld [vmem:[%s1] sm:$0xff]
  %v19 = vld [vmem:[%s1 + $0x8] sm:$0xff]
  %v20 = vld [vmem:[%s1 + $0x10] sm:$0xff]
  %v21 = vld [vmem:[%s1 + $0x18] sm:$0xff]
  %v22 = vld [vmem:[%s1 + $0x20] sm:$0xff]
  %v23 = vld [vmem:[%s1 + $0x28] sm:$0xff]
  %v24 = vld [vmem:[%s1 + $0x30] sm:$0xff]
  %v25 = vld [vmem:[%s1 + $0x38] sm:$0xff]
  %v26 = vld [vmem:[%s1 + $0x40] sm:$0xff]
  %v27 = vld [vmem:[%s1 + $0x48] sm:$0xff]
  %v28 = vld [vmem:[%s1 + $0x50] sm:$0xff]
  %v29 = vld [vmem:[%s1 + $0x58] sm:$0xff]
  %v30 = vld [vmem:[%s1 + $0x60] sm:$0xff]
  %v31 = vld [vmem:[%s1 + $0x68] sm:$0xff]
  %v32 = vld [vmem:[%s1 + $0x70] sm:$0xff]
  %v33 = vld [vmem:[%s1 + $0x78] sm:$0xff]
  %v34 = vld [vmem:[%s2] sm:$0x1]
  %v36 = vlaneseq
  %v37 = vshrl.u32 %v36, 7
  %v38 = vsub.s32 0, %v37
  %v39 = vrot.slane %v34, %v38
  %41 = vmatprep.subr.mxu0 0.0
  %42 = vmatpush1.msra.mxu0 %v18
  %43 = vmatprep.subr.mxu0 0.0
  %44 = vmatpush1.msra.mxu0 %v19
  %45 = vmatprep.subr.mxu0 0.0
  %46 = vmatpush1.msra.mxu0 %v20
  %47 = vmatprep.subr.mxu0 0.0
  %48 = vmatpush1.msra.mxu0 %v21
  %49 = vmatprep.subr.mxu0 0.0
  %50 = vmatpush1.msra.mxu0 %v22
  %51 = vmatprep.subr.mxu0 0.0
  %52 = vmatpush1.msra.mxu0 %v23
  %53 = vmatprep.subr.mxu0 0.0
  %54 = vmatpush1.msra.mxu0 %v24
  %55 = vmatprep.subr.mxu0 0.0
  %56 = vmatpush1.msra.mxu0 %v25
  %57 = vmatprep.subr.mxu0 0.0
  %58 = vmatpush1.msra.mxu0 %v26
  %59 = vmatprep.subr.mxu0 0.0
  %60 = vmatpush1.msra.mxu0 %v27
  %61 = vmatprep.subr.mxu0 0.0
  %62 = vmatpush1.msra.mxu0 %v28
  %63 = vmatprep.subr.mxu0 0.0
  %64 = vmatpush1.msra.mxu0 %v29
  %65 = vmatprep.subr.mxu0 0.0
  %66 = vmatpush1.msra.mxu0 %v30
  %67 = vmatprep.subr.mxu0 0.0
  %68 = vmatpush1.msra.mxu0 %v31
  %69 = vmatprep.subr.mxu0 0.0
  %70 = vmatpush1.msra.mxu0 %v32
  %71 = vmatprep.subr.mxu0 0.0
  %72 = vmatpush1.msra.mxu0 %v33
  %73 = vmatprep.subr.mxu0 0.0
  %74 = vmatpush1.msra.mxu0 0.0
  %75 = vmatprep.subr.mxu0 0.0
  %76 = vmatpush1.msra.mxu0 0.0
  %77 = vmatprep.subr.mxu0 0.0
  %78 = vmatpush1.msra.mxu0 0.0
  %79 = vmatprep.subr.mxu0 0.0
  %80 = vmatpush1.msra.mxu0 0.0
  %81 = vmatprep.subr.mxu0 0.0
  %82 = vmatpush1.msra.mxu0 0.0
  %83 = vmatprep.subr.mxu0 0.0
  %84 = vmatpush1.msra.mxu0 0.0
  %85 = vmatprep.subr.mxu0 0.0
  %86 = vmatpush1.msra.mxu0 0.0
  %87 = vmatprep.subr.mxu0 0.0
  %88 = vmatpush1.msra.mxu0 0.0
  %89 = vmatprep.subr.mxu0 0.0
  %90 = vmatpush1.msra.mxu0 0.0
  %91 = vmatprep.subr.mxu0 0.0
  %92 = vmatpush1.msra.mxu0 0.0
  %93 = vmatprep.subr.mxu0 0.0
  %94 = vmatpush1.msra.mxu0 0.0
  %95 = vmatprep.subr.mxu0 0.0
  %96 = vmatpush1.msra.mxu0 0.0
  %97 = vmatprep.subr.mxu0 0.0
  %98 = vmatpush1.msra.mxu0 0.0
  %99 = vmatprep.subr.mxu0 0.0
  %100 = vmatpush1.msra.mxu0 0.0
  %101 = vmatprep.subr.mxu0 0.0
  %102 = vmatpush1.msra.mxu0 0.0
  %103 = vmatprep.subr.mxu0 0.0
  %104 = vmatpush1.msra.mxu0 0.0
  %105 = vmatprep.mubr.f32.mxu0 0.0
  %106 = vmatmul.mubr.f32.gmra.mrb[0].mxu0 %v14
  %v107 = vpop.f32.mrb[0].mxu0
  %v108 = vadd.f32 %v39, %v107
  %v109 = vpop.f32.mrb[0].mxu0
  %110 = vmatprep.mubr.f32.mxu0 0.0
  %111 = vmatmul.mubr.f32.gmra.mrb[0].mxu0 %v15
  %v112 = vpop.f32.mrb[0].mxu0
  %v113 = vadd.f32 %v39, %v112
  %v114 = vpop.f32.mrb[0].mxu0
  %115 = vmatprep.mubr.f32.mxu0 0.0
  %116 = vmatmul.mubr.f32.gmra.mrb[0].mxu0 %v16
  %v117 = vpop.f32.mrb[0].mxu0
  %v118 = vadd.f32 %v39, %v117
  %v119 = vpop.f32.mrb[0].mxu0
  %120 = vmatprep.mubr.f32.mxu0 0.0
  %121 = vmatmul.mubr.f32.gmra.mrb[0].mxu0 %v17
  %v122 = vpop.f32.mrb[0].mxu0
  %v123 = vadd.f32 %v39, %v122
  %v124 = vpop.f32.mrb[0].mxu0
  %125 = vdwg.mxu0
  %126 = vst [vmem:[%s3] sm:$0xff] %v108
  %127 = vst [vmem:[%s3 + $0x8] sm:$0xff] %v113
  %128 = vst [vmem:[%s3 + $0x10] sm:$0xff] %v118
  %129 = vst [vmem:[%s3 + $0x18] sm:$0xff] %v123
  // Predicated region
  $region14: #{forward.17} parent=0 // pred_check
    _
  $region15: #{forward.17} parent=0 // pred_check_branch
    %131 = sbr.rel (0) target = $region17
  $region16: #{forward.17} parent=0 // pred_region
    _
  $region17: #{forward.17} parent=0 // pred_fallthru
    _
  // Predicated region
  $region18: #{forward.17} parent=0 // pred_check
    _
  $region19: #{forward.17} parent=0 // pred_check_branch
    %133 = sbr.rel (0) target = $region21
  $region20: #{forward.17} parent=0 // pred_region
    _
  $region21: #{forward.17} parent=0 // pred_fallthru
    _

// kernel: forward.13
$region0: #{forward.13}
  #allocation0 [shape = 'u32[]', space=smem, size = 0x4, offset = 0x4, fixed_abs, tag = 'smem constant byte address 0x4 - core index']
  #allocation1 [shape = 'u32[144,128]{1,0:T(1,128)}', space=vmem, size = 0x12000, scoped, tag = 'internal scratch']
  %s0 = inlined_call_operand.vmem [shape: f32[32,256], index: 0, kind: input, shape index: {}]
  %s1 = inlined_call_operand.vmem [shape: f32[32,128], index: 1, kind: input, shape index: {}]
  %s2 = inlined_call_operand.vmem [shape: f32[256,512], index: 2, kind: input, shape index: {}]
  %s3 = inlined_call_operand.vmem [shape: f32[1,512], index: 3, kind: input, shape index: {}]
  %s4 = inlined_call_operand.vmem [shape: f32[1,512], index: 4, kind: input, shape index: {}]
  %s5 = inlined_call_operand.vmem [shape: f32[1,512], index: 5, kind: input, shape index: {}]
  %s6 = inlined_call_operand.vmem [shape: f32[512,128], index: 6, kind: input, shape index: {}]
  %s7 = inlined_call_operand.vmem [shape: f32[1,128], index: 7, kind: input, shape index: {}]
  %s8 = inlined_call_operand.vmem [shape: f32[1,128], index: 8, kind: input, shape index: {}]
  %s9 = inlined_call_operand.vmem [shape: f32[1,128], index: 9, kind: input, shape index: {}]
  %s10 = inlined_call_operand.vmem [shape: f32[32,128], index: 10, kind: output, shape index: {}]
  %s11 = sld [smem:[#allocation0]]
  $region50: #{forward.13} parent=0
    _
  %s13 = ssub.s32 1, %s11
  %s14 = scalar_select 0, %s13, %s11
  // Predicated region
  $region2: #{forward.13} parent=0 // pred_check
    _
  $region3: #{forward.13} parent=0 // pred_check_branch
    %16 = sbr.rel (0) target = $region5
  $region4: #{forward.13} parent=0 // pred_region
    _
  $region5: #{forward.13} parent=0 // pred_fallthru
    _
  // Predicated region
  $region6: #{forward.13} parent=0 // pred_check
    _
  $region7: #{forward.13} parent=0 // pred_check_branch
    %18 = sbr.rel (0) target = $region9
  $region8: #{forward.13} parent=0 // pred_region
    _
  $region9: #{forward.13} parent=0 // pred_fallthru
    _
  // Predicated region
  $region10: #{forward.13} parent=0 // pred_check
    _
  $region11: #{forward.13} parent=0 // pred_check_branch
    %20 = sbr.rel (0) target = $region13
  $region12: #{forward.13} parent=0 // pred_region
    _
  $region13: #{forward.13} parent=0 // pred_fallthru
    _
  // Predicated region
  $region14: #{forward.13} parent=0 // pred_check
    _
  $region15: #{forward.13} parent=0 // pred_check_branch
    %22 = sbr.rel (0) target = $region17
  $region16: #{forward.13} parent=0 // pred_region
    _
  $region17: #{forward.13} parent=0 // pred_fallthru
    _
  // Predicated region
  $region18: #{forward.13} parent=0 // pred_check
    _
  $region19: #{forward.13} parent=0 // pred_check_branch
    %24 = sbr.rel (0) target = $region21
  $region20: #{forward.13} parent=0 // pred_region
    _
  $region21: #{forward.13} parent=0 // pred_fallthru
    _
  // Predicated region
  $region22: #{forward.13} parent=0 // pred_check
    _
  $region23: #{forward.13} parent=0 // pred_check_branch
    %26 = sbr.rel (0) target = $region25
  $region24: #{forward.13} parent=0 // pred_region
    _
  $region25: #{forward.13} parent=0 // pred_fallthru
    _
  // Predicated region
  $region26: #{forward.13} parent=0 // pred_check
    _
  $region27: #{forward.13} parent=0 // pred_check_branch
    %28 = sbr.rel (0) target = $region29
  $region28: #{forward.13} parent=0 // pred_region
    _
  $region29: #{forward.13} parent=0 // pred_fallthru
    _
  // Predicated region
  $region30: #{forward.13} parent=0 // pred_check
    _
  $region31: #{forward.13} parent=0 // pred_check_branch
    %30 = sbr.rel (0) target = $region33
  $region32: #{forward.13} parent=0 // pred_region
    _
  $region33: #{forward.13} parent=0 // pred_fallthru
    _
  // Predicated region
  $region34: #{forward.13} parent=0 // pred_check
    _
  $region35: #{forward.13} parent=0 // pred_check_branch
    %32 = sbr.rel (0) target = $region37
  $region36: #{forward.13} parent=0 // pred_region
    _
  $region37: #{forward.13} parent=0 // pred_fallthru
    _
  // Predicated region
  $region38: #{forward.13} parent=0 // pred_check
    _
  $region39: #{forward.13} parent=0 // pred_check_branch
    %34 = sbr.rel (0) target = $region41
  $region40: #{forward.13} parent=0 // pred_region
    _
  $region41: #{forward.13} parent=0 // pred_fallthru
    _
  %v35 = vld [vmem:[%s0] sm:$0xff]
  %v36 = vld [vmem:[%s0 + $0x8] sm:$0xff]
  %v37 = vld [vmem:[%s0 + $0x10] sm:$0xff]
  %v38 = vld [vmem:[%s0 + $0x18] sm:$0xff]
  %v39 = vld [vmem:[%s0 + $0x20] sm:$0xff]
  %v40 = vld [vmem:[%s0 + $0x28] sm:$0xff]
  %v41 = vld [vmem:[%s0 + $0x30] sm:$0xff]
  %v42 = vld [vmem:[%s0 + $0x38] sm:$0xff]
  %v43 = vld [vmem:[%s2] sm:$0xff]
  %v44 = vld [vmem:[%s2 + $0x8] sm:$0xff]
  %v45 = vld [vmem:[%s2 + $0x10] sm:$0xff]
  %v46 = vld [vmem:[%s2 + $0x18] sm:$0xff]
  %v47 = vld [vmem:[%s2 + $0x20] sm:$0xff]
  %v48 = vld [vmem:[%s2 + $0x28] sm:$0xff]
  %v49 = vld [vmem:[%s2 + $0x30] sm:$0xff]
  %v50 = vld [vmem:[%s2 + $0x38] sm:$0xff]
  %v51 = vld [vmem:[%s2 + $0x40] sm:$0xff]
  %v52 = vld [vmem:[%s2 + $0x48] sm:$0xff]
  %v53 = vld [vmem:[%s2 + $0x50] sm:$0xff]
  %v54 = vld [vmem:[%s2 + $0x58] sm:$0xff]
  %v55 = vld [vmem:[%s2 + $0x60] sm:$0xff]
  %v56 = vld [vmem:[%s2 + $0x68] sm:$0xff]
  %v57 = vld [vmem:[%s2 + $0x70] sm:$0xff]
  %v58 = vld [vmem:[%s2 + $0x78] sm:$0xff]
  %v59 = vld [vmem:[%s2 + $0x80] sm:$0xff]
  %v60 = vld [vmem:[%s2 + $0x88] sm:$0xff]
  %v61 = vld [vmem:[%s2 + $0x90] sm:$0xff]
  %v62 = vld [vmem:[%s2 + $0x98] sm:$0xff]
  %v63 = vld [vmem:[%s2 + $0xa0] sm:$0xff]
  %v64 = vld [vmem:[%s2 + $0xa8] sm:$0xff]
  %v65 = vld [vmem:[%s2 + $0xb0] sm:$0xff]
  %v66 = vld [vmem:[%s2 + $0xb8] sm:$0xff]
  %v67 = vld [vmem:[%s2 + $0xc0] sm:$0xff]
  %v68 = vld [vmem:[%s2 + $0xc8] sm:$0xff]
  %v69 = vld [vmem:[%s2 + $0xd0] sm:$0xff]
  %v70 = vld [vmem:[%s2 + $0xd8] sm:$0xff]
  %v71 = vld [vmem:[%s2 + $0xe0] sm:$0xff]
  %v72 = vld [vmem:[%s2 + $0xe8] sm:$0xff]
  %v73 = vld [vmem:[%s2 + $0xf0] sm:$0xff]
  %v74 = vld [vmem:[%s2 + $0xf8] sm:$0xff]
  %v75 = vld [vmem:[%s2 + $0x100] sm:$0xff]
  %v76 = vld [vmem:[%s2 + $0x108] sm:$0xff]
  %v77 = vld [vmem:[%s2 + $0x110] sm:$0xff]
  %v78 = vld [vmem:[%s2 + $0x118] sm:$0xff]
  %v79 = vld [vmem:[%s2 + $0x120] sm:$0xff]
  %v80 = vld [vmem:[%s2 + $0x128] sm:$0xff]
  %v81 = vld [vmem:[%s2 + $0x130] sm:$0xff]
  %v82 = vld [vmem:[%s2 + $0x138] sm:$0xff]
  %v83 = vld [vmem:[%s2 + $0x140] sm:$0xff]
  %v84 = vld [vmem:[%s2 + $0x148] sm:$0xff]
  %v85 = vld [vmem:[%s2 + $0x150] sm:$0xff]
  %v86 = vld [vmem:[%s2 + $0x158] sm:$0xff]
  %v87 = vld [vmem:[%s2 + $0x160] sm:$0xff]
  %v88 = vld [vmem:[%s2 + $0x168] sm:$0xff]
  %v89 = vld [vmem:[%s2 + $0x170] sm:$0xff]
  %v90 = vld [vmem:[%s2 + $0x178] sm:$0xff]
  %v91 = vld [vmem:[%s2 + $0x180] sm:$0xff]
  %v92 = vld [vmem:[%s2 + $0x188] sm:$0xff]
  %v93 = vld [vmem:[%s2 + $0x190] sm:$0xff]
  %v94 = vld [vmem:[%s2 + $0x198] sm:$0xff]
  %v95 = vld [vmem:[%s2 + $0x1a0] sm:$0xff]
  %v96 = vld [vmem:[%s2 + $0x1a8] sm:$0xff]
  %v97 = vld [vmem:[%s2 + $0x1b0] sm:$0xff]
  %v98 = vld [vmem:[%s2 + $0x1b8] sm:$0xff]
  %v99 = vld [vmem:[%s2 + $0x1c0] sm:$0xff]
  %v100 = vld [vmem:[%s2 + $0x1c8] sm:$0xff]
  %v101 = vld [vmem:[%s2 + $0x1d0] sm:$0xff]
  %v102 = vld [vmem:[%s2 + $0x1d8] sm:$0xff]
  %v103 = vld [vmem:[%s2 + $0x1e0] sm:$0xff]
  %v104 = vld [vmem:[%s2 + $0x1e8] sm:$0xff]
  %v105 = vld [vmem:[%s2 + $0x1f0] sm:$0xff]
  %v106 = vld [vmem:[%s2 + $0x1f8] sm:$0xff]
  %v107 = vld [vmem:[%s2 + $0x200] sm:$0xff]
  %v108 = vld [vmem:[%s2 + $0x208] sm:$0xff]
  %v109 = vld [vmem:[%s2 + $0x210] sm:$0xff]
  %v110 = vld [vmem:[%s2 + $0x218] sm:$0xff]
  %v111 = vld [vmem:[%s2 + $0x220] sm:$0xff]
  %v112 = vld [vmem:[%s2 + $0x228] sm:$0xff]
  %v113 = vld [vmem:[%s2 + $0x230] sm:$0xff]
  %v114 = vld [vmem:[%s2 + $0x238] sm:$0xff]
  %v115 = vld [vmem:[%s2 + $0x240] sm:$0xff]
  %v116 = vld [vmem:[%s2 + $0x248] sm:$0xff]
  %v117 = vld [vmem:[%s2 + $0x250] sm:$0xff]
  %v118 = vld [vmem:[%s2 + $0x258] sm:$0xff]
  %v119 = vld [vmem:[%s2 + $0x260] sm:$0xff]
  %v120 = vld [vmem:[%s2 + $0x268] sm:$0xff]
  %v121 = vld [vmem:[%s2 + $0x270] sm:$0xff]
  %v122 = vld [vmem:[%s2 + $0x278] sm:$0xff]
  %v123 = vld [vmem:[%s2 + $0x280] sm:$0xff]
  %v124 = vld [vmem:[%s2 + $0x288] sm:$0xff]
  %v125 = vld [vmem:[%s2 + $0x290] sm:$0xff]
  %v126 = vld [vmem:[%s2 + $0x298] sm:$0xff]
  %v127 = vld [vmem:[%s2 + $0x2a0] sm:$0xff]
  %v128 = vld [vmem:[%s2 + $0x2a8] sm:$0xff]
  %v129 = vld [vmem:[%s2 + $0x2b0] sm:$0xff]
  %v130 = vld [vmem:[%s2 + $0x2b8] sm:$0xff]
  %v131 = vld [vmem:[%s2 + $0x2c0] sm:$0xff]
  %v132 = vld [vmem:[%s2 + $0x2c8] sm:$0xff]
  %v133 = vld [vmem:[%s2 + $0x2d0] sm:$0xff]
  %v134 = vld [vmem:[%s2 + $0x2d8] sm:$0xff]
  %v135 = vld [vmem:[%s2 + $0x2e0] sm:$0xff]
  %v136 = vld [vmem:[%s2 + $0x2e8] sm:$0xff]
  %v137 = vld [vmem:[%s2 + $0x2f0] sm:$0xff]
  %v138 = vld [vmem:[%s2 + $0x2f8] sm:$0xff]
  %v139 = vld [vmem:[%s2 + $0x300] sm:$0xff]
  %v140 = vld [vmem:[%s2 + $0x308] sm:$0xff]
  %v141 = vld [vmem:[%s2 + $0x310] sm:$0xff]
  %v142 = vld [vmem:[%s2 + $0x318] sm:$0xff]
  %v143 = vld [vmem:[%s2 + $0x320] sm:$0xff]
  %v144 = vld [vmem:[%s2 + $0x328] sm:$0xff]
  %v145 = vld [vmem:[%s2 + $0x330] sm:$0xff]
  %v146 = vld [vmem:[%s2 + $0x338] sm:$0xff]
  %v147 = vld [vmem:[%s2 + $0x340] sm:$0xff]
  %v148 = vld [vmem:[%s2 + $0x348] sm:$0xff]
  %v149 = vld [vmem:[%s2 + $0x350] sm:$0xff]
  %v150 = vld [vmem:[%s2 + $0x358] sm:$0xff]
  %v151 = vld [vmem:[%s2 + $0x360] sm:$0xff]
  %v152 = vld [vmem:[%s2 + $0x368] sm:$0xff]
  %v153 = vld [vmem:[%s2 + $0x370] sm:$0xff]
  %v154 = vld [vmem:[%s2 + $0x378] sm:$0xff]
  %v155 = vld [vmem:[%s2 + $0x380] sm:$0xff]
  %v156 = vld [vmem:[%s2 + $0x388] sm:$0xff]
  %v157 = vld [vmem:[%s2 + $0x390] sm:$0xff]
  %v158 = vld [vmem:[%s2 + $0x398] sm:$0xff]
  %v159 = vld [vmem:[%s2 + $0x3a0] sm:$0xff]
  %v160 = vld [vmem:[%s2 + $0x3a8] sm:$0xff]
  %v161 = vld [vmem:[%s2 + $0x3b0] sm:$0xff]
  %v162 = vld [vmem:[%s2 + $0x3b8] sm:$0xff]
  %v163 = vld [vmem:[%s2 + $0x3c0] sm:$0xff]
  %v164 = vld [vmem:[%s2 + $0x3c8] sm:$0xff]
  %v165 = vld [vmem:[%s2 + $0x3d0] sm:$0xff]
  %v166 = vld [vmem:[%s2 + $0x3d8] sm:$0xff]
  %v167 = vld [vmem:[%s2 + $0x3e0] sm:$0xff]
  %v168 = vld [vmem:[%s2 + $0x3e8] sm:$0xff]
  %v169 = vld [vmem:[%s2 + $0x3f0] sm:$0xff]
  %v170 = vld [vmem:[%s2 + $0x3f8] sm:$0xff]
  %v171 = vld [vmem:[%s3] sm:$0xf]
  %v172 = vld [vmem:[%s4] sm:$0xf]
  %v173 = vld [vmem:[%s5] sm:$0xf]
  %v174 = vld [vmem:[%s6] sm:$0xff]
  %v175 = vld [vmem:[%s6 + $0x8] sm:$0xff]
  %v176 = vld [vmem:[%s6 + $0x10] sm:$0xff]
  %v177 = vld [vmem:[%s6 + $0x18] sm:$0xff]
  %v178 = vld [vmem:[%s6 + $0x20] sm:$0xff]
  %v179 = vld [vmem:[%s6 + $0x28] sm:$0xff]
  %v180 = vld [vmem:[%s6 + $0x30] sm:$0xff]
  %v181 = vld [vmem:[%s6 + $0x38] sm:$0xff]
  %v182 = vld [vmem:[%s6 + $0x40] sm:$0xff]
  %v183 = vld [vmem:[%s6 + $0x48] sm:$0xff]
  %v184 = vld [vmem:[%s6 + $0x50] sm:$0xff]
  %v185 = vld [vmem:[%s6 + $0x58] sm:$0xff]
  %v186 = vld [vmem:[%s6 + $0x60] sm:$0xff]
  %v187 = vld [vmem:[%s6 + $0x68] sm:$0xff]
  %v188 = vld [vmem:[%s6 + $0x70] sm:$0xff]
  %v189 = vld [vmem:[%s6 + $0x78] sm:$0xff]
  %v190 = vld [vmem:[%s6 + $0x80] sm:$0xff]
  %v191 = vld [vmem:[%s6 + $0x88] sm:$0xff]
  %v192 = vld [vmem:[%s6 + $0x90] sm:$0xff]
  %v193 = vld [vmem:[%s6 + $0x98] sm:$0xff]
  %v194 = vld [vmem:[%s6 + $0xa0] sm:$0xff]
  %v195 = vld [vmem:[%s6 + $0xa8] sm:$0xff]
  %v196 = vld [vmem:[%s6 + $0xb0] sm:$0xff]
  %v197 = vld [vmem:[%s6 + $0xb8] sm:$0xff]
  %v198 = vld [vmem:[%s6 + $0xc0] sm:$0xff]
  %v199 = vld [vmem:[%s6 + $0xc8] sm:$0xff]
  %v200 = vld [vmem:[%s6 + $0xd0] sm:$0xff]
  %v201 = vld [vmem:[%s6 + $0xd8] sm:$0xff]
  %v202 = vld [vmem:[%s6 + $0xe0] sm:$0xff]
  %v203 = vld [vmem:[%s6 + $0xe8] sm:$0xff]
  %v204 = vld [vmem:[%s6 + $0xf0] sm:$0xff]
  %v205 = vld [vmem:[%s6 + $0xf8] sm:$0xff]
  %v206 = vld [vmem:[%s6 + $0x100] sm:$0xff]
  %v207 = vld [vmem:[%s6 + $0x108] sm:$0xff]
  %v208 = vld [vmem:[%s6 + $0x110] sm:$0xff]
  %v209 = vld [vmem:[%s6 + $0x118] sm:$0xff]
  %v210 = vld [vmem:[%s6 + $0x120] sm:$0xff]
  %v211 = vld [vmem:[%s6 + $0x128] sm:$0xff]
  %v212 = vld [vmem:[%s6 + $0x130] sm:$0xff]
  %v213 = vld [vmem:[%s6 + $0x138] sm:$0xff]
  %v214 = vld [vmem:[%s6 + $0x140] sm:$0xff]
  %v215 = vld [vmem:[%s6 + $0x148] sm:$0xff]
  %v216 = vld [vmem:[%s6 + $0x150] sm:$0xff]
  %v217 = vld [vmem:[%s6 + $0x158] sm:$0xff]
  %v218 = vld [vmem:[%s6 + $0x160] sm:$0xff]
  %v219 = vld [vmem:[%s6 + $0x168] sm:$0xff]
  %v220 = vld [vmem:[%s6 + $0x170] sm:$0xff]
  %v221 = vld [vmem:[%s6 + $0x178] sm:$0xff]
  %v222 = vld [vmem:[%s6 + $0x180] sm:$0xff]
  %v223 = vld [vmem:[%s6 + $0x188] sm:$0xff]
  %v224 = vld [vmem:[%s6 + $0x190] sm:$0xff]
  %v225 = vld [vmem:[%s6 + $0x198] sm:$0xff]
  %v226 = vld [vmem:[%s6 + $0x1a0] sm:$0xff]
  %v227 = vld [vmem:[%s6 + $0x1a8] sm:$0xff]
  %v228 = vld [vmem:[%s6 + $0x1b0] sm:$0xff]
  %v229 = vld [vmem:[%s6 + $0x1b8] sm:$0xff]
  %v230 = vld [vmem:[%s6 + $0x1c0] sm:$0xff]
  %v231 = vld [vmem:[%s6 + $0x1c8] sm:$0xff]
  %v232 = vld [vmem:[%s6 + $0x1d0] sm:$0xff]
  %v233 = vld [vmem:[%s6 + $0x1d8] sm:$0xff]
  %v234 = vld [vmem:[%s6 + $0x1e0] sm:$0xff]
  %v235 = vld [vmem:[%s6 + $0x1e8] sm:$0xff]
  %v236 = vld [vmem:[%s6 + $0x1f0] sm:$0xff]
  %v237 = vld [vmem:[%s6 + $0x1f8] sm:$0xff]
  %v238 = vld [vmem:[%s7] sm:$0x1]
  %v239 = vld [vmem:[%s8] sm:$0x1]
  %v240 = vld [vmem:[%s9] sm:$0x1]
  %v242 = vlaneseq
  %v243 = vshrl.u32 %v242, 7
  %v244 = vsub.s32 0, %v243
  %v245 = vrot.slane %v171, %v244
  %v246 = vlaneseq
  %v247 = vshrl.u32 %v246, 7
  %v248 = vsub.s32 1, %v247
  %v249 = vrot.slane %v171, %v248
  %v250 = vlaneseq
  %v251 = vshrl.u32 %v250, 7
  %v252 = vsub.s32 2, %v251
  %v253 = vrot.slane %v171, %v252
  %v254 = vlaneseq
  %v255 = vshrl.u32 %v254, 7
  %v256 = vsub.s32 3, %v255
  %v257 = vrot.slane %v171, %v256
  %262 = vmatprep.subr.mxu0 %v44
  %263 = vmatpush1.msra.mxu0 %v43
  %264 = vmatprep.subr.mxu0 %v48
  %265 = vmatpush1.msra.mxu0 %v47
  %266 = vmatprep.subr.mxu0 %v52
  %267 = vmatpush1.msra.mxu0 %v51
  %268 = vmatprep.subr.mxu0 %v56
  %269 = vmatpush1.msra.mxu0 %v55
  %270 = vmatprep.subr.mxu0 %v60
  %271 = vmatpush1.msra.mxu0 %v59
  %272 = vmatprep.subr.mxu0 %v64
  %273 = vmatpush1.msra.mxu0 %v63
  %274 = vmatprep.subr.mxu0 %v68
  %275 = vmatpush1.msra.mxu0 %v67
  %276 = vmatprep.subr.mxu0 %v72
  %277 = vmatpush1.msra.mxu0 %v71
  %278 = vmatprep.subr.mxu0 %v76
  %279 = vmatpush1.msra.mxu0 %v75
  %280 = vmatprep.subr.mxu0 %v80
  %281 = vmatpush1.msra.mxu0 %v79
  %282 = vmatprep.subr.mxu0 %v84
  %283 = vmatpush1.msra.mxu0 %v83
  %284 = vmatprep.subr.mxu0 %v88
  %285 = vmatpush1.msra.mxu0 %v87
  %286 = vmatprep.subr.mxu0 %v92
  %287 = vmatpush1.msra.mxu0 %v91
  %288 = vmatprep.subr.mxu0 %v96
  %289 = vmatpush1.msra.mxu0 %v95
  %290 = vmatprep.subr.mxu0 %v100
  %291 = vmatpush1.msra.mxu0 %v99
  %292 = vmatprep.subr.mxu0 %v104
  %293 = vmatpush1.msra.mxu0 %v103
  %294 = vmatprep.subr.mxu0 %v108
  %295 = vmatpush1.msra.mxu0 %v107
  %296 = vmatprep.subr.mxu0 %v112
  %297 = vmatpush1.msra.mxu0 %v111
  %298 = vmatprep.subr.mxu0 %v116
  %299 = vmatpush1.msra.mxu0 %v115
  %300 = vmatprep.subr.mxu0 %v120
  %301 = vmatpush1.msra.mxu0 %v119
  %302 = vmatprep.subr.mxu0 %v124
  %303 = vmatpush1.msra.mxu0 %v123
  %304 = vmatprep.subr.mxu0 %v128
  %305 = vmatpush1.msra.mxu0 %v127
  %306 = vmatprep.subr.mxu0 %v132
  %307 = vmatpush1.msra.mxu0 %v131
  %308 = vmatprep.subr.mxu0 %v136
  %309 = vmatpush1.msra.mxu0 %v135
  %310 = vmatprep.subr.mxu0 %v140
  %311 = vmatpush1.msra.mxu0 %v139
  %312 = vmatprep.subr.mxu0 %v144
  %313 = vmatpush1.msra.mxu0 %v143
  %314 = vmatprep.subr.mxu0 %v148
  %315 = vmatpush1.msra.mxu0 %v147
  %316 = vmatprep.subr.mxu0 %v152
  %317 = vmatpush1.msra.mxu0 %v151
  %318 = vmatprep.subr.mxu0 %v156
  %319 = vmatpush1.msra.mxu0 %v155
  %320 = vmatprep.subr.mxu0 %v160
  %321 = vmatpush1.msra.mxu0 %v159
  %322 = vmatprep.subr.mxu0 %v164
  %323 = vmatpush1.msra.mxu0 %v163
  %324 = vmatprep.subr.mxu0 %v168
  %325 = vmatpush1.msra.mxu0 %v167
  %326 = vmatprep.mubr.f32.mxu0 %v36
  %327 = vmatmul.mubr.f32.gmra.mrb[0].mxu0 %v35
  %v328 = vpop.f32.mrb[0].mxu0
  %v329 = vadd.f32 %v245, %v328
  %v330 = vpop.f32.mrb[0].mxu0
  %v331 = vadd.f32 %v249, %v330
  %332 = vmatprep.mubr.f32.mxu0 %v38
  %333 = vmatmul.mubr.f32.gmra.mrb[0].mxu0 %v37
  %v334 = vpop.f32.mrb[0].mxu0
  %v335 = vadd.f32 %v245, %v334
  %v336 = vpop.f32.mrb[0].mxu0
  %v337 = vadd.f32 %v249, %v336
  %338 = vmatprep.mubr.f32.mxu0 %v40
  %339 = vmatmul.mubr.f32.gmra.mrb[0].mxu0 %v39
  %v340 = vpop.f32.mrb[0].mxu0
  %v341 = vadd.f32 %v245, %v340
  %v342 = vpop.f32.mrb[0].mxu0
  %v343 = vadd.f32 %v249, %v342
  %344 = vmatprep.mubr.f32.mxu0 %v42
  %345 = vmatmul.mubr.f32.gmra.mrb[0].mxu0 %v41
  %v346 = vpop.f32.mrb[0].mxu0
  %v347 = vadd.f32 %v245, %v346
  %v348 = vpop.f32.mrb[0].mxu0
  %v349 = vadd.f32 %v249, %v348
  %350 = vdwg.mxu0
  %351 = vmatprep.subr.mxu0 %v46
  %352 = vmatpush1.msra.mxu0 %v45
  %353 = vmatprep.subr.mxu0 %v50
  %354 = vmatpush1.msra.mxu0 %v49
  %355 = vmatprep.subr.mxu0 %v54
  %356 = vmatpush1.msra.mxu0 %v53
  %357 = vmatprep.subr.mxu0 %v58
  %358 = vmatpush1.msra.mxu0 %v57
  %359 = vmatprep.subr.mxu0 %v62
  %360 = vmatpush1.msra.mxu0 %v61
  %361 = vmatprep.subr.mxu0 %v66
  %362 = vmatpush1.msra.mxu0 %v65
  %363 = vmatprep.subr.mxu0 %v70
  %364 = vmatpush1.msra.mxu0 %v69
  %365 = vmatprep.subr.mxu0 %v74
  %366 = vmatpush1.msra.mxu0 %v73
  %367 = vmatprep.subr.mxu0 %v78
  %368 = vmatpush1.msra.mxu0 %v77
  %369 = vmatprep.subr.mxu0 %v82
  %370 = vmatpush1.msra.mxu0 %v81
  %371 = vmatprep.subr.mxu0 %v86
  %372 = vmatpush1.msra.mxu0 %v85
  %373 = vmatprep.subr.mxu0 %v90
  %374 = vmatpush1.msra.mxu0 %v89
  %375 = vmatprep.subr.mxu0 %v94
  %376 = vmatpush1.msra.mxu0 %v93
  %377 = vmatprep.subr.mxu0 %v98
  %378 = vmatpush1.msra.mxu0 %v97
  %379 = vmatprep.subr.mxu0 %v102
  %380 = vmatpush1.msra.mxu0 %v101
  %381 = vmatprep.subr.mxu0 %v106
  %382 = vmatpush1.msra.mxu0 %v105
  %383 = vmatprep.subr.mxu0 %v110
  %384 = vmatpush1.msra.mxu0 %v109
  %385 = vmatprep.subr.mxu0 %v114
  %386 = vmatpush1.msra.mxu0 %v113
  %387 = vmatprep.subr.mxu0 %v118
  %388 = vmatpush1.msra.mxu0 %v117
  %389 = vmatprep.subr.mxu0 %v122
  %390 = vmatpush1.msra.mxu0 %v121
  %391 = vmatprep.subr.mxu0 %v126
  %392 = vmatpush1.msra.mxu0 %v125
  %393 = vmatprep.subr.mxu0 %v130
  %394 = vmatpush1.msra.mxu0 %v129
  %395 = vmatprep.subr.mxu0 %v134
  %396 = vmatpush1.msra.mxu0 %v133
  %397 = vmatprep.subr.mxu0 %v138
  %398 = vmatpush1.msra.mxu0 %v137
  %399 = vmatprep.subr.mxu0 %v142
  %400 = vmatpush1.msra.mxu0 %v141
  %401 = vmatprep.subr.mxu0 %v146
  %402 = vmatpush1.msra.mxu0 %v145
  %403 = vmatprep.subr.mxu0 %v150
  %404 = vmatpush1.msra.mxu0 %v149
  %405 = vmatprep.subr.mxu0 %v154
  %406 = vmatpush1.msra.mxu0 %v153
  %407 = vmatprep.subr.mxu0 %v158
  %408 = vmatpush1.msra.mxu0 %v157
  %409 = vmatprep.subr.mxu0 %v162
  %410 = vmatpush1.msra.mxu0 %v161
  %411 = vmatprep.subr.mxu0 %v166
  %412 = vmatpush1.msra.mxu0 %v165
  %413 = vmatprep.subr.mxu0 %v170
  %414 = vmatpush1.msra.mxu0 %v169
  %415 = vmatprep.mubr.f32.mxu0 %v36
  %416 = vmatmul.mubr.f32.gmra.mrb[0].mxu0 %v35
  %v417 = vpop.f32.mrb[0].mxu0
  %v418 = vadd.f32 %v253, %v417
  %v419 = vpop.f32.mrb[0].mxu0
  %v420 = vadd.f32 %v257, %v419
  %421 = vmatprep.mubr.f32.mxu0 %v38
  %422 = vmatmul.mubr.f32.gmra.mrb[0].mxu0 %v37
  %v423 = vpop.f32.mrb[0].mxu0
  %v424 = vadd.f32 %v253, %v423
  %v425 = vpop.f32.mrb[0].mxu0
  %v426 = vadd.f32 %v257, %v425
  %427 = vmatprep.mubr.f32.mxu0 %v40
  %428 = vmatmul.mubr.f32.gmra.mrb[0].mxu0 %v39
  %v429 = vpop.f32.mrb[0].mxu0
  %v430 = vadd.f32 %v253, %v429
  %v431 = vpop.f32.mrb[0].mxu0
  %v432 = vadd.f32 %v257, %v431
  %433 = vmatprep.mubr.f32.mxu0 %v42
  %434 = vmatmul.mubr.f32.gmra.mrb[0].mxu0 %v41
  %v435 = vpop.f32.mrb[0].mxu0
  %v436 = vadd.f32 %v253, %v435
  %v437 = vpop.f32.mrb[0].mxu0
  %v438 = vadd.f32 %v257, %v437
  %439 = vdwg.mxu0
  %v440 = vadd.f32 %v329, %v331
  %v441 = vadd.f32 %v440, %v418
  %v442 = vadd.f32 %v441, %v420
  %443 = vadd.xlane.f32.xlu0 %v442
  %v444 = vpop.xlane.xlu0 %443
  %v445 = vadd.f32 %v335, %v337
  %v446 = vadd.f32 %v445, %v424
  %v447 = vadd.f32 %v446, %v426
  %448 = vadd.xlane.f32.xlu0 %v447
  %v449 = vpop.xlane.xlu0 %448
  %v450 = vadd.f32 %v341, %v343
  %v451 = vadd.f32 %v450, %v430
  %v452 = vadd.f32 %v451, %v432
  %453 = vadd.xlane.f32.xlu0 %v452
  %v454 = vpop.xlane.xlu0 %453
  %v455 = vadd.f32 %v347, %v349
  %v456 = vadd.f32 %v455, %v436
  %v457 = vadd.f32 %v456, %v438
  %458 = vadd.xlane.f32.xlu0 %v457
  %v459 = vpop.xlane.xlu0 %458
  %v460 = vrcp.pop 512.0
  %v461 = vmul.f32 %v444, %v460
  %v462 = vmul.f32 %v449, %v460
  %v463 = vmul.f32 %v454, %v460
  %v464 = vmul.f32 %v459, %v460
  %v465 = vsub.f32 %v329, %v461
  %v466 = vsub.f32 %v331, %v461
  %v467 = vsub.f32 %v418, %v461
  %v468 = vsub.f32 %v420, %v461
  %v469 = vsub.f32 %v335, %v462
  %v470 = vsub.f32 %v337, %v462
  %v471 = vsub.f32 %v424, %v462
  %v472 = vsub.f32 %v426, %v462
  %v473 = vsub.f32 %v341, %v463
  %v474 = vsub.f32 %v343, %v463
  %v475 = vsub.f32 %v430, %v463
  %v476 = vsub.f32 %v432, %v463
  %v477 = vsub.f32 %v347, %v464
  %v478 = vsub.f32 %v349, %v464
  %v479 = vsub.f32 %v436, %v464
  %v480 = vsub.f32 %v438, %v464
  %v481 = vmul.f32 %v465, %v465
  %v482 = vmul.f32 %v466, %v466
  %v483 = vmul.f32 %v467, %v467
  %v484 = vmul.f32 %v468, %v468
  %v485 = vmul.f32 %v469, %v469
  %v486 = vmul.f32 %v470, %v470
  %v487 = vmul.f32 %v471, %v471
  %v488 = vmul.f32 %v472, %v472
  %v489 = vmul.f32 %v473, %v473
  %v490 = vmul.f32 %v474, %v474
  %v491 = vmul.f32 %v475, %v475
  %v492 = vmul.f32 %v476, %v476
  %v493 = vmul.f32 %v477, %v477
  %v494 = vmul.f32 %v478, %v478
  %v495 = vmul.f32 %v479, %v479
  %v496 = vmul.f32 %v480, %v480
  %v497 = vadd.f32 %v481, %v482
  %v498 = vadd.f32 %v497, %v483
  %v499 = vadd.f32 %v498, %v484
  %500 = vadd.xlane.f32.xlu0 %v499
  %v501 = vpop.xlane.xlu0 %500
  %v502 = vadd.f32 %v485, %v486
  %v503 = vadd.f32 %v502, %v487
  %v504 = vadd.f32 %v503, %v488
  %505 = vadd.xlane.f32.xlu0 %v504
  %v506 = vpop.xlane.xlu0 %505
  %v507 = vadd.f32 %v489, %v490
  %v508 = vadd.f32 %v507, %v491
  %v509 = vadd.f32 %v508, %v492
  %510 = vadd.xlane.f32.xlu0 %v509
  %v511 = vpop.xlane.xlu0 %510
  %v512 = vadd.f32 %v493, %v494
  %v513 = vadd.f32 %v512, %v495
  %v514 = vadd.f32 %v513, %v496
  %515 = vadd.xlane.f32.xlu0 %v514
  %v516 = vpop.xlane.xlu0 %515
  %v517 = vmul.f32 %v501, %v460
  %v518 = vmul.f32 %v506, %v460
  %v519 = vmul.f32 %v511, %v460
  %v520 = vmul.f32 %v516, %v460
  %v521 = vadd.f32 %v517, 1e-05
  %v522 = vadd.f32 %v518, 1e-05
  %v523 = vadd.f32 %v519, 1e-05
  %v524 = vadd.f32 %v520, 1e-05
  %v525 = vrsqrt.pop %v521
  %v526 = vrsqrt.pop %v522
  %v527 = vrsqrt.pop %v523
  %v528 = vrsqrt.pop %v524
  %v529 = vmul.f32 %v465, %v525
  %v530 = vmul.f32 %v466, %v525
  %v531 = vmul.f32 %v467, %v525
  %v532 = vmul.f32 %v468, %v525
  %v533 = vmul.f32 %v469, %v526
  %v534 = vmul.f32 %v470, %v526
  %v535 = vmul.f32 %v471, %v526
  %v536 = vmul.f32 %v472, %v526
  %v537 = vmul.f32 %v473, %v527
  %v538 = vmul.f32 %v474, %v527
  %v539 = vmul.f32 %v475, %v527
  %v540 = vmul.f32 %v476, %v527
  %v541 = vmul.f32 %v477, %v528
  %v542 = vmul.f32 %v478, %v528
  %v543 = vmul.f32 %v479, %v528
  %v544 = vmul.f32 %v480, %v528
  %v546 = vlaneseq
  %v547 = vshrl.u32 %v546, 7
  %v548 = vsub.s32 0, %v547
  %v549 = vrot.slane %v172, %v548
  %v550 = vlaneseq
  %v551 = vshrl.u32 %v550, 7
  %v552 = vsub.s32 1, %v551
  %v553 = vrot.slane %v172, %v552
  %v554 = vlaneseq
  %v555 = vshrl.u32 %v554, 7
  %v556 = vsub.s32 2, %v555
  %v557 = vrot.slane %v172, %v556
  %v558 = vlaneseq
  %v559 = vshrl.u32 %v558, 7
  %v560 = vsub.s32 3, %v559
  %v561 = vrot.slane %v172, %v560
  %v566 = vmul.f32 %v529, %v549
  %v567 = vmul.f32 %v530, %v553
  %v568 = vmul.f32 %v531, %v557
  %v569 = vmul.f32 %v532, %v561
  %v570 = vmul.f32 %v533, %v549
  %v571 = vmul.f32 %v534, %v553
  %v572 = vmul.f32 %v535, %v557
  %v573 = vmul.f32 %v536, %v561
  %v574 = vmul.f32 %v537, %v549
  %v575 = vmul.f32 %v538, %v553
  %v576 = vmul.f32 %v539, %v557
  %v577 = vmul.f32 %v540, %v561
  %v578 = vmul.f32 %v541, %v549
  %v579 = vmul.f32 %v542, %v553
  %v580 = vmul.f32 %v543, %v557
  %v581 = vmul.f32 %v544, %v561
  %v583 = vlaneseq
  %v584 = vshrl.u32 %v583, 7
  %v585 = vsub.s32 0, %v584
  %v586 = vrot.slane %v173, %v585
  %v587 = vlaneseq
  %v588 = vshrl.u32 %v587, 7
  %v589 = vsub.s32 1, %v588
  %v590 = vrot.slane %v173, %v589
  %v591 = vlaneseq
  %v592 = vshrl.u32 %v591, 7
  %v593 = vsub.s32 2, %v592
  %v594 = vrot.slane %v173, %v593
  %v595 = vlaneseq
  %v596 = vshrl.u32 %v595, 7
  %v597 = vsub.s32 3, %v596
  %v598 = vrot.slane %v173, %v597
  %v603 = vadd.f32 %v566, %v586
  %v604 = vadd.f32 %v567, %v590
  %v605 = vadd.f32 %v568, %v594
  %v606 = vadd.f32 %v569, %v598
  %v607 = vadd.f32 %v570, %v586
  %v608 = vadd.f32 %v571, %v590
  %v609 = vadd.f32 %v572, %v594
  %v610 = vadd.f32 %v573, %v598
  %v611 = vadd.f32 %v574, %v586
  %v612 = vadd.f32 %v575, %v590
  %v613 = vadd.f32 %v576, %v594
  %v614 = vadd.f32 %v577, %v598
  %v615 = vadd.f32 %v578, %v586
  %v616 = vadd.f32 %v579, %v590
  %v617 = vadd.f32 %v580, %v594
  %v618 = vadd.f32 %v581, %v598
  %v619 = vmax.f32 %v603, 0.0
  %v620 = vmax.f32 %v604, 0.0
  %v621 = vmax.f32 %v605, 0.0
  %v622 = vmax.f32 %v606, 0.0
  %v623 = vmax.f32 %v607, 0.0
  %v624 = vmax.f32 %v608, 0.0
  %v625 = vmax.f32 %v609, 0.0
  %v626 = vmax.f32 %v610, 0.0
  %v627 = vmax.f32 %v611, 0.0
  %v628 = vmax.f32 %v612, 0.0
  %v629 = vmax.f32 %v613, 0.0
  %v630 = vmax.f32 %v614, 0.0
  %v631 = vmax.f32 %v615, 0.0
  %v632 = vmax.f32 %v616, 0.0
  %v633 = vmax.f32 %v617, 0.0
  %v634 = vmax.f32 %v618, 0.0
  %v636 = vlaneseq
  %v637 = vshrl.u32 %v636, 7
  %v638 = vsub.s32 0, %v637
  %v639 = vrot.slane %v238, %v638
  %641 = vmatprep.subr.mxu0 0.0
  %642 = vmatpush1.msra.mxu0 %v174
  %643 = vmatprep.subr.mxu0 0.0
  %644 = vmatpush1.msra.mxu0 %v175
  %645 = vmatprep.subr.mxu0 0.0
  %646 = vmatpush1.msra.mxu0 %v176
  %647 = vmatprep.subr.mxu0 0.0
  %648 = vmatpush1.msra.mxu0 %v177
  %649 = vmatprep.subr.mxu0 0.0
  %650 = vmatpush1.msra.mxu0 %v178
  %651 = vmatprep.subr.mxu0 0.0
  %652 = vmatpush1.msra.mxu0 %v179
  %653 = vmatprep.subr.mxu0 0.0
  %654 = vmatpush1.msra.mxu0 %v180
  %655 = vmatprep.subr.mxu0 0.0
  %656 = vmatpush1.msra.mxu0 %v181
  %657 = vmatprep.subr.mxu0 0.0
  %658 = vmatpush1.msra.mxu0 %v182
  %659 = vmatprep.subr.mxu0 0.0
  %660 = vmatpush1.msra.mxu0 %v183
  %661 = vmatprep.subr.mxu0 0.0
  %662 = vmatpush1.msra.mxu0 %v184
  %663 = vmatprep.subr.mxu0 0.0
  %664 = vmatpush1.msra.mxu0 %v185
  %665 = vmatprep.subr.mxu0 0.0
  %666 = vmatpush1.msra.mxu0 %v186
  %667 = vmatprep.subr.mxu0 0.0
  %668 = vmatpush1.msra.mxu0 %v187
  %669 = vmatprep.subr.mxu0 0.0
  %670 = vmatpush1.msra.mxu0 %v188
  %671 = vmatprep.subr.mxu0 0.0
  %672 = vmatpush1.msra.mxu0 %v189
  %673 = vmatprep.subr.mxu0 0.0
  %674 = vmatpush1.msra.mxu0 %v190
  %675 = vmatprep.subr.mxu0 0.0
  %676 = vmatpush1.msra.mxu0 %v191
  %677 = vmatprep.subr.mxu0 0.0
  %678 = vmatpush1.msra.mxu0 %v192
  %679 = vmatprep.subr.mxu0 0.0
  %680 = vmatpush1.msra.mxu0 %v193
  %681 = vmatprep.subr.mxu0 0.0
  %682 = vmatpush1.msra.mxu0 %v194
  %683 = vmatprep.subr.mxu0 0.0
  %684 = vmatpush1.msra.mxu0 %v195
  %685 = vmatprep.subr.mxu0 0.0
  %686 = vmatpush1.msra.mxu0 %v196
  %687 = vmatprep.subr.mxu0 0.0
  %688 = vmatpush1.msra.mxu0 %v197
  %689 = vmatprep.subr.mxu0 0.0
  %690 = vmatpush1.msra.mxu0 %v198
  %691 = vmatprep.subr.mxu0 0.0
  %692 = vmatpush1.msra.mxu0 %v199
  %693 = vmatprep.subr.mxu0 0.0
  %694 = vmatpush1.msra.mxu0 %v200
  %695 = vmatprep.subr.mxu0 0.0
  %696 = vmatpush1.msra.mxu0 %v201
  %697 = vmatprep.subr.mxu0 0.0
  %698 = vmatpush1.msra.mxu0 %v202
  %699 = vmatprep.subr.mxu0 0.0
  %700 = vmatpush1.msra.mxu0 %v203
  %701 = vmatprep.subr.mxu0 0.0
  %702 = vmatpush1.msra.mxu0 %v204
  %703 = vmatprep.subr.mxu0 0.0
  %704 = vmatpush1.msra.mxu0 %v205
  %705 = vmatprep.mubr.f32.mxu0 %v620
  %706 = vmatmul.mubr.f32.gmra.mrb[0].mxu0 %v619
  %v707 = vpop.f32.mrb[0].mxu0
  %v708 = vadd.f32 %v639, %v707
  %v709 = vpop.f32.mrb[0].mxu0
  %710 = vmatprep.mubr.f32.mxu0 %v624
  %711 = vmatmul.mubr.f32.gmra.mrb[0].mxu0 %v623
  %v712 = vpop.f32.mrb[0].mxu0
  %v713 = vadd.f32 %v639, %v712
  %v714 = vpop.f32.mrb[0].mxu0
  %715 = vmatprep.mubr.f32.mxu0 %v628
  %716 = vmatmul.mubr.f32.gmra.mrb[0].mxu0 %v627
  %v717 = vpop.f32.mrb[0].mxu0
  %v718 = vadd.f32 %v639, %v717
  %v719 = vpop.f32.mrb[0].mxu0
  %720 = vmatprep.mubr.f32.mxu0 %v632
  %721 = vmatmul.mubr.f32.gmra.mrb[0].mxu0 %v631
  %v722 = vpop.f32.mrb[0].mxu0
  %v723 = vadd.f32 %v639, %v722
  %v724 = vpop.f32.mrb[0].mxu0
  %725 = vdwg.mxu0
  %726 = vmatprep.subr.mxu0 0.0
  %727 = vmatpush1.msra.mxu0 %v206
  %728 = vmatprep.subr.mxu0 0.0
  %729 = vmatpush1.msra.mxu0 %v207
  %730 = vmatprep.subr.mxu0 0.0
  %731 = vmatpush1.msra.mxu0 %v208
  %732 = vmatprep.subr.mxu0 0.0
  %733 = vmatpush1.msra.mxu0 %v209
  %734 = vmatprep.subr.mxu0 0.0
  %735 = vmatpush1.msra.mxu0 %v210
  %736 = vmatprep.subr.mxu0 0.0
  %737 = vmatpush1.msra.mxu0 %v211
  %738 = vmatprep.subr.mxu0 0.0
  %739 = vmatpush1.msra.mxu0 %v212
  %740 = vmatprep.subr.mxu0 0.0
  %741 = vmatpush1.msra.mxu0 %v213
  %742 = vmatprep.subr.mxu0 0.0
  %743 = vmatpush1.msra.mxu0 %v214
  %744 = vmatprep.subr.mxu0 0.0
  %745 = vmatpush1.msra.mxu0 %v215
  %746 = vmatprep.subr.mxu0 0.0
  %747 = vmatpush1.msra.mxu0 %v216
  %748 = vmatprep.subr.mxu0 0.0
  %749 = vmatpush1.msra.mxu0 %v217
  %750 = vmatprep.subr.mxu0 0.0
  %751 = vmatpush1.msra.mxu0 %v218
  %752 = vmatprep.subr.mxu0 0.0
  %753 = vmatpush1.msra.mxu0 %v219
  %754 = vmatprep.subr.mxu0 0.0
  %755 = vmatpush1.msra.mxu0 %v220
  %756 = vmatprep.subr.mxu0 0.0
  %757 = vmatpush1.msra.mxu0 %v221
  %758 = vmatprep.subr.mxu0 0.0
  %759 = vmatpush1.msra.mxu0 %v222
  %760 = vmatprep.subr.mxu0 0.0
  %761 = vmatpush1.msra.mxu0 %v223
  %762 = vmatprep.subr.mxu0 0.0
  %763 = vmatpush1.msra.mxu0 %v224
  %764 = vmatprep.subr.mxu0 0.0
  %765 = vmatpush1.msra.mxu0 %v225
  %766 = vmatprep.subr.mxu0 0.0
  %767 = vmatpush1.msra.mxu0 %v226
  %768 = vmatprep.subr.mxu0 0.0
  %769 = vmatpush1.msra.mxu0 %v227
  %770 = vmatprep.subr.mxu0 0.0
  %771 = vmatpush1.msra.mxu0 %v228
  %772 = vmatprep.subr.mxu0 0.0
  %773 = vmatpush1.msra.mxu0 %v229
  %774 = vmatprep.subr.mxu0 0.0
  %775 = vmatpush1.msra.mxu0 %v230
  %776 = vmatprep.subr.mxu0 0.0
  %777 = vmatpush1.msra.mxu0 %v231
  %778 = vmatprep.subr.mxu0 0.0
  %779 = vmatpush1.msra.mxu0 %v232
  %780 = vmatprep.subr.mxu0 0.0
  %781 = vmatpush1.msra.mxu0 %v233
  %782 = vmatprep.subr.mxu0 0.0
  %783 = vmatpush1.msra.mxu0 %v234
  %784 = vmatprep.subr.mxu0 0.0
  %785 = vmatpush1.msra.mxu0 %v235
  %786 = vmatprep.subr.mxu0 0.0
  %787 = vmatpush1.msra.mxu0 %v236
  %788 = vmatprep.subr.mxu0 0.0
  %789 = vmatpush1.msra.mxu0 %v237
  %790 = vmatprep.mubr.f32.mxu0 %v622
  %791 = vmatmul.mubr.f32.gmra.mrb[0].mxu0 %v621
  %v792 = vpop.f32.mrb[0].mxu0
  %v793 = vadd.f32 %v708, %v792
  %v794 = vpop.f32.mrb[0].mxu0
  %795 = vmatprep.mubr.f32.mxu0 %v626
  %796 = vmatmul.mubr.f32.gmra.mrb[0].mxu0 %v625
  %v797 = vpop.f32.mrb[0].mxu0
  %v798 = vadd.f32 %v713, %v797
  %v799 = vpop.f32.mrb[0].mxu0
  %800 = vmatprep.mubr.f32.mxu0 %v630
  %801 = vmatmul.mubr.f32.gmra.mrb[0].mxu0 %v629
  %v802 = vpop.f32.mrb[0].mxu0
  %v803 = vadd.f32 %v718, %v802
  %v804 = vpop.f32.mrb[0].mxu0
  %805 = vmatprep.mubr.f32.mxu0 %v634
  %806 = vmatmul.mubr.f32.gmra.mrb[0].mxu0 %v633
  %v807 = vpop.f32.mrb[0].mxu0
  %v808 = vadd.f32 %v723, %v807
  %v809 = vpop.f32.mrb[0].mxu0
  %810 = vdwg.mxu0
  %811 = vadd.xlane.f32.xlu0 %v793
  %v812 = vpop.xlane.xlu0 %811
  %813 = vadd.xlane.f32.xlu0 %v798
  %v814 = vpop.xlane.xlu0 %813
  %815 = vadd.xlane.f32.xlu0 %v803
  %v816 = vpop.xlane.xlu0 %815
  %817 = vadd.xlane.f32.xlu0 %v808
  %v818 = vpop.xlane.xlu0 %817
  %v819 = vrcp.pop 128.0
  %v820 = vmul.f32 %v812, %v819
  %v821 = vmul.f32 %v814, %v819
  %v822 = vmul.f32 %v816, %v819
  %v823 = vmul.f32 %v818, %v819
  %v824 = vsub.f32 %v793, %v820
  %v825 = vsub.f32 %v798, %v821
  %v826 = vsub.f32 %v803, %v822
  %v827 = vsub.f32 %v808, %v823
  %v828 = vmul.f32 %v824, %v824
  %v829 = vmul.f32 %v825, %v825
  %v830 = vmul.f32 %v826, %v826
  %v831 = vmul.f32 %v827, %v827
  %832 = vadd.xlane.f32.xlu0 %v828
  %v833 = vpop.xlane.xlu0 %832
  %834 = vadd.xlane.f32.xlu0 %v829
  %v835 = vpop.xlane.xlu0 %834
  %836 = vadd.xlane.f32.xlu0 %v830
  %v837 = vpop.xlane.xlu0 %836
  %838 = vadd.xlane.f32.xlu0 %v831
  %v839 = vpop.xlane.xlu0 %838
  %v840 = vmul.f32 %v833, %v819
  %v841 = vmul.f32 %v835, %v819
  %v842 = vmul.f32 %v837, %v819
  %v843 = vmul.f32 %v839, %v819
  %v844 = vadd.f32 %v840, 1e-05
  %v845 = vadd.f32 %v841, 1e-05
  %v846 = vadd.f32 %v842, 1e-05
  %v847 = vadd.f32 %v843, 1e-05
  %v848 = vrsqrt.pop %v844
  %v849 = vrsqrt.pop %v845
  %v850 = vrsqrt.pop %v846
  %v851 = vrsqrt.pop %v847
  %v852 = vmul.f32 %v824, %v848
  %v853 = vmul.f32 %v825, %v849
  %v854 = vmul.f32 %v826, %v850
  %v855 = vmul.f32 %v827, %v851
  %v857 = vlaneseq
  %v858 = vshrl.u32 %v857, 7
  %v859 = vsub.s32 0, %v858
  %v860 = vrot.slane %v239, %v859
  %v862 = vmul.f32 %v852, %v860
  %v863 = vmul.f32 %v853, %v860
  %v864 = vmul.f32 %v854, %v860
  %v865 = vmul.f32 %v855, %v860
  %v867 = vlaneseq
  %v868 = vshrl.u32 %v867, 7
  %v869 = vsub.s32 0, %v868
  %v870 = vrot.slane %v240, %v869
  %v872 = vadd.f32 %v862, %v870
  %v873 = vadd.f32 %v863, %v870
  %v874 = vadd.f32 %v864, %v870
  %v875 = vadd.f32 %v865, %v870
  %v876 = vmax.f32 %v872, 0.0
  %v877 = vmax.f32 %v873, 0.0
  %v878 = vmax.f32 %v874, 0.0
  %v879 = vmax.f32 %v875, 0.0
  %v880 = vld [vmem:[%s1] sm:$0xff]
  %v881 = vld [vmem:[%s1 + $0x8] sm:$0xff]
  %v882 = vld [vmem:[%s1 + $0x10] sm:$0xff]
  %v883 = vld [vmem:[%s1 + $0x18] sm:$0xff]
  %v884 = vadd.f32 %v876, %v880
  %v885 = vadd.f32 %v877, %v881
  %v886 = vadd.f32 %v878, %v882
  %v887 = vadd.f32 %v879, %v883
  %888 = vst [vmem:[%s10] sm:$0xff] %v884
  %889 = vst [vmem:[%s10 + $0x8] sm:$0xff] %v885
  %890 = vst [vmem:[%s10 + $0x10] sm:$0xff] %v886
  %891 = vst [vmem:[%s10 + $0x18] sm:$0xff] %v887
  // Predicated region
  $region42: #{forward.13} parent=0 // pred_check
    _
  $region43: #{forward.13} parent=0 // pred_check_branch
    %893 = sbr.rel (0) target = $region45
  $region44: #{forward.13} parent=0 // pred_region
    _
  $region45: #{forward.13} parent=0 // pred_fallthru
    _
  // Predicated region
  $region46: #{forward.13} parent=0 // pred_check
    _
  $region47: #{forward.13} parent=0 // pred_check_branch
    %895 = sbr.rel (0) target = $region49
  $region48: #{forward.13} parent=0 // pred_region
    _
  $region49: #{forward.13} parent=0 // pred_fallthru
    _

</llo_original>
